<compile_context>
chip_gen: v7x
topology: tpu7x:2x2x1
jax: 0.10.0
libtpu: 0.0.40
codegen_flags: <defaults>
</compile_context>

<pallas_src>
import functools

import jax
import jax.numpy as jnp
from jax.experimental import pallas as pl
from jax.experimental.pallas import tpu as pltpu

_MIB = 1024 * 1024


# ----------------------------------------------------------------------------
# Chip-aware VMEM budget + tile chooser
# ----------------------------------------------------------------------------
def _vmem_budget_bytes():
    """~96 MiB on v5e/v6e (128 MiB physical), ~48 MiB on v7x (64 MiB physical).
    Falls back to the v7x-safe value if the hardware query is unavailable."""
    try:
        cap = int(pltpu.get_tpu_info().vmem_capacity_bytes)
    except Exception:  # pragma: no cover - conservative fallback
        cap = 64 * _MIB
    return min(100 * _MIB, (cap * 3) // 4)


def _choose_hw_tile(hw, t, c, in_isz, out_isz, budget):
    """Largest lane tile (multiple of 128, or full HW) whose kernel-2 working
    set (2x double-buffered input block + 2x output block) fits `budget`.
    Returns (tile, mask_tail)."""
    per_hw = 2 * t * c * in_isz + 2 * c * out_isz
    avail = max(per_hw * 128, int(budget * 0.85) - 2 * _MIB)
    max_tile = max(128, (avail // per_hw) // 128 * 128)
    if hw <= max_tile:
        return hw, False                    # single full block (lane dim == full dim)
    if hw % 128 == 0:                       # exact multiple-of-128 divisor
        best, d = 128, 128
        top = min(hw, max_tile)
        while d <= top:
            if hw % d == 0:
                best = d
            d += 128
        return best, False
    return max_tile, True                   # pl.cdiv tiling, mask the ragged tail


# ----------------------------------------------------------------------------
# Shared SE-gate math (column form: C on sublanes, no transposes needed)
# ----------------------------------------------------------------------------
def _se_gates(m0, m1, m2, w1s, w2s, w1f, w2f):
    """m*: (C, 1) per-frame spatial means.  w1*: (Cr, C), w2*: (C, Cr) in the
    natural nn.Linear layout.  Returns (C, 1) gates:
      g0 = sig(W2s relu(W1s m0)), g1 = sig(W2f relu(W1f m1)),
      g2 = sig_slow(m2) + sig_fast(m2)   (frame 2 feeds both branches)."""
    m_slow = jnp.concatenate([m0, m2], axis=1)                     # (C, 2)
    m_fast = jnp.concatenate([m1, m2], axis=1)                     # (C, 2)
    h_s = jnp.maximum(
        jnp.dot(w1s, m_slow, preferred_element_type=jnp.float32), 0.0)
    s_s = jax.nn.sigmoid(
        jnp.dot(w2s, h_s, preferred_element_type=jnp.float32))     # (C, 2)
    h_f = jnp.maximum(
        jnp.dot(w1f, m_fast, preferred_element_type=jnp.float32), 0.0)
    s_f = jax.nn.sigmoid(
        jnp.dot(w2f, h_f, preferred_element_type=jnp.float32))     # (C, 2)
    return s_s[:, 0:1], s_f[:, 0:1], s_s[:, 1:2] + s_f[:, 1:2]


# ----------------------------------------------------------------------------
# Fused single-read kernel (per-batch slab resident in VMEM)
# ----------------------------------------------------------------------------
def _se_sum_fused_kernel(x_ref, w1s_ref, w2s_ref, w1f_ref, w2f_ref, o_ref,
                         *, inv_hw):
    """x_ref: (1, 3, C, HW); o_ref: (1, C, HW).  Means -> gates -> rescale+sum
    from a single HBM read of the per-batch slab."""
    f32 = jnp.float32
    m0 = jnp.sum(x_ref[0, 0].astype(f32), axis=-1, keepdims=True) * inv_hw
    m1 = jnp.sum(x_ref[0, 1].astype(f32), axis=-1, keepdims=True) * inv_hw
    m2 = jnp.sum(x_ref[0, 2].astype(f32), axis=-1, keepdims=True) * inv_hw
    g0, g1, g2 = _se_gates(m0, m1, m2, w1s_ref[...], w2s_ref[...],
                           w1f_ref[...], w2f_ref[...])
    out = x_ref[0, 0].astype(f32) * g0
    out += x_ref[0, 1].astype(f32) * g1
    out += x_ref[0, 2].astype(f32) * g2
    o_ref[0] = out.astype(o_ref.dtype)


def _fused_call(x, w1s, w2s, w1f, w2f, *, vmem_limit):
    b, t, c, hw = x.shape
    cr = w1s.shape[0]
    kernel = functools.partial(_se_sum_fused_kernel, inv_hw=1.0 / float(hw))
    # TODO(synk): with B == 1 only one v7x TensorCore gets work on this path.
    return pl.pallas_call(
        kernel,
        out_shape=jax.ShapeDtypeStruct((b, c, hw), x.dtype),
        grid_spec=pltpu.PrefetchScalarGridSpec(
            num_scalar_prefetch=0,
            grid=(b,),
            in_specs=[
                pl.BlockSpec((1, t, c, hw), lambda i: (i, 0, 0, 0)),
                pl.BlockSpec((cr, c), lambda i: (0, 0)),
                pl.BlockSpec((c, cr), lambda i: (0, 0)),
                pl.BlockSpec((cr, c), lambda i: (0, 0)),
                pl.BlockSpec((c, cr), lambda i: (0, 0)),
            ],
            out_specs=pl.BlockSpec((1, c, hw), lambda i: (i, 0, 0)),
        ),
        compiler_params=pltpu.CompilerParams(
            dimension_semantics=("parallel",),
            vmem_limit_bytes=vmem_limit),
    )(x, w1s, w2s, w1f, w2f)


# ----------------------------------------------------------------------------
# Two-pass fallback (large HW): streaming sums -> tiny gate MLP -> rescale+sum
# ----------------------------------------------------------------------------
def _spatial_sum_kernel(x_ref, s_ref, *, hw_total, hw_tile, mask_tail):
    """Accumulate per-frame channel sums over HW tiles into s_ref (1, C, T)."""
    j = pl.program_id(1)

    @pl.when(j == 0)
    def _():
        s_ref[...] = jnp.zeros_like(s_ref)

    x = x_ref[0].astype(jnp.float32)                        # (T, C, hw_tile)
    if mask_tail:
        lane = jax.lax.broadcasted_iota(jnp.int32, (1, 1, hw_tile), 2)
        x = jnp.where(j * hw_tile + lane < hw_total, x, 0.0)
    cols = [jnp.sum(x[k], axis=-1, keepdims=True) for k in range(x.shape[0])]
    s_ref[0] += jnp.concatenate(cols, axis=1)               # (C, T)


def _se_gate_kernel(s_ref, w1s_ref, w2s_ref, w1f_ref, w2f_ref, g_ref, *, inv_hw):
    """Tiny per-batch kernel: (1, C, T) spatial sums -> (1, C, T) gates."""
    m = s_ref[0] * inv_hw                                   # (C, T)
    g0, g1, g2 = _se_gates(m[:, 0:1], m[:, 1:2], m[:, 2:3],
                           w1s_ref[...], w2s_ref[...],
                           w1f_ref[...], w2f_ref[...])
    g_ref[0] = jnp.concatenate([g0, g1, g2], axis=1).astype(g_ref.dtype)


def _rescale_sum_kernel(x_ref, g_ref, o_ref):
    """out = sum_t x[t] * g[:, t]; gates broadcast along the HW lane axis."""
    g = g_ref[0].astype(jnp.float32)                        # (C, T)
    out = x_ref[0, 0].astype(jnp.float32) * g[:, 0:1]
    out += x_ref[0, 1].astype(jnp.float32) * g[:, 1:2]
    out += x_ref[0, 2].astype(jnp.float32) * g[:, 2:3]
    o_ref[0] = out.astype(o_ref.dtype)


def _two_pass_call(x, w1s, w2s, w1f, w2f, *, hw_tile, mask_tail, vmem_limit):
    b, t, c, hw = x.shape
    cr = w1s.shape[0]
    n_tiles = pl.cdiv(hw, hw_tile)

    # Pass 1: per-frame spatial sums (streaming reduction over HW).
    # TODO(synk): with B == 1 this reduction runs on a single v7x TensorCore;
    #             split the HW axis into a leading parallel axis if that matters.
    sum_kernel = functools.partial(_spatial_sum_kernel, hw_total=hw,
                                   hw_tile=hw_tile, mask_tail=mask_tail)
    sums = pl.pallas_call(
        sum_kernel,
        out_shape=jax.ShapeDtypeStruct((b, c, t), jnp.float32),
        grid_spec=pltpu.PrefetchScalarGridSpec(
            num_scalar_prefetch=0,
            grid=(b, n_tiles),
            in_specs=[pl.BlockSpec((1, t, c, hw_tile), lambda i, j: (i, 0, 0, j))],
            out_specs=pl.BlockSpec((1, c, t), lambda i, j: (i, 0, 0)),
        ),
        compiler_params=pltpu.CompilerParams(
            dimension_semantics=("parallel", "arbitrary"),
            vmem_limit_bytes=vmem_limit),
    )(x)

    # Tiny SE-MLP kernel (keeps the weights out of the streaming passes).
    gate_kernel = functools.partial(_se_gate_kernel, inv_hw=1.0 / float(hw))
    gates = pl.pallas_call(
        gate_kernel,
        out_shape=jax.ShapeDtypeStruct((b, c, t), jnp.float32),
        grid_spec=pltpu.PrefetchScalarGridSpec(
            num_scalar_prefetch=0,
            grid=(b,),
            in_specs=[
                pl.BlockSpec((1, c, t), lambda i: (i, 0, 0)),
                pl.BlockSpec((cr, c), lambda i: (0, 0)),
                pl.BlockSpec((c, cr), lambda i: (0, 0)),
                pl.BlockSpec((cr, c), lambda i: (0, 0)),
                pl.BlockSpec((c, cr), lambda i: (0, 0)),
            ],
            out_specs=pl.BlockSpec((1, c, t), lambda i: (i, 0, 0)),
        ),
        compiler_params=pltpu.CompilerParams(
            dimension_semantics=("parallel",)),
    )(sums, w1s, w2s, w1f, w2f)

    # Pass 2: rescale each frame by its gate and sum over frames.
    out = pl.pallas_call(
        _rescale_sum_kernel,
        out_shape=jax.ShapeDtypeStruct((b, c, hw), x.dtype),
        grid_spec=pltpu.PrefetchScalarGridSpec(
            num_scalar_prefetch=0,
            grid=(b, n_tiles),
            in_specs=[
                pl.BlockSpec((1, t, c, hw_tile), lambda i, j: (i, 0, 0, j)),
                pl.BlockSpec((1, c, t), lambda i, j: (i, 0, 0)),
            ],
            out_specs=pl.BlockSpec((1, c, hw_tile), lambda i, j: (i, 0, j)),
        ),
        compiler_params=pltpu.CompilerParams(
            dimension_semantics=("parallel", "parallel"),
            vmem_limit_bytes=vmem_limit),
    )(x, gates)
    return out


# ----------------------------------------------------------------------------
# TemporalModel2 forward (sum_fusion, single-task, causal first layer)
# ----------------------------------------------------------------------------
@functools.partial(jax.jit, static_argnames=("force_two_pass", "hw_tile_override"))
def temporal_model2_forward(enc_ftrs, params, *, force_two_pass=False,
                            hw_tile_override=None):
    """enc_ftrs: (B, T>=3, C=304, H, W) encoder features (f32 or bf16).

    Mirrors TemporalModel2.forward -> sum_fusion(causal=True, multi_task=False):
      add_casaul_module:
        slow = stack([SE_slow(f0), SE_slow(f2)]); fast = stack([SE_fast(f1), SE_fast(f2)])
        # TODO(synk): CausalConv3d stacks not provided -> identity pass-through.
        fusion = cat([slow, fast], dim=1)          # (B, 4, C, H, W)
      x_fusion = sum(fusion, dim=1)                # (B, C, H, W)
      # TODO(synk): SegDecoder2 not provided -> fused features returned directly.
    """
    b, t, c, h, w = enc_ftrs.shape
    assert t >= 3, "sum_fusion causal path consumes frames 0, 1, 2"
    hw = h * w
    x = enc_ftrs.reshape(b, t, c, hw)          # free reshape, no transpose
    if t > 3:
        x = x[:, :3]                           # frames beyond 2 are unused
    t = 3

    w1s, w2s = params["w1_slow"], params["w2_slow"]
    w1f, w2f = params["w1_fast"], params["w2_fast"]

    in_isz = x.dtype.itemsize
    budget = _vmem_budget_bytes()
    weights_bytes = 2 * sum(int(p.size) * p.dtype.itemsize
                            for p in (w1s, w2s, w1f, w2f))
    # Fused footprint: double-buffered slab + double-buffered output +
    # one f32 working copy of the output + weights + slack.
    fused_bytes = (2 * t * c * hw * in_isz + 2 * c * hw * in_isz
                   + 4 * c * hw + weights_bytes + 2 * _MIB)

    if (not force_two_pass) and hw_tile_override is None and fused_bytes <= budget:
        fused = _fused_call(x, w1s, w2s, w1f, w2f, vmem_limit=budget)
    else:
        if hw_tile_override is not None:
            hw_tile = int(hw_tile_override)
            assert hw_tile == hw or hw_tile % 128 == 0
            mask_tail = (hw % hw_tile != 0)
        else:
            hw_tile, mask_tail = _choose_hw_tile(hw, t, c, in_isz, in_isz, budget)
        fused = _two_pass_call(x, w1s, w2s, w1f, w2f, hw_tile=hw_tile,
                               mask_tail=mask_tail, vmem_limit=budget)

    # TODO(synk): feed `fused` through SegDecoder2 once its definition is given.
    return {"supervised": fused.reshape(b, c, h, w)}


# ----------------------------------------------------------------------------
# Parameter init (SE_Layer(304, reduction=2); natural nn.Linear (out, in) layout)
# ----------------------------------------------------------------------------
def init_params(key, channel=304, reduction=2):
    cr = channel // reduction
    ks = jax.random.split(key, 4)
    scale = 0.2
    return {
        # nn.Linear(channel, channel//reduction, bias=False).weight -> (Cr, C)
        "w1_slow": scale * jax.random.normal(ks[0], (cr, channel), jnp.float32),
        # nn.Linear(channel//reduction, channel, bias=False).weight -> (C, Cr)
        "w2_slow": scale * jax.random.normal(ks[1], (channel, cr), jnp.float32),
        "w1_fast": scale * jax.random.normal(ks[2], (cr, channel), jnp.float32),
        "w2_fast": scale * jax.random.normal(ks[3], (channel, cr), jnp.float32),
    }


# ----------------------------------------------------------------------------
# Pure-JAX reference for the implemented portion (SE slow/fast + dim=1 sum)
# ----------------------------------------------------------------------------
def _reference(enc_ftrs, params):
    x = enc_ftrs.astype(jnp.float32)            # (B, T, C, H, W)

    def se(f, w1, w2):
        y = jnp.mean(f, axis=(2, 3))            # (B, C)
        hdn = jnp.maximum(y @ w1.T, 0.0)        # (B, Cr)
        s = jax.nn.sigmoid(hdn @ w2.T)          # (B, C)
        return f * s[:, :, None, None]

    f0, f1, f2 = x[:, 0], x[:, 1], x[:, 2]
    return (se(f0, params["w1_slow"], params["w2_slow"])
            + se(f2, params["w1_slow"], params["w2_slow"])
            + se(f1, params["w1_fast"], params["w2_fast"])
            + se(f2, params["w1_fast"], params["w2_fast"]))


if __name__ == "__main__":
    key = jax.random.PRNGKey(0)
    k_feat, k_feat2, k_param = jax.random.split(key, 3)

    C = 304                                     # fixed by the module: SE_Layer(304, 2)
    params = init_params(k_param, channel=C, reduction=2)

    # Case 1: fused single-read path.
    B, T, H, W = 2, 3, 16, 16
    enc = jax.random.normal(k_feat, (B, T, C, H, W), jnp.float32)
    out = temporal_model2_forward(enc, params)
    sup = jax.block_until_ready(out["supervised"])
    assert sup.shape == (B, C, H, W)
    assert bool(jnp.all(jnp.isfinite(sup)))
    ref = _reference(enc, params)
    assert bool(jnp.allclose(sup, ref, rtol=5e-3, atol=5e-3))

    # Case 2: forced two-pass (multi-tile) path on the same input.
    out2 = temporal_model2_forward(enc, params, force_two_pass=True,
                                   hw_tile_override=128)
    sup2 = jax.block_until_ready(out2["supervised"])
    assert bool(jnp.allclose(sup2, ref, rtol=5e-3, atol=5e-3))

    # Case 3: two-pass with a ragged (masked) last HW tile (HW = 400).
    enc3 = jax.random.normal(k_feat2, (1, T, C, 20, 20), jnp.float32)
    out3 = temporal_model2_forward(enc3, params, force_two_pass=True,
                                   hw_tile_override=128)
    sup3 = jax.block_until_ready(out3["supervised"])
    ref3 = _reference(enc3, params)
    assert bool(jnp.allclose(sup3, ref3, rtol=5e-3, atol=5e-3))

    # Case 4: bf16 feature path (halves HBM read traffic).
    enc_bf16 = enc.astype(jnp.bfloat16)
    out4 = temporal_model2_forward(enc_bf16, params)
    sup4 = jax.block_until_ready(out4["supervised"]).astype(jnp.float32)
    ref4 = _reference(enc_bf16, params)
    assert sup4.shape == (B, C, H, W)
    assert bool(jnp.allclose(sup4, ref4, rtol=5e-2, atol=5e-2))

    print("KERNEL_OK")
</pallas_src>

<mosaic_0001>
module attributes {stable_mosaic.version = 11 : i64} {
  func.func @_se_sum_fused_kernel(%arg0: i32, %arg1: memref<1x3x304x256xf32, #tpu.memory_space<vmem>>, %arg2: memref<152x304xf32, #tpu.memory_space<vmem>>, %arg3: memref<304x152xf32, #tpu.memory_space<vmem>>, %arg4: memref<152x304xf32, #tpu.memory_space<vmem>>, %arg5: memref<304x152xf32, #tpu.memory_space<vmem>>, %arg6: memref<1x304x256xf32, #tpu.memory_space<vmem>>) attributes {dimension_semantics = [#tpu.dimension_semantics<parallel>], iteration_bounds = array<i64: 2>, scalar_prefetch = 0 : i64, scratch_operands = 0 : i64, tpu.core_type = #tpu.core_type<tc>, window_params = [{transform_indices = @transform_0, window_bounds = array<i64: 1, 3, 304, 256>}, {pipeline_mode = #tpu.pipeline_mode<synchronous>, transform_indices = @transform_1, window_bounds = array<i64: 152, 304>}, {pipeline_mode = #tpu.pipeline_mode<synchronous>, transform_indices = @transform_2, window_bounds = array<i64: 304, 152>}, {pipeline_mode = #tpu.pipeline_mode<synchronous>, transform_indices = @transform_3, window_bounds = array<i64: 152, 304>}, {pipeline_mode = #tpu.pipeline_mode<synchronous>, transform_indices = @transform_4, window_bounds = array<i64: 304, 152>}, {transform_indices = @transform_5, window_bounds = array<i64: 1, 304, 256>}]} {
    %c0 = arith.constant 0 : index
    %c0_0 = arith.constant 0 : index
    %c0_1 = arith.constant 0 : index
    %c0_2 = arith.constant 0 : index
    %0 = vector.load %arg1[%c0, %c0_0, %c0_1, %c0_2] : memref<1x3x304x256xf32, #tpu.memory_space<vmem>>, vector<1x1x304x256xf32>
    %1 = vector.shape_cast %0 : vector<1x1x304x256xf32> to vector<304x256xf32>
    %cst = arith.constant dense<0.000000e+00> : vector<304xf32>
    %2 = vector.multi_reduction <add>, %1, %cst [1] : vector<304x256xf32> to vector<304xf32>
    %3 = vector.shape_cast %2 : vector<304xf32> to vector<304x1xf32>
    %cst_3 = arith.constant 3.906250e-03 : f32
    %4 = vector.broadcast %cst_3 : f32 to vector<304x1xf32>
    %5 = arith.mulf %3, %4 : vector<304x1xf32>
    %c0_4 = arith.constant 0 : index
    %c1 = arith.constant 1 : index
    %c0_5 = arith.constant 0 : index
    %c0_6 = arith.constant 0 : index
    %6 = vector.load %arg1[%c0_4, %c1, %c0_5, %c0_6] : memref<1x3x304x256xf32, #tpu.memory_space<vmem>>, vector<1x1x304x256xf32>
    %7 = vector.shape_cast %6 : vector<1x1x304x256xf32> to vector<304x256xf32>
    %cst_7 = arith.constant dense<0.000000e+00> : vector<304xf32>
    %8 = vector.multi_reduction <add>, %7, %cst_7 [1] : vector<304x256xf32> to vector<304xf32>
    %9 = vector.shape_cast %8 : vector<304xf32> to vector<304x1xf32>
    %cst_8 = arith.constant 3.906250e-03 : f32
    %10 = vector.broadcast %cst_8 : f32 to vector<304x1xf32>
    %11 = arith.mulf %9, %10 : vector<304x1xf32>
    %c0_9 = arith.constant 0 : index
    %c2 = arith.constant 2 : index
    %c0_10 = arith.constant 0 : index
    %c0_11 = arith.constant 0 : index
    %12 = vector.load %arg1[%c0_9, %c2, %c0_10, %c0_11] : memref<1x3x304x256xf32, #tpu.memory_space<vmem>>, vector<1x1x304x256xf32>
    %13 = vector.shape_cast %12 : vector<1x1x304x256xf32> to vector<304x256xf32>
    %cst_12 = arith.constant dense<0.000000e+00> : vector<304xf32>
    %14 = vector.multi_reduction <add>, %13, %cst_12 [1] : vector<304x256xf32> to vector<304xf32>
    %15 = vector.shape_cast %14 : vector<304xf32> to vector<304x1xf32>
    %cst_13 = arith.constant 3.906250e-03 : f32
    %16 = vector.broadcast %cst_13 : f32 to vector<304x1xf32>
    %17 = arith.mulf %15, %16 : vector<304x1xf32>
    %c0_14 = arith.constant 0 : index
    %c0_15 = arith.constant 0 : index
    %18 = vector.load %arg2[%c0_14, %c0_15] : memref<152x304xf32, #tpu.memory_space<vmem>>, vector<152x304xf32>
    %c0_16 = arith.constant 0 : index
    %c0_17 = arith.constant 0 : index
    %19 = vector.load %arg3[%c0_16, %c0_17] : memref<304x152xf32, #tpu.memory_space<vmem>>, vector<304x152xf32>
    %c0_18 = arith.constant 0 : index
    %c0_19 = arith.constant 0 : index
    %20 = vector.load %arg4[%c0_18, %c0_19] : memref<152x304xf32, #tpu.memory_space<vmem>>, vector<152x304xf32>
    %c0_20 = arith.constant 0 : index
    %c0_21 = arith.constant 0 : index
    %21 = vector.load %arg5[%c0_20, %c0_21] : memref<304x152xf32, #tpu.memory_space<vmem>>, vector<304x152xf32>
    %22 = tpu.concatenate %5, %17 in 1 : vector<304x1xf32>, vector<304x1xf32> -> vector<304x2xf32>
    %23 = tpu.concatenate %11, %17 in 1 : vector<304x1xf32>, vector<304x1xf32> -> vector<304x2xf32>
    %cst_22 = arith.constant dense<0.000000e+00> : vector<152x2xf32>
    %24 = tpu.matmul %18, %22, %cst_22 {dimension_numbers = #tpu.dot_dimension_numbers<[1], [0], [0], [1], [0, 0, 1, 1], [], []>} : vector<152x304xf32>, vector<304x2xf32>, vector<152x2xf32> -> vector<152x2xf32>
    %cst_23 = arith.constant 0.000000e+00 : f32
    %25 = vector.broadcast %cst_23 : f32 to vector<152x2xf32>
    %26 = arith.maximumf %24, %25 : vector<152x2xf32>
    %cst_24 = arith.constant dense<0.000000e+00> : vector<304x2xf32>
    %27 = tpu.matmul %19, %26, %cst_24 {dimension_numbers = #tpu.dot_dimension_numbers<[1], [0], [0], [1], [0, 0, 1, 1], [], []>} : vector<304x152xf32>, vector<152x2xf32>, vector<304x2xf32> -> vector<304x2xf32>
    %28 = arith.negf %27 : vector<304x2xf32>
    %29 = math.exp %28 : vector<304x2xf32>
    %cst_25 = arith.constant 1.000000e+00 : f32
    %30 = vector.broadcast %cst_25 : f32 to vector<304x2xf32>
    %31 = arith.addf %30, %29 : vector<304x2xf32>
    %32 = arith.divf %30, %31 : vector<304x2xf32>
    %cst_26 = arith.constant dense<0.000000e+00> : vector<152x2xf32>
    %33 = tpu.matmul %20, %23, %cst_26 {dimension_numbers = #tpu.dot_dimension_numbers<[1], [0], [0], [1], [0, 0, 1, 1], [], []>} : vector<152x304xf32>, vector<304x2xf32>, vector<152x2xf32> -> vector<152x2xf32>
    %cst_27 = arith.constant 0.000000e+00 : f32
    %34 = vector.broadcast %cst_27 : f32 to vector<152x2xf32>
    %35 = arith.maximumf %33, %34 : vector<152x2xf32>
    %cst_28 = arith.constant dense<0.000000e+00> : vector<304x2xf32>
    %36 = tpu.matmul %21, %35, %cst_28 {dimension_numbers = #tpu.dot_dimension_numbers<[1], [0], [0], [1], [0, 0, 1, 1], [], []>} : vector<304x152xf32>, vector<152x2xf32>, vector<304x2xf32> -> vector<304x2xf32>
    %37 = arith.negf %36 : vector<304x2xf32>
    %38 = math.exp %37 : vector<304x2xf32>
    %cst_29 = arith.constant 1.000000e+00 : f32
    %39 = vector.broadcast %cst_29 : f32 to vector<304x2xf32>
    %40 = arith.addf %39, %38 : vector<304x2xf32>
    %41 = arith.divf %39, %40 : vector<304x2xf32>
    %42 = vector.extract_strided_slice %32 {offsets = [0, 0], sizes = [304, 1], strides = [1, 1]} : vector<304x2xf32> to vector<304x1xf32>
    %43 = vector.extract_strided_slice %41 {offsets = [0, 0], sizes = [304, 1], strides = [1, 1]} : vector<304x2xf32> to vector<304x1xf32>
    %44 = vector.extract_strided_slice %32 {offsets = [0, 1], sizes = [304, 1], strides = [1, 1]} : vector<304x2xf32> to vector<304x1xf32>
    %45 = vector.extract_strided_slice %41 {offsets = [0, 1], sizes = [304, 1], strides = [1, 1]} : vector<304x2xf32> to vector<304x1xf32>
    %46 = arith.addf %44, %45 : vector<304x1xf32>
    %c0_30 = arith.constant 0 : index
    %c0_31 = arith.constant 0 : index
    %c0_32 = arith.constant 0 : index
    %c0_33 = arith.constant 0 : index
    %47 = vector.load %arg1[%c0_30, %c0_31, %c0_32, %c0_33] : memref<1x3x304x256xf32, #tpu.memory_space<vmem>>, vector<1x1x304x256xf32>
    %48 = vector.shape_cast %47 : vector<1x1x304x256xf32> to vector<304x256xf32>
    %49 = vector.broadcast %42 : vector<304x1xf32> to vector<304x256xf32>
    %50 = arith.mulf %48, %49 : vector<304x256xf32>
    %c0_34 = arith.constant 0 : index
    %c1_35 = arith.constant 1 : index
    %c0_36 = arith.constant 0 : index
    %c0_37 = arith.constant 0 : index
    %51 = vector.load %arg1[%c0_34, %c1_35, %c0_36, %c0_37] : memref<1x3x304x256xf32, #tpu.memory_space<vmem>>, vector<1x1x304x256xf32>
    %52 = vector.shape_cast %51 : vector<1x1x304x256xf32> to vector<304x256xf32>
    %53 = vector.broadcast %43 : vector<304x1xf32> to vector<304x256xf32>
    %54 = arith.mulf %52, %53 : vector<304x256xf32>
    %55 = arith.addf %50, %54 : vector<304x256xf32>
    %c0_38 = arith.constant 0 : index
    %c2_39 = arith.constant 2 : index
    %c0_40 = arith.constant 0 : index
    %c0_41 = arith.constant 0 : index
    %56 = vector.load %arg1[%c0_38, %c2_39, %c0_40, %c0_41] : memref<1x3x304x256xf32, #tpu.memory_space<vmem>>, vector<1x1x304x256xf32>
    %57 = vector.shape_cast %56 : vector<1x1x304x256xf32> to vector<304x256xf32>
    %58 = vector.broadcast %46 : vector<304x1xf32> to vector<304x256xf32>
    %59 = arith.mulf %57, %58 : vector<304x256xf32>
    %60 = arith.addf %55, %59 : vector<304x256xf32>
    %c0_42 = arith.constant 0 : index
    %c0_43 = arith.constant 0 : index
    %c0_44 = arith.constant 0 : index
    %61 = vector.load %arg6[%c0_42, %c0_43, %c0_44] : memref<1x304x256xf32, #tpu.memory_space<vmem>>, vector<1x304x256xf32>
    %62 = vector.shape_cast %61 : vector<1x304x256xf32> to vector<304x256xf32>
    %63 = vector.shape_cast %60 : vector<304x256xf32> to vector<1x304x256xf32>
    tpu.vector_store %arg6[%c0_42, %c0_43, %c0_44], %63 {strides = array<i32>} : memref<1x304x256xf32, #tpu.memory_space<vmem>>, vector<1x304x256xf32>,
    return
  }
  func.func @transform_0(%arg0: i32) -> (i32, i32, i32, i32) {
    %c0_i32 = arith.constant 0 : i32
    %c0_i32_0 = arith.constant 0 : i32
    %c0_i32_1 = arith.constant 0 : i32
    %c0_i32_2 = arith.constant 0 : i32
    return %arg0, %c0_i32, %c0_i32_0, %c0_i32_1 : i32, i32, i32, i32
  }
  func.func @transform_1(%arg0: i32) -> (i32, i32) {
    %c0_i32 = arith.constant 0 : i32
    %c0_i32_0 = arith.constant 0 : i32
    %c0_i32_1 = arith.constant 0 : i32
    return %c0_i32, %c0_i32_0 : i32, i32
  }
  func.func @transform_2(%arg0: i32) -> (i32, i32) {
    %c0_i32 = arith.constant 0 : i32
    %c0_i32_0 = arith.constant 0 : i32
    %c0_i32_1 = arith.constant 0 : i32
    return %c0_i32, %c0_i32_0 : i32, i32
  }
  func.func @transform_3(%arg0: i32) -> (i32, i32) {
    %c0_i32 = arith.constant 0 : i32
    %c0_i32_0 = arith.constant 0 : i32
    %c0_i32_1 = arith.constant 0 : i32
    return %c0_i32, %c0_i32_0 : i32, i32
  }
  func.func @transform_4(%arg0: i32) -> (i32, i32) {
    %c0_i32 = arith.constant 0 : i32
    %c0_i32_0 = arith.constant 0 : i32
    %c0_i32_1 = arith.constant 0 : i32
    return %c0_i32, %c0_i32_0 : i32, i32
  }
  func.func @transform_5(%arg0: i32) -> (i32, i32, i32) {
    %c0_i32 = arith.constant 0 : i32
    %c0_i32_0 = arith.constant 0 : i32
    %c0_i32_1 = arith.constant 0 : i32
    return %arg0, %c0_i32, %c0_i32_0 : i32, i32, i32
  }
}

</mosaic_0001>

<llo_original>
// kernel: temporal_model2_forward.1
$region0: #{temporal_model2_forward.1}
  #allocation0 [shape = 'u32[]', space=smem, size = 0x4, offset = 0x4, fixed_abs, tag = 'smem constant byte address 0x4 - core index']
  #allocation1 [shape = 'u32[144,128]{1,0:T(1,128)}', space=vmem, size = 0x12000, scoped, tag = 'internal scratch']
  %s0 = inlined_call_operand.vmem [shape: f32[2,3,304,256], index: 0, kind: input, shape index: {}]
  %s1 = inlined_call_operand.vmem [shape: f32[152,304], index: 1, kind: input, shape index: {}]
  %s2 = inlined_call_operand.vmem [shape: f32[304,152], index: 2, kind: input, shape index: {}]
  %s3 = inlined_call_operand.vmem [shape: f32[152,304], index: 3, kind: input, shape index: {}]
  %s4 = inlined_call_operand.vmem [shape: f32[304,152], index: 4, kind: input, shape index: {}]
  %s5 = inlined_call_operand.vmem [shape: f32[2,304,256], index: 5, kind: output, shape index: {}]
  %s6 = sld [smem:[#allocation0]]
  $region53: #{temporal_model2_forward.1} parent=0
    _
  %s8 = ssub.s32 1, %s6
  %s9 = scalar_select 0, %s8, %s6
  loop: start=0, step=1, limit=4
  $region2: #{temporal_model2_forward.1} parent=0 // loop_pre_header
    _
  $region3: #{temporal_model2_forward.1} parent=0 // loop_header
    %s11 = sphi 0, %s15
    %p12 = scmp.ge.s32.totalorder %s11, 4
    %s21 = sphi 0, %s23
    %s24 = sphi 0, %s21
    %s25 = sphi 0, %s24
    %s41 = sphi 0, %s25
    %s45 = sphi 0, %s45
    %s47 = sphi 0, %s45
    %s48 = sphi 0, %s47
    %s62 = sphi 0, %s48
    %s66 = sphi 0, %s66
    %s68 = sphi 0, %s66
    %s69 = sphi 0, %s68
    %s83 = sphi 0, %s69
    %s87 = sphi 0, %s87
    %s89 = sphi 0, %s87
    %s90 = sphi 0, %s89
    %s104 = sphi 0, %s90
    %s108 = sphi 0, %s108
    %s110 = sphi 0, %s108
    %s111 = sphi 0, %s110
    %s125 = sphi 0, %s111
    %s131 = sphi 0, %s133
    %s134 = sphi 0, %s131
    %s135 = sphi 0, %s134
    %s151 = sphi 0, %s135
  $region4: #{temporal_model2_forward.1} parent=0 // loop_header_branch
    %14 = sbr.rel (%p12) target = $region8
  $region5: #{temporal_model2_forward.1} parent=0 // loop_body
    %s16 = ssub.s32 %s11, 1
    %s17 = ssub.s32 %s11, 2
    %s18 = sadd.s32 %s11, 1
    %s19 = ssub.s32 %s11, %s18
    %p20 = scmp.eq.s32.totalorder %s19, 0
    %s22 = sadd.s32 %s21, 1
    %s23 = scalar_select %p20, %s21, %s22
    %p26 = pneg %p20
    %p27 = scmp.eq.s32.totalorder %s11, 1
    %p28 = por %p26, %p27
    %p29 = scmp.ne.s32.totalorder %s21, %s24
    %p30 = scmp.eq.s32.totalorder %s11, 0
    %p31 = por %p29, %p30
    %p32 = scmp.ne.s32.totalorder %s21, %s24
    %p33 = scmp.eq.s32.totalorder %s16, 1
    %p34 = por %p32, %p33
    %p35 = scmp.ne.s32.totalorder %s24, %s25
    %p36 = scmp.eq.s32.totalorder %s16, 0
    %p37 = por %p35, %p36
    %p38 = scmp.ne.s32.totalorder %s24, %s25
    %p39 = scmp.eq.s32.totalorder %s17, 1
    %p40 = por %p38, %p39
    %p42 = scmp.ne.s32.totalorder %s25, %s41
    %p43 = scmp.eq.s32.totalorder %s17, 0
    %p44 = por %p42, %p43
    %s46 = sadd.s32 %s45, 1
    %p49 = scmp.eq.s32.totalorder %s11, 1
    %p50 = scmp.ne.s32.totalorder %s45, %s47
    %p51 = scmp.eq.s32.totalorder %s11, 0
    %p52 = por %p50, %p51
    %p53 = scmp.ne.s32.totalorder %s45, %s47
    %p54 = scmp.eq.s32.totalorder %s16, 1
    %p55 = por %p53, %p54
    %p56 = scmp.ne.s32.totalorder %s47, %s48
    %p57 = scmp.eq.s32.totalorder %s16, 0
    %p58 = por %p56, %p57
    %p59 = scmp.ne.s32.totalorder %s47, %s48
    %p60 = scmp.eq.s32.totalorder %s17, 1
    %p61 = por %p59, %p60
    %p63 = scmp.ne.s32.totalorder %s48, %s62
    %p64 = scmp.eq.s32.totalorder %s17, 0
    %p65 = por %p63, %p64
    %s67 = sadd.s32 %s66, 1
    %p70 = scmp.eq.s32.totalorder %s11, 1
    %p71 = scmp.ne.s32.totalorder %s66, %s68
    %p72 = scmp.eq.s32.totalorder %s11, 0
    %p73 = por %p71, %p72
    %p74 = scmp.ne.s32.totalorder %s66, %s68
    %p75 = scmp.eq.s32.totalorder %s16, 1
    %p76 = por %p74, %p75
    %p77 = scmp.ne.s32.totalorder %s68, %s69
    %p78 = scmp.eq.s32.totalorder %s16, 0
    %p79 = por %p77, %p78
    %p80 = scmp.ne.s32.totalorder %s68, %s69
    %p81 = scmp.eq.s32.totalorder %s17, 1
    %p82 = por %p80, %p81
    %p84 = scmp.ne.s32.totalorder %s69, %s83
    %p85 = scmp.eq.s32.totalorder %s17, 0
    %p86 = por %p84, %p85
    %s88 = sadd.s32 %s87, 1
    %p91 = scmp.eq.s32.totalorder %s11, 1
    %p92 = scmp.ne.s32.totalorder %s87, %s89
    %p93 = scmp.eq.s32.totalorder %s11, 0
    %p94 = por %p92, %p93
    %p95 = scmp.ne.s32.totalorder %s87, %s89
    %p96 = scmp.eq.s32.totalorder %s16, 1
    %p97 = por %p95, %p96
    %p98 = scmp.ne.s32.totalorder %s89, %s90
    %p99 = scmp.eq.s32.totalorder %s16, 0
    %p100 = por %p98, %p99
    %p101 = scmp.ne.s32.totalorder %s89, %s90
    %p102 = scmp.eq.s32.totalorder %s17, 1
    %p103 = por %p101, %p102
    %p105 = scmp.ne.s32.totalorder %s90, %s104
    %p106 = scmp.eq.s32.totalorder %s17, 0
    %p107 = por %p105, %p106
    %s109 = sadd.s32 %s108, 1
    %p112 = scmp.eq.s32.totalorder %s11, 1
    %p113 = scmp.ne.s32.totalorder %s108, %s110
    %p114 = scmp.eq.s32.totalorder %s11, 0
    %p115 = por %p113, %p114
    %p116 = scmp.ne.s32.totalorder %s108, %s110
    %p117 = scmp.eq.s32.totalorder %s16, 1
    %p118 = por %p116, %p117
    %p119 = scmp.ne.s32.totalorder %s110, %s111
    %p120 = scmp.eq.s32.totalorder %s16, 0
    %p121 = por %p119, %p120
    %p122 = scmp.ne.s32.totalorder %s110, %s111
    %p123 = scmp.eq.s32.totalorder %s17, 1
    %p124 = por %p122, %p123
    %p126 = scmp.ne.s32.totalorder %s111, %s125
    %p127 = scmp.eq.s32.totalorder %s17, 0
    %p128 = por %p126, %p127
    %s129 = ssub.s32 %s11, %s18
    %p130 = scmp.eq.s32.totalorder %s129, 0
    %s132 = sadd.s32 %s131, 1
    %s133 = scalar_select %p130, %s131, %s132
    %p136 = pneg %p130
    %p137 = scmp.eq.s32.totalorder %s11, 1
    %p138 = por %p136, %p137
    %p139 = scmp.ne.s32.totalorder %s131, %s134
    %p140 = scmp.eq.s32.totalorder %s11, 0
    %p141 = por %p139, %p140
    %p142 = scmp.ne.s32.totalorder %s131, %s134
    %p143 = scmp.eq.s32.totalorder %s16, 1
    %p144 = por %p142, %p143
    %p145 = scmp.ne.s32.totalorder %s134, %s135
    %p146 = scmp.eq.s32.totalorder %s16, 0
    %p147 = por %p145, %p146
    %p148 = scmp.ne.s32.totalorder %s134, %s135
    %p149 = scmp.eq.s32.totalorder %s17, 1
    %p150 = por %p148, %p149
    %p152 = scmp.ne.s32.totalorder %s135, %s151
    %p153 = scmp.eq.s32.totalorder %s17, 0
    %p154 = por %p152, %p153
    %p155 = scmp.le.s32.totalorder 1, %s11
    %p156 = scmp.lt.s32.totalorder %s11, 3
    %p157 = pnand %p155, %p156
    %p158 = pneg %p157
    // Predicated region
    $region9: #{temporal_model2_forward.1} parent=5 // pred_check
      _
    $region10: #{temporal_model2_forward.1} parent=5 // pred_check_branch
      %160 = sbr.rel (%p157) target = $region12
    $region11: #{temporal_model2_forward.1} parent=5 // pred_region
      %s161 = ssub.s32 %s11, 1
      // Predicated region
      $region13: #{temporal_model2_forward.1} parent=11 // pred_check
        %p162 = pneg %p58
      $region14: #{temporal_model2_forward.1} parent=11 // pred_check_branch
        %164 = sbr.rel (%p162) target = $region16
      $region15: #{temporal_model2_forward.1} parent=11 // pred_region
        _
      $region16: #{temporal_model2_forward.1} parent=11 // pred_fallthru
        _
      // Predicated region
      $region17: #{temporal_model2_forward.1} parent=11 // pred_check
        %p165 = pneg %p79
      $region18: #{temporal_model2_forward.1} parent=11 // pred_check_branch
        %167 = sbr.rel (%p165) target = $region20
      $region19: #{temporal_model2_forward.1} parent=11 // pred_region
        _
      $region20: #{temporal_model2_forward.1} parent=11 // pred_fallthru
        _
      // Predicated region
      $region21: #{temporal_model2_forward.1} parent=11 // pred_check
        %p168 = pneg %p100
      $region22: #{temporal_model2_forward.1} parent=11 // pred_check_branch
        %170 = sbr.rel (%p168) target = $region24
      $region23: #{temporal_model2_forward.1} parent=11 // pred_region
        _
      $region24: #{temporal_model2_forward.1} parent=11 // pred_fallthru
        _
      // Predicated region
      $region25: #{temporal_model2_forward.1} parent=11 // pred_check
        %p171 = pneg %p121
      $region26: #{temporal_model2_forward.1} parent=11 // pred_check_branch
        %173 = sbr.rel (%p171) target = $region28
      $region27: #{temporal_model2_forward.1} parent=11 // pred_region
        _
      $region28: #{temporal_model2_forward.1} parent=11 // pred_fallthru
        _
    $region12: #{temporal_model2_forward.1} parent=5 // pred_fallthru
      _
    %p174 = scmp.lt.s32.totalorder %s11, 2
    // Predicated region
    $region29: #{temporal_model2_forward.1} parent=5 // pred_check
      %p175 = pneg %p174
    $region30: #{temporal_model2_forward.1} parent=5 // pred_check_branch
      %177 = sbr.rel (%p175) target = $region32
    $region31: #{temporal_model2_forward.1} parent=5 // pred_region
      // Predicated region
      $region33: #{temporal_model2_forward.1} parent=31 // pred_check
        %p178 = pneg %p31
      $region34: #{temporal_model2_forward.1} parent=31 // pred_check_branch
        %180 = sbr.rel (%p178) target = $region36
      $region35: #{temporal_model2_forward.1} parent=31 // pred_region
        %p181 = scmp.lt.s32.totalorder %s11, 1
        %s182 = scalar_select %p181, %s11, 1
        %s183 = smul.addr %s182, 228
        %s184 = smul.addr %s183, 8
        %s185 = scalar_lea.vmem %s0, %s184
      $region36: #{temporal_model2_forward.1} parent=31 // pred_fallthru
        _
    $region32: #{temporal_model2_forward.1} parent=5 // pred_fallthru
      _
    %p186 = scmp.le.s32.totalorder 1, %s11
    %p187 = scmp.lt.s32.totalorder %s11, 3
    %p188 = pnand %p186, %p187
    %p189 = pneg %p188
    // Predicated region
    $region37: #{temporal_model2_forward.1} parent=5 // pred_check
      _
    $region38: #{temporal_model2_forward.1} parent=5 // pred_check_branch
      %191 = sbr.rel (%p188) target = $region40
    $region39: #{temporal_model2_forward.1} parent=5 // pred_region
      %s192 = ssub.s32 %s11, 1
      %p193 = scmp.lt.s32.totalorder %s16, 1
      %s194 = scalar_select %p193, %s16, 1
      %s195 = smul.addr %s194, 228
      %s196 = smul.addr %s195, 8
      %s197 = scalar_lea.vmem %s0, %s196
      %p198 = pneg %p37
      %p199 = pneg %p34
      %p200 = pneg %p58
      %p201 = pneg %p55
      %p202 = pneg %p79
      %p203 = pneg %p76
      %p204 = pneg %p100
      %p205 = pneg %p97
      %p206 = pneg %p121
      %p207 = pneg %p118
      %p208 = pneg %p147
      %p209 = pneg %p144
      %p210 = scmp.lt.s32.totalorder %s16, 1
      %s211 = scalar_select %p210, %s16, 1
      %s212 = smul.addr %s211, 76
      %s213 = smul.addr %s212, 8
      %s214 = scalar_lea.vmem %s5, %s213
      %p215 = scmp.lt.s32.totalorder %s16, 1
      %s216 = scalar_select %p215, %s16, 1
      %s217 = smul.addr %s216, 228
      %s218 = smul.addr %s217, 8
      %s219 = scalar_lea.vmem %s0, %s218
      %p220 = scmp.lt.s32.totalorder %s16, 1
      %s221 = scalar_select %p220, %s16, 1
      %s222 = smul.addr %s221, 76
      %s223 = smul.addr %s222, 8
      %s224 = scalar_lea.vmem %s5, %s223
      %v225 = vld [vmem:[%s219] sm:$0xff]
      %v226 = vld [vmem:[%s219 + $0x8] sm:$0xff]
      %v227 = vld [vmem:[%s219 + $0x10] sm:$0xff]
      %v228 = vld [vmem:[%s219 + $0x18] sm:$0xff]
      %v229 = vld [vmem:[%s219 + $0x20] sm:$0xff]
      %v230 = vld [vmem:[%s219 + $0x28] sm:$0xff]
      %v231 = vld [vmem:[%s219 + $0x30] sm:$0xff]
      %v232 = vld [vmem:[%s219 + $0x38] sm:$0xff]
      %v233 = vld [vmem:[%s219 + $0x40] sm:$0xff]
      %v234 = vld [vmem:[%s219 + $0x48] sm:$0xff]
      %v235 = vld [vmem:[%s219 + $0x50] sm:$0xff]
      %v236 = vld [vmem:[%s219 + $0x58] sm:$0xff]
      %v237 = vld [vmem:[%s219 + $0x60] sm:$0xff]
      %v238 = vld [vmem:[%s219 + $0x68] sm:$0xff]
      %v239 = vld [vmem:[%s219 + $0x70] sm:$0xff]
      %v240 = vld [vmem:[%s219 + $0x78] sm:$0xff]
      %v241 = vld [vmem:[%s219 + $0x80] sm:$0xff]
      %v242 = vld [vmem:[%s219 + $0x88] sm:$0xff]
      %v243 = vld [vmem:[%s219 + $0x90] sm:$0xff]
      %v244 = vld [vmem:[%s219 + $0x98] sm:$0xff]
      %v245 = vld [vmem:[%s219 + $0xa0] sm:$0xff]
      %v246 = vld [vmem:[%s219 + $0xa8] sm:$0xff]
      %v247 = vld [vmem:[%s219 + $0xb0] sm:$0xff]
      %v248 = vld [vmem:[%s219 + $0xb8] sm:$0xff]
      %v249 = vld [vmem:[%s219 + $0xc0] sm:$0xff]
      %v250 = vld [vmem:[%s219 + $0xc8] sm:$0xff]
      %v251 = vld [vmem:[%s219 + $0xd0] sm:$0xff]
      %v252 = vld [vmem:[%s219 + $0xd8] sm:$0xff]
      %v253 = vld [vmem:[%s219 + $0xe0] sm:$0xff]
      %v254 = vld [vmem:[%s219 + $0xe8] sm:$0xff]
      %v255 = vld [vmem:[%s219 + $0xf0] sm:$0xff]
      %v256 = vld [vmem:[%s219 + $0xf8] sm:$0xff]
      %v257 = vld [vmem:[%s219 + $0x100] sm:$0xff]
      %v258 = vld [vmem:[%s219 + $0x108] sm:$0xff]
      %v259 = vld [vmem:[%s219 + $0x110] sm:$0xff]
      %v260 = vld [vmem:[%s219 + $0x118] sm:$0xff]
      %v261 = vld [vmem:[%s219 + $0x120] sm:$0xff]
      %v262 = vld [vmem:[%s219 + $0x128] sm:$0xff]
      %v263 = vld [vmem:[%s219 + $0x130] sm:$0xff]
      %v264 = vld [vmem:[%s219 + $0x138] sm:$0xff]
      %v265 = vld [vmem:[%s219 + $0x140] sm:$0xff]
      %v266 = vld [vmem:[%s219 + $0x148] sm:$0xff]
      %v267 = vld [vmem:[%s219 + $0x150] sm:$0xff]
      %v268 = vld [vmem:[%s219 + $0x158] sm:$0xff]
      %v269 = vld [vmem:[%s219 + $0x160] sm:$0xff]
      %v270 = vld [vmem:[%s219 + $0x168] sm:$0xff]
      %v271 = vld [vmem:[%s219 + $0x170] sm:$0xff]
      %v272 = vld [vmem:[%s219 + $0x178] sm:$0xff]
      %v273 = vld [vmem:[%s219 + $0x180] sm:$0xff]
      %v274 = vld [vmem:[%s219 + $0x188] sm:$0xff]
      %v275 = vld [vmem:[%s219 + $0x190] sm:$0xff]
      %v276 = vld [vmem:[%s219 + $0x198] sm:$0xff]
      %v277 = vld [vmem:[%s219 + $0x1a0] sm:$0xff]
      %v278 = vld [vmem:[%s219 + $0x1a8] sm:$0xff]
      %v279 = vld [vmem:[%s219 + $0x1b0] sm:$0xff]
      %v280 = vld [vmem:[%s219 + $0x1b8] sm:$0xff]
      %v281 = vld [vmem:[%s219 + $0x1c0] sm:$0xff]
      %v282 = vld [vmem:[%s219 + $0x1c8] sm:$0xff]
      %v283 = vld [vmem:[%s219 + $0x1d0] sm:$0xff]
      %v284 = vld [vmem:[%s219 + $0x1d8] sm:$0xff]
      %v285 = vld [vmem:[%s219 + $0x1e0] sm:$0xff]
      %v286 = vld [vmem:[%s219 + $0x1e8] sm:$0xff]
      %v287 = vld [vmem:[%s219 + $0x1f0] sm:$0xff]
      %v288 = vld [vmem:[%s219 + $0x1f8] sm:$0xff]
      %v289 = vld [vmem:[%s219 + $0x200] sm:$0xff]
      %v290 = vld [vmem:[%s219 + $0x208] sm:$0xff]
      %v291 = vld [vmem:[%s219 + $0x210] sm:$0xff]
      %v292 = vld [vmem:[%s219 + $0x218] sm:$0xff]
      %v293 = vld [vmem:[%s219 + $0x220] sm:$0xff]
      %v294 = vld [vmem:[%s219 + $0x228] sm:$0xff]
      %v295 = vld [vmem:[%s219 + $0x230] sm:$0xff]
      %v296 = vld [vmem:[%s219 + $0x238] sm:$0xff]
      %v297 = vld [vmem:[%s219 + $0x240] sm:$0xff]
      %v298 = vld [vmem:[%s219 + $0x248] sm:$0xff]
      %v299 = vld [vmem:[%s219 + $0x250] sm:$0xff]
      %v300 = vld [vmem:[%s219 + $0x258] sm:$0xff]
      %v301 = vadd.f32 %v225, %v226
      %302 = vadd.xlane.f32.xlu0 %v301
      %v303 = vpop.xlane.xlu0 %302
      %v304 = vadd.f32 %v227, %v228
      %305 = vadd.xlane.f32.xlu0 %v304
      %v306 = vpop.xlane.xlu0 %305
      %v307 = vadd.f32 %v229, %v230
      %308 = vadd.xlane.f32.xlu0 %v307
      %v309 = vpop.xlane.xlu0 %308
      %v310 = vadd.f32 %v231, %v232
      %311 = vadd.xlane.f32.xlu0 %v310
      %v312 = vpop.xlane.xlu0 %311
      %v313 = vadd.f32 %v233, %v234
      %314 = vadd.xlane.f32.xlu0 %v313
      %v315 = vpop.xlane.xlu0 %314
      %v316 = vadd.f32 %v235, %v236
      %317 = vadd.xlane.f32.xlu0 %v316
      %v318 = vpop.xlane.xlu0 %317
      %v319 = vadd.f32 %v237, %v238
      %320 = vadd.xlane.f32.xlu0 %v319
      %v321 = vpop.xlane.xlu0 %320
      %v322 = vadd.f32 %v239, %v240
      %323 = vadd.xlane.f32.xlu0 %v322
      %v324 = vpop.xlane.xlu0 %323
      %v325 = vadd.f32 %v241, %v242
      %326 = vadd.xlane.f32.xlu0 %v325
      %v327 = vpop.xlane.xlu0 %326
      %v328 = vadd.f32 %v243, %v244
      %329 = vadd.xlane.f32.xlu0 %v328
      %v330 = vpop.xlane.xlu0 %329
      %v331 = vadd.f32 %v245, %v246
      %332 = vadd.xlane.f32.xlu0 %v331
      %v333 = vpop.xlane.xlu0 %332
      %v334 = vadd.f32 %v247, %v248
      %335 = vadd.xlane.f32.xlu0 %v334
      %v336 = vpop.xlane.xlu0 %335
      %v337 = vadd.f32 %v249, %v250
      %338 = vadd.xlane.f32.xlu0 %v337
      %v339 = vpop.xlane.xlu0 %338
      %v340 = vadd.f32 %v251, %v252
      %341 = vadd.xlane.f32.xlu0 %v340
      %v342 = vpop.xlane.xlu0 %341
      %v343 = vadd.f32 %v253, %v254
      %344 = vadd.xlane.f32.xlu0 %v343
      %v345 = vpop.xlane.xlu0 %344
      %v346 = vadd.f32 %v255, %v256
      %347 = vadd.xlane.f32.xlu0 %v346
      %v348 = vpop.xlane.xlu0 %347
      %v349 = vadd.f32 %v257, %v258
      %350 = vadd.xlane.f32.xlu0 %v349
      %v351 = vpop.xlane.xlu0 %350
      %v352 = vadd.f32 %v259, %v260
      %353 = vadd.xlane.f32.xlu0 %v352
      %v354 = vpop.xlane.xlu0 %353
      %v355 = vadd.f32 %v261, %v262
      %356 = vadd.xlane.f32.xlu0 %v355
      %v357 = vpop.xlane.xlu0 %356
      %v358 = vadd.f32 %v263, %v264
      %359 = vadd.xlane.f32.xlu0 %v358
      %v360 = vpop.xlane.xlu0 %359
      %v361 = vadd.f32 %v265, %v266
      %362 = vadd.xlane.f32.xlu0 %v361
      %v363 = vpop.xlane.xlu0 %362
      %v364 = vadd.f32 %v267, %v268
      %365 = vadd.xlane.f32.xlu0 %v364
      %v366 = vpop.xlane.xlu0 %365
      %v367 = vadd.f32 %v269, %v270
      %368 = vadd.xlane.f32.xlu0 %v367
      %v369 = vpop.xlane.xlu0 %368
      %v370 = vadd.f32 %v271, %v272
      %371 = vadd.xlane.f32.xlu0 %v370
      %v372 = vpop.xlane.xlu0 %371
      %v373 = vadd.f32 %v273, %v274
      %374 = vadd.xlane.f32.xlu0 %v373
      %v375 = vpop.xlane.xlu0 %374
      %v376 = vadd.f32 %v275, %v276
      %377 = vadd.xlane.f32.xlu0 %v376
      %v378 = vpop.xlane.xlu0 %377
      %v379 = vadd.f32 %v277, %v278
      %380 = vadd.xlane.f32.xlu0 %v379
      %v381 = vpop.xlane.xlu0 %380
      %v382 = vadd.f32 %v279, %v280
      %383 = vadd.xlane.f32.xlu0 %v382
      %v384 = vpop.xlane.xlu0 %383
      %v385 = vadd.f32 %v281, %v282
      %386 = vadd.xlane.f32.xlu0 %v385
      %v387 = vpop.xlane.xlu0 %386
      %v388 = vadd.f32 %v283, %v284
      %389 = vadd.xlane.f32.xlu0 %v388
      %v390 = vpop.xlane.xlu0 %389
      %v391 = vadd.f32 %v285, %v286
      %392 = vadd.xlane.f32.xlu0 %v391
      %v393 = vpop.xlane.xlu0 %392
      %v394 = vadd.f32 %v287, %v288
      %395 = vadd.xlane.f32.xlu0 %v394
      %v396 = vpop.xlane.xlu0 %395
      %v397 = vadd.f32 %v289, %v290
      %398 = vadd.xlane.f32.xlu0 %v397
      %v399 = vpop.xlane.xlu0 %398
      %v400 = vadd.f32 %v291, %v292
      %401 = vadd.xlane.f32.xlu0 %v400
      %v402 = vpop.xlane.xlu0 %401
      %v403 = vadd.f32 %v293, %v294
      %404 = vadd.xlane.f32.xlu0 %v403
      %v405 = vpop.xlane.xlu0 %404
      %v406 = vadd.f32 %v295, %v296
      %407 = vadd.xlane.f32.xlu0 %v406
      %v408 = vpop.xlane.xlu0 %407
      %v409 = vadd.f32 %v297, %v298
      %410 = vadd.xlane.f32.xlu0 %v409
      %v411 = vpop.xlane.xlu0 %410
      %v412 = vadd.f32 %v299, %v300
      %413 = vadd.xlane.f32.xlu0 %v412
      %v414 = vpop.xlane.xlu0 %413
      %v415 = vmul.f32 %v303, 0.00390625
      %v416 = vmul.f32 %v306, 0.00390625
      %v417 = vmul.f32 %v309, 0.00390625
      %v418 = vmul.f32 %v312, 0.00390625
      %v419 = vmul.f32 %v315, 0.00390625
      %v420 = vmul.f32 %v318, 0.00390625
      %v421 = vmul.f32 %v321, 0.00390625
      %v422 = vmul.f32 %v324, 0.00390625
      %v423 = vmul.f32 %v327, 0.00390625
      %v424 = vmul.f32 %v330, 0.00390625
      %v425 = vmul.f32 %v333, 0.00390625
      %v426 = vmul.f32 %v336, 0.00390625
      %v427 = vmul.f32 %v339, 0.00390625
      %v428 = vmul.f32 %v342, 0.00390625
      %v429 = vmul.f32 %v345, 0.00390625
      %v430 = vmul.f32 %v348, 0.00390625
      %v431 = vmul.f32 %v351, 0.00390625
      %v432 = vmul.f32 %v354, 0.00390625
      %v433 = vmul.f32 %v357, 0.00390625
      %v434 = vmul.f32 %v360, 0.00390625
      %v435 = vmul.f32 %v363, 0.00390625
      %v436 = vmul.f32 %v366, 0.00390625
      %v437 = vmul.f32 %v369, 0.00390625
      %v438 = vmul.f32 %v372, 0.00390625
      %v439 = vmul.f32 %v375, 0.00390625
      %v440 = vmul.f32 %v378, 0.00390625
      %v441 = vmul.f32 %v381, 0.00390625
      %v442 = vmul.f32 %v384, 0.00390625
      %v443 = vmul.f32 %v387, 0.00390625
      %v444 = vmul.f32 %v390, 0.00390625
      %v445 = vmul.f32 %v393, 0.00390625
      %v446 = vmul.f32 %v396, 0.00390625
      %v447 = vmul.f32 %v399, 0.00390625
      %v448 = vmul.f32 %v402, 0.00390625
      %v449 = vmul.f32 %v405, 0.00390625
      %v450 = vmul.f32 %v408, 0.00390625
      %v451 = vmul.f32 %v411, 0.00390625
      %v452 = vmul.f32 %v414, 0.00390625
      %s453 = scalar_lea.vmem %s219, 608
      %v454 = vld [vmem:[%s453] sm:$0xff]
      %v455 = vld [vmem:[%s453 + $0x8] sm:$0xff]
      %v456 = vld [vmem:[%s453 + $0x10] sm:$0xff]
      %v457 = vld [vmem:[%s453 + $0x18] sm:$0xff]
      %v458 = vld [vmem:[%s453 + $0x20] sm:$0xff]
      %v459 = vld [vmem:[%s453 + $0x28] sm:$0xff]
      %v460 = vld [vmem:[%s453 + $0x30] sm:$0xff]
      %v461 = vld [vmem:[%s453 + $0x38] sm:$0xff]
      %v462 = vld [vmem:[%s453 + $0x40] sm:$0xff]
      %v463 = vld [vmem:[%s453 + $0x48] sm:$0xff]
      %v464 = vld [vmem:[%s453 + $0x50] sm:$0xff]
      %v465 = vld [vmem:[%s453 + $0x58] sm:$0xff]
      %v466 = vld [vmem:[%s453 + $0x60] sm:$0xff]
      %v467 = vld [vmem:[%s453 + $0x68] sm:$0xff]
      %v468 = vld [vmem:[%s453 + $0x70] sm:$0xff]
      %v469 = vld [vmem:[%s453 + $0x78] sm:$0xff]
      %v470 = vld [vmem:[%s453 + $0x80] sm:$0xff]
      %v471 = vld [vmem:[%s453 + $0x88] sm:$0xff]
      %v472 = vld [vmem:[%s453 + $0x90] sm:$0xff]
      %v473 = vld [vmem:[%s453 + $0x98] sm:$0xff]
      %v474 = vld [vmem:[%s453 + $0xa0] sm:$0xff]
      %v475 = vld [vmem:[%s453 + $0xa8] sm:$0xff]
      %v476 = vld [vmem:[%s453 + $0xb0] sm:$0xff]
      %v477 = vld [vmem:[%s453 + $0xb8] sm:$0xff]
      %v478 = vld [vmem:[%s453 + $0xc0] sm:$0xff]
      %v479 = vld [vmem:[%s453 + $0xc8] sm:$0xff]
      %v480 = vld [vmem:[%s453 + $0xd0] sm:$0xff]
      %v481 = vld [vmem:[%s453 + $0xd8] sm:$0xff]
      %v482 = vld [vmem:[%s453 + $0xe0] sm:$0xff]
      %v483 = vld [vmem:[%s453 + $0xe8] sm:$0xff]
      %v484 = vld [vmem:[%s453 + $0xf0] sm:$0xff]
      %v485 = vld [vmem:[%s453 + $0xf8] sm:$0xff]
      %v486 = vld [vmem:[%s453 + $0x100] sm:$0xff]
      %v487 = vld [vmem:[%s453 + $0x108] sm:$0xff]
      %v488 = vld [vmem:[%s453 + $0x110] sm:$0xff]
      %v489 = vld [vmem:[%s453 + $0x118] sm:$0xff]
      %v490 = vld [vmem:[%s453 + $0x120] sm:$0xff]
      %v491 = vld [vmem:[%s453 + $0x128] sm:$0xff]
      %v492 = vld [vmem:[%s453 + $0x130] sm:$0xff]
      %v493 = vld [vmem:[%s453 + $0x138] sm:$0xff]
      %v494 = vld [vmem:[%s453 + $0x140] sm:$0xff]
      %v495 = vld [vmem:[%s453 + $0x148] sm:$0xff]
      %v496 = vld [vmem:[%s453 + $0x150] sm:$0xff]
      %v497 = vld [vmem:[%s453 + $0x158] sm:$0xff]
      %v498 = vld [vmem:[%s453 + $0x160] sm:$0xff]
      %v499 = vld [vmem:[%s453 + $0x168] sm:$0xff]
      %v500 = vld [vmem:[%s453 + $0x170] sm:$0xff]
      %v501 = vld [vmem:[%s453 + $0x178] sm:$0xff]
      %v502 = vld [vmem:[%s453 + $0x180] sm:$0xff]
      %v503 = vld [vmem:[%s453 + $0x188] sm:$0xff]
      %v504 = vld [vmem:[%s453 + $0x190] sm:$0xff]
      %v505 = vld [vmem:[%s453 + $0x198] sm:$0xff]
      %v506 = vld [vmem:[%s453 + $0x1a0] sm:$0xff]
      %v507 = vld [vmem:[%s453 + $0x1a8] sm:$0xff]
      %v508 = vld [vmem:[%s453 + $0x1b0] sm:$0xff]
      %v509 = vld [vmem:[%s453 + $0x1b8] sm:$0xff]
      %v510 = vld [vmem:[%s453 + $0x1c0] sm:$0xff]
      %v511 = vld [vmem:[%s453 + $0x1c8] sm:$0xff]
      %v512 = vld [vmem:[%s453 + $0x1d0] sm:$0xff]
      %v513 = vld [vmem:[%s453 + $0x1d8] sm:$0xff]
      %v514 = vld [vmem:[%s453 + $0x1e0] sm:$0xff]
      %v515 = vld [vmem:[%s453 + $0x1e8] sm:$0xff]
      %v516 = vld [vmem:[%s453 + $0x1f0] sm:$0xff]
      %v517 = vld [vmem:[%s453 + $0x1f8] sm:$0xff]
      %v518 = vld [vmem:[%s453 + $0x200] sm:$0xff]
      %v519 = vld [vmem:[%s453 + $0x208] sm:$0xff]
      %v520 = vld [vmem:[%s453 + $0x210] sm:$0xff]
      %v521 = vld [vmem:[%s453 + $0x218] sm:$0xff]
      %v522 = vld [vmem:[%s453 + $0x220] sm:$0xff]
      %v523 = vld [vmem:[%s453 + $0x228] sm:$0xff]
      %v524 = vld [vmem:[%s453 + $0x230] sm:$0xff]
      %v525 = vld [vmem:[%s453 + $0x238] sm:$0xff]
      %v526 = vld [vmem:[%s453 + $0x240] sm:$0xff]
      %v527 = vld [vmem:[%s453 + $0x248] sm:$0xff]
      %v528 = vld [vmem:[%s453 + $0x250] sm:$0xff]
      %v529 = vld [vmem:[%s453 + $0x258] sm:$0xff]
      %v530 = vadd.f32 %v454, %v455
      %531 = vadd.xlane.f32.xlu0 %v530
      %v532 = vpop.xlane.xlu0 %531
      %v533 = vadd.f32 %v456, %v457
      %534 = vadd.xlane.f32.xlu0 %v533
      %v535 = vpop.xlane.xlu0 %534
      %v536 = vadd.f32 %v458, %v459
      %537 = vadd.xlane.f32.xlu0 %v536
      %v538 = vpop.xlane.xlu0 %537
      %v539 = vadd.f32 %v460, %v461
      %540 = vadd.xlane.f32.xlu0 %v539
      %v541 = vpop.xlane.xlu0 %540
      %v542 = vadd.f32 %v462, %v463
      %543 = vadd.xlane.f32.xlu0 %v542
      %v544 = vpop.xlane.xlu0 %543
      %v545 = vadd.f32 %v464, %v465
      %546 = vadd.xlane.f32.xlu0 %v545
      %v547 = vpop.xlane.xlu0 %546
      %v548 = vadd.f32 %v466, %v467
      %549 = vadd.xlane.f32.xlu0 %v548
      %v550 = vpop.xlane.xlu0 %549
      %v551 = vadd.f32 %v468, %v469
      %552 = vadd.xlane.f32.xlu0 %v551
      %v553 = vpop.xlane.xlu0 %552
      %v554 = vadd.f32 %v470, %v471
      %555 = vadd.xlane.f32.xlu0 %v554
      %v556 = vpop.xlane.xlu0 %555
      %v557 = vadd.f32 %v472, %v473
      %558 = vadd.xlane.f32.xlu0 %v557
      %v559 = vpop.xlane.xlu0 %558
      %v560 = vadd.f32 %v474, %v475
      %561 = vadd.xlane.f32.xlu0 %v560
      %v562 = vpop.xlane.xlu0 %561
      %v563 = vadd.f32 %v476, %v477
      %564 = vadd.xlane.f32.xlu0 %v563
      %v565 = vpop.xlane.xlu0 %564
      %v566 = vadd.f32 %v478, %v479
      %567 = vadd.xlane.f32.xlu0 %v566
      %v568 = vpop.xlane.xlu0 %567
      %v569 = vadd.f32 %v480, %v481
      %570 = vadd.xlane.f32.xlu0 %v569
      %v571 = vpop.xlane.xlu0 %570
      %v572 = vadd.f32 %v482, %v483
      %573 = vadd.xlane.f32.xlu0 %v572
      %v574 = vpop.xlane.xlu0 %573
      %v575 = vadd.f32 %v484, %v485
      %576 = vadd.xlane.f32.xlu0 %v575
      %v577 = vpop.xlane.xlu0 %576
      %v578 = vadd.f32 %v486, %v487
      %579 = vadd.xlane.f32.xlu0 %v578
      %v580 = vpop.xlane.xlu0 %579
      %v581 = vadd.f32 %v488, %v489
      %582 = vadd.xlane.f32.xlu0 %v581
      %v583 = vpop.xlane.xlu0 %582
      %v584 = vadd.f32 %v490, %v491
      %585 = vadd.xlane.f32.xlu0 %v584
      %v586 = vpop.xlane.xlu0 %585
      %v587 = vadd.f32 %v492, %v493
      %588 = vadd.xlane.f32.xlu0 %v587
      %v589 = vpop.xlane.xlu0 %588
      %v590 = vadd.f32 %v494, %v495
      %591 = vadd.xlane.f32.xlu0 %v590
      %v592 = vpop.xlane.xlu0 %591
      %v593 = vadd.f32 %v496, %v497
      %594 = vadd.xlane.f32.xlu0 %v593
      %v595 = vpop.xlane.xlu0 %594
      %v596 = vadd.f32 %v498, %v499
      %597 = vadd.xlane.f32.xlu0 %v596
      %v598 = vpop.xlane.xlu0 %597
      %v599 = vadd.f32 %v500, %v501
      %600 = vadd.xlane.f32.xlu0 %v599
      %v601 = vpop.xlane.xlu0 %600
      %v602 = vadd.f32 %v502, %v503
      %603 = vadd.xlane.f32.xlu0 %v602
      %v604 = vpop.xlane.xlu0 %603
      %v605 = vadd.f32 %v504, %v505
      %606 = vadd.xlane.f32.xlu0 %v605
      %v607 = vpop.xlane.xlu0 %606
      %v608 = vadd.f32 %v506, %v507
      %609 = vadd.xlane.f32.xlu0 %v608
      %v610 = vpop.xlane.xlu0 %609
      %v611 = vadd.f32 %v508, %v509
      %612 = vadd.xlane.f32.xlu0 %v611
      %v613 = vpop.xlane.xlu0 %612
      %v614 = vadd.f32 %v510, %v511
      %615 = vadd.xlane.f32.xlu0 %v614
      %v616 = vpop.xlane.xlu0 %615
      %v617 = vadd.f32 %v512, %v513
      %618 = vadd.xlane.f32.xlu0 %v617
      %v619 = vpop.xlane.xlu0 %618
      %v620 = vadd.f32 %v514, %v515
      %621 = vadd.xlane.f32.xlu0 %v620
      %v622 = vpop.xlane.xlu0 %621
      %v623 = vadd.f32 %v516, %v517
      %624 = vadd.xlane.f32.xlu0 %v623
      %v625 = vpop.xlane.xlu0 %624
      %v626 = vadd.f32 %v518, %v519
      %627 = vadd.xlane.f32.xlu0 %v626
      %v628 = vpop.xlane.xlu0 %627
      %v629 = vadd.f32 %v520, %v521
      %630 = vadd.xlane.f32.xlu0 %v629
      %v631 = vpop.xlane.xlu0 %630
      %v632 = vadd.f32 %v522, %v523
      %633 = vadd.xlane.f32.xlu0 %v632
      %v634 = vpop.xlane.xlu0 %633
      %v635 = vadd.f32 %v524, %v525
      %636 = vadd.xlane.f32.xlu0 %v635
      %v637 = vpop.xlane.xlu0 %636
      %v638 = vadd.f32 %v526, %v527
      %639 = vadd.xlane.f32.xlu0 %v638
      %v640 = vpop.xlane.xlu0 %639
      %v641 = vadd.f32 %v528, %v529
      %642 = vadd.xlane.f32.xlu0 %v641
      %v643 = vpop.xlane.xlu0 %642
      %v644 = vmul.f32 %v532, 0.00390625
      %v645 = vmul.f32 %v535, 0.00390625
      %v646 = vmul.f32 %v538, 0.00390625
      %v647 = vmul.f32 %v541, 0.00390625
      %v648 = vmul.f32 %v544, 0.00390625
      %v649 = vmul.f32 %v547, 0.00390625
      %v650 = vmul.f32 %v550, 0.00390625
      %v651 = vmul.f32 %v553, 0.00390625
      %v652 = vmul.f32 %v556, 0.00390625
      %v653 = vmul.f32 %v559, 0.00390625
      %v654 = vmul.f32 %v562, 0.00390625
      %v655 = vmul.f32 %v565, 0.00390625
      %v656 = vmul.f32 %v568, 0.00390625
      %v657 = vmul.f32 %v571, 0.00390625
      %v658 = vmul.f32 %v574, 0.00390625
      %v659 = vmul.f32 %v577, 0.00390625
      %v660 = vmul.f32 %v580, 0.00390625
      %v661 = vmul.f32 %v583, 0.00390625
      %v662 = vmul.f32 %v586, 0.00390625
      %v663 = vmul.f32 %v589, 0.00390625
      %v664 = vmul.f32 %v592, 0.00390625
      %v665 = vmul.f32 %v595, 0.00390625
      %v666 = vmul.f32 %v598, 0.00390625
      %v667 = vmul.f32 %v601, 0.00390625
      %v668 = vmul.f32 %v604, 0.00390625
      %v669 = vmul.f32 %v607, 0.00390625
      %v670 = vmul.f32 %v610, 0.00390625
      %v671 = vmul.f32 %v613, 0.00390625
      %v672 = vmul.f32 %v616, 0.00390625
      %v673 = vmul.f32 %v619, 0.00390625
      %v674 = vmul.f32 %v622, 0.00390625
      %v675 = vmul.f32 %v625, 0.00390625
      %v676 = vmul.f32 %v628, 0.00390625
      %v677 = vmul.f32 %v631, 0.00390625
      %v678 = vmul.f32 %v634, 0.00390625
      %v679 = vmul.f32 %v637, 0.00390625
      %v680 = vmul.f32 %v640, 0.00390625
      %v681 = vmul.f32 %v643, 0.00390625
      %s682 = scalar_lea.vmem %s219, 1216
      %v683 = vld [vmem:[%s682] sm:$0xff]
      %v684 = vld [vmem:[%s682 + $0x8] sm:$0xff]
      %v685 = vld [vmem:[%s682 + $0x10] sm:$0xff]
      %v686 = vld [vmem:[%s682 + $0x18] sm:$0xff]
      %v687 = vld [vmem:[%s682 + $0x20] sm:$0xff]
      %v688 = vld [vmem:[%s682 + $0x28] sm:$0xff]
      %v689 = vld [vmem:[%s682 + $0x30] sm:$0xff]
      %v690 = vld [vmem:[%s682 + $0x38] sm:$0xff]
      %v691 = vld [vmem:[%s682 + $0x40] sm:$0xff]
      %v692 = vld [vmem:[%s682 + $0x48] sm:$0xff]
      %v693 = vld [vmem:[%s682 + $0x50] sm:$0xff]
      %v694 = vld [vmem:[%s682 + $0x58] sm:$0xff]
      %v695 = vld [vmem:[%s682 + $0x60] sm:$0xff]
      %v696 = vld [vmem:[%s682 + $0x68] sm:$0xff]
      %v697 = vld [vmem:[%s682 + $0x70] sm:$0xff]
      %v698 = vld [vmem:[%s682 + $0x78] sm:$0xff]
      %v699 = vld [vmem:[%s682 + $0x80] sm:$0xff]
      %v700 = vld [vmem:[%s682 + $0x88] sm:$0xff]
      %v701 = vld [vmem:[%s682 + $0x90] sm:$0xff]
      %v702 = vld [vmem:[%s682 + $0x98] sm:$0xff]
      %v703 = vld [vmem:[%s682 + $0xa0] sm:$0xff]
      %v704 = vld [vmem:[%s682 + $0xa8] sm:$0xff]
      %v705 = vld [vmem:[%s682 + $0xb0] sm:$0xff]
      %v706 = vld [vmem:[%s682 + $0xb8] sm:$0xff]
      %v707 = vld [vmem:[%s682 + $0xc0] sm:$0xff]
      %v708 = vld [vmem:[%s682 + $0xc8] sm:$0xff]
      %v709 = vld [vmem:[%s682 + $0xd0] sm:$0xff]
      %v710 = vld [vmem:[%s682 + $0xd8] sm:$0xff]
      %v711 = vld [vmem:[%s682 + $0xe0] sm:$0xff]
      %v712 = vld [vmem:[%s682 + $0xe8] sm:$0xff]
      %v713 = vld [vmem:[%s682 + $0xf0] sm:$0xff]
      %v714 = vld [vmem:[%s682 + $0xf8] sm:$0xff]
      %v715 = vld [vmem:[%s682 + $0x100] sm:$0xff]
      %v716 = vld [vmem:[%s682 + $0x108] sm:$0xff]
      %v717 = vld [vmem:[%s682 + $0x110] sm:$0xff]
      %v718 = vld [vmem:[%s682 + $0x118] sm:$0xff]
      %v719 = vld [vmem:[%s682 + $0x120] sm:$0xff]
      %v720 = vld [vmem:[%s682 + $0x128] sm:$0xff]
      %v721 = vld [vmem:[%s682 + $0x130] sm:$0xff]
      %v722 = vld [vmem:[%s682 + $0x138] sm:$0xff]
      %v723 = vld [vmem:[%s682 + $0x140] sm:$0xff]
      %v724 = vld [vmem:[%s682 + $0x148] sm:$0xff]
      %v725 = vld [vmem:[%s682 + $0x150] sm:$0xff]
      %v726 = vld [vmem:[%s682 + $0x158] sm:$0xff]
      %v727 = vld [vmem:[%s682 + $0x160] sm:$0xff]
      %v728 = vld [vmem:[%s682 + $0x168] sm:$0xff]
      %v729 = vld [vmem:[%s682 + $0x170] sm:$0xff]
      %v730 = vld [vmem:[%s682 + $0x178] sm:$0xff]
      %v731 = vld [vmem:[%s682 + $0x180] sm:$0xff]
      %v732 = vld [vmem:[%s682 + $0x188] sm:$0xff]
      %v733 = vld [vmem:[%s682 + $0x190] sm:$0xff]
      %v734 = vld [vmem:[%s682 + $0x198] sm:$0xff]
      %v735 = vld [vmem:[%s682 + $0x1a0] sm:$0xff]
      %v736 = vld [vmem:[%s682 + $0x1a8] sm:$0xff]
      %v737 = vld [vmem:[%s682 + $0x1b0] sm:$0xff]
      %v738 = vld [vmem:[%s682 + $0x1b8] sm:$0xff]
      %v739 = vld [vmem:[%s682 + $0x1c0] sm:$0xff]
      %v740 = vld [vmem:[%s682 + $0x1c8] sm:$0xff]
      %v741 = vld [vmem:[%s682 + $0x1d0] sm:$0xff]
      %v742 = vld [vmem:[%s682 + $0x1d8] sm:$0xff]
      %v743 = vld [vmem:[%s682 + $0x1e0] sm:$0xff]
      %v744 = vld [vmem:[%s682 + $0x1e8] sm:$0xff]
      %v745 = vld [vmem:[%s682 + $0x1f0] sm:$0xff]
      %v746 = vld [vmem:[%s682 + $0x1f8] sm:$0xff]
      %v747 = vld [vmem:[%s682 + $0x200] sm:$0xff]
      %v748 = vld [vmem:[%s682 + $0x208] sm:$0xff]
      %v749 = vld [vmem:[%s682 + $0x210] sm:$0xff]
      %v750 = vld [vmem:[%s682 + $0x218] sm:$0xff]
      %v751 = vld [vmem:[%s682 + $0x220] sm:$0xff]
      %v752 = vld [vmem:[%s682 + $0x228] sm:$0xff]
      %v753 = vld [vmem:[%s682 + $0x230] sm:$0xff]
      %v754 = vld [vmem:[%s682 + $0x238] sm:$0xff]
      %v755 = vld [vmem:[%s682 + $0x240] sm:$0xff]
      %v756 = vld [vmem:[%s682 + $0x248] sm:$0xff]
      %v757 = vld [vmem:[%s682 + $0x250] sm:$0xff]
      %v758 = vld [vmem:[%s682 + $0x258] sm:$0xff]
      %v759 = vadd.f32 %v683, %v684
      %760 = vadd.xlane.f32.xlu0 %v759
      %v761 = vpop.xlane.xlu0 %760
      %v762 = vadd.f32 %v685, %v686
      %763 = vadd.xlane.f32.xlu0 %v762
      %v764 = vpop.xlane.xlu0 %763
      %v765 = vadd.f32 %v687, %v688
      %766 = vadd.xlane.f32.xlu0 %v765
      %v767 = vpop.xlane.xlu0 %766
      %v768 = vadd.f32 %v689, %v690
      %769 = vadd.xlane.f32.xlu0 %v768
      %v770 = vpop.xlane.xlu0 %769
      %v771 = vadd.f32 %v691, %v692
      %772 = vadd.xlane.f32.xlu0 %v771
      %v773 = vpop.xlane.xlu0 %772
      %v774 = vadd.f32 %v693, %v694
      %775 = vadd.xlane.f32.xlu0 %v774
      %v776 = vpop.xlane.xlu0 %775
      %v777 = vadd.f32 %v695, %v696
      %778 = vadd.xlane.f32.xlu0 %v777
      %v779 = vpop.xlane.xlu0 %778
      %v780 = vadd.f32 %v697, %v698
      %781 = vadd.xlane.f32.xlu0 %v780
      %v782 = vpop.xlane.xlu0 %781
      %v783 = vadd.f32 %v699, %v700
      %784 = vadd.xlane.f32.xlu0 %v783
      %v785 = vpop.xlane.xlu0 %784
      %v786 = vadd.f32 %v701, %v702
      %787 = vadd.xlane.f32.xlu0 %v786
      %v788 = vpop.xlane.xlu0 %787
      %v789 = vadd.f32 %v703, %v704
      %790 = vadd.xlane.f32.xlu0 %v789
      %v791 = vpop.xlane.xlu0 %790
      %v792 = vadd.f32 %v705, %v706
      %793 = vadd.xlane.f32.xlu0 %v792
      %v794 = vpop.xlane.xlu0 %793
      %v795 = vadd.f32 %v707, %v708
      %796 = vadd.xlane.f32.xlu0 %v795
      %v797 = vpop.xlane.xlu0 %796
      %v798 = vadd.f32 %v709, %v710
      %799 = vadd.xlane.f32.xlu0 %v798
      %v800 = vpop.xlane.xlu0 %799
      %v801 = vadd.f32 %v711, %v712
      %802 = vadd.xlane.f32.xlu0 %v801
      %v803 = vpop.xlane.xlu0 %802
      %v804 = vadd.f32 %v713, %v714
      %805 = vadd.xlane.f32.xlu0 %v804
      %v806 = vpop.xlane.xlu0 %805
      %v807 = vadd.f32 %v715, %v716
      %808 = vadd.xlane.f32.xlu0 %v807
      %v809 = vpop.xlane.xlu0 %808
      %v810 = vadd.f32 %v717, %v718
      %811 = vadd.xlane.f32.xlu0 %v810
      %v812 = vpop.xlane.xlu0 %811
      %v813 = vadd.f32 %v719, %v720
      %814 = vadd.xlane.f32.xlu0 %v813
      %v815 = vpop.xlane.xlu0 %814
      %v816 = vadd.f32 %v721, %v722
      %817 = vadd.xlane.f32.xlu0 %v816
      %v818 = vpop.xlane.xlu0 %817
      %v819 = vadd.f32 %v723, %v724
      %820 = vadd.xlane.f32.xlu0 %v819
      %v821 = vpop.xlane.xlu0 %820
      %v822 = vadd.f32 %v725, %v726
      %823 = vadd.xlane.f32.xlu0 %v822
      %v824 = vpop.xlane.xlu0 %823
      %v825 = vadd.f32 %v727, %v728
      %826 = vadd.xlane.f32.xlu0 %v825
      %v827 = vpop.xlane.xlu0 %826
      %v828 = vadd.f32 %v729, %v730
      %829 = vadd.xlane.f32.xlu0 %v828
      %v830 = vpop.xlane.xlu0 %829
      %v831 = vadd.f32 %v731, %v732
      %832 = vadd.xlane.f32.xlu0 %v831
      %v833 = vpop.xlane.xlu0 %832
      %v834 = vadd.f32 %v733, %v734
      %835 = vadd.xlane.f32.xlu0 %v834
      %v836 = vpop.xlane.xlu0 %835
      %v837 = vadd.f32 %v735, %v736
      %838 = vadd.xlane.f32.xlu0 %v837
      %v839 = vpop.xlane.xlu0 %838
      %v840 = vadd.f32 %v737, %v738
      %841 = vadd.xlane.f32.xlu0 %v840
      %v842 = vpop.xlane.xlu0 %841
      %v843 = vadd.f32 %v739, %v740
      %844 = vadd.xlane.f32.xlu0 %v843
      %v845 = vpop.xlane.xlu0 %844
      %v846 = vadd.f32 %v741, %v742
      %847 = vadd.xlane.f32.xlu0 %v846
      %v848 = vpop.xlane.xlu0 %847
      %v849 = vadd.f32 %v743, %v744
      %850 = vadd.xlane.f32.xlu0 %v849
      %v851 = vpop.xlane.xlu0 %850
      %v852 = vadd.f32 %v745, %v746
      %853 = vadd.xlane.f32.xlu0 %v852
      %v854 = vpop.xlane.xlu0 %853
      %v855 = vadd.f32 %v747, %v748
      %856 = vadd.xlane.f32.xlu0 %v855
      %v857 = vpop.xlane.xlu0 %856
      %v858 = vadd.f32 %v749, %v750
      %859 = vadd.xlane.f32.xlu0 %v858
      %v860 = vpop.xlane.xlu0 %859
      %v861 = vadd.f32 %v751, %v752
      %862 = vadd.xlane.f32.xlu0 %v861
      %v863 = vpop.xlane.xlu0 %862
      %v864 = vadd.f32 %v753, %v754
      %865 = vadd.xlane.f32.xlu0 %v864
      %v866 = vpop.xlane.xlu0 %865
      %v867 = vadd.f32 %v755, %v756
      %868 = vadd.xlane.f32.xlu0 %v867
      %v869 = vpop.xlane.xlu0 %868
      %v870 = vadd.f32 %v757, %v758
      %871 = vadd.xlane.f32.xlu0 %v870
      %v872 = vpop.xlane.xlu0 %871
      %v873 = vmul.f32 %v761, 0.00390625
      %v874 = vmul.f32 %v764, 0.00390625
      %v875 = vmul.f32 %v767, 0.00390625
      %v876 = vmul.f32 %v770, 0.00390625
      %v877 = vmul.f32 %v773, 0.00390625
      %v878 = vmul.f32 %v776, 0.00390625
      %v879 = vmul.f32 %v779, 0.00390625
      %v880 = vmul.f32 %v782, 0.00390625
      %v881 = vmul.f32 %v785, 0.00390625
      %v882 = vmul.f32 %v788, 0.00390625
      %v883 = vmul.f32 %v791, 0.00390625
      %v884 = vmul.f32 %v794, 0.00390625
      %v885 = vmul.f32 %v797, 0.00390625
      %v886 = vmul.f32 %v800, 0.00390625
      %v887 = vmul.f32 %v803, 0.00390625
      %v888 = vmul.f32 %v806, 0.00390625
      %v889 = vmul.f32 %v809, 0.00390625
      %v890 = vmul.f32 %v812, 0.00390625
      %v891 = vmul.f32 %v815, 0.00390625
      %v892 = vmul.f32 %v818, 0.00390625
      %v893 = vmul.f32 %v821, 0.00390625
      %v894 = vmul.f32 %v824, 0.00390625
      %v895 = vmul.f32 %v827, 0.00390625
      %v896 = vmul.f32 %v830, 0.00390625
      %v897 = vmul.f32 %v833, 0.00390625
      %v898 = vmul.f32 %v836, 0.00390625
      %v899 = vmul.f32 %v839, 0.00390625
      %v900 = vmul.f32 %v842, 0.00390625
      %v901 = vmul.f32 %v845, 0.00390625
      %v902 = vmul.f32 %v848, 0.00390625
      %v903 = vmul.f32 %v851, 0.00390625
      %v904 = vmul.f32 %v854, 0.00390625
      %v905 = vmul.f32 %v857, 0.00390625
      %v906 = vmul.f32 %v860, 0.00390625
      %v907 = vmul.f32 %v863, 0.00390625
      %v908 = vmul.f32 %v866, 0.00390625
      %v909 = vmul.f32 %v869, 0.00390625
      %v910 = vmul.f32 %v872, 0.00390625
      %v911 = vld [vmem:[%s1] sm:$0xff]
      %v912 = vld [vmem:[%s1 + $0x8] sm:$0xff]
      %v913 = vld [vmem:[%s1 + $0x10] sm:$0xff]
      %v914 = vld [vmem:[%s1 + $0x18] sm:$0xff]
      %v915 = vld [vmem:[%s1 + $0x20] sm:$0xff]
      %v916 = vld [vmem:[%s1 + $0x28] sm:$0xff]
      %v917 = vld [vmem:[%s1 + $0x30] sm:$0xff]
      %v918 = vld [vmem:[%s1 + $0x38] sm:$0xff]
      %v919 = vld [vmem:[%s1 + $0x40] sm:$0xff]
      %v920 = vld [vmem:[%s1 + $0x48] sm:$0xff]
      %v921 = vld [vmem:[%s1 + $0x50] sm:$0xff]
      %v922 = vld [vmem:[%s1 + $0x58] sm:$0xff]
      %v923 = vld [vmem:[%s1 + $0x60] sm:$0xff]
      %v924 = vld [vmem:[%s1 + $0x68] sm:$0xff]
      %v925 = vld [vmem:[%s1 + $0x70] sm:$0xff]
      %v926 = vld [vmem:[%s1 + $0x78] sm:$0xff]
      %v927 = vld [vmem:[%s1 + $0x80] sm:$0xff]
      %v928 = vld [vmem:[%s1 + $0x88] sm:$0xff]
      %v929 = vld [vmem:[%s1 + $0x90] sm:$0xff]
      %v930 = vld [vmem:[%s1 + $0x98] sm:$0xff]
      %v931 = vld [vmem:[%s1 + $0xa0] sm:$0xff]
      %v932 = vld [vmem:[%s1 + $0xa8] sm:$0xff]
      %v933 = vld [vmem:[%s1 + $0xb0] sm:$0xff]
      %v934 = vld [vmem:[%s1 + $0xb8] sm:$0xff]
      %v935 = vld [vmem:[%s1 + $0xc0] sm:$0xff]
      %v936 = vld [vmem:[%s1 + $0xc8] sm:$0xff]
      %v937 = vld [vmem:[%s1 + $0xd0] sm:$0xff]
      %v938 = vld [vmem:[%s1 + $0xd8] sm:$0xff]
      %v939 = vld [vmem:[%s1 + $0xe0] sm:$0xff]
      %v940 = vld [vmem:[%s1 + $0xe8] sm:$0xff]
      %v941 = vld [vmem:[%s1 + $0xf0] sm:$0xff]
      %v942 = vld [vmem:[%s1 + $0xf8] sm:$0xff]
      %v943 = vld [vmem:[%s1 + $0x100] sm:$0xff]
      %v944 = vld [vmem:[%s1 + $0x108] sm:$0xff]
      %v945 = vld [vmem:[%s1 + $0x110] sm:$0xff]
      %v946 = vld [vmem:[%s1 + $0x118] sm:$0xff]
      %v947 = vld [vmem:[%s1 + $0x120] sm:$0xff]
      %v948 = vld [vmem:[%s1 + $0x128] sm:$0xff]
      %v949 = vld [vmem:[%s1 + $0x130] sm:$0xff]
      %v950 = vld [vmem:[%s1 + $0x138] sm:$0xff]
      %v951 = vld [vmem:[%s1 + $0x140] sm:$0xff]
      %v952 = vld [vmem:[%s1 + $0x148] sm:$0xff]
      %v953 = vld [vmem:[%s1 + $0x150] sm:$0xff]
      %v954 = vld [vmem:[%s1 + $0x158] sm:$0xff]
      %v955 = vld [vmem:[%s1 + $0x160] sm:$0xff]
      %v956 = vld [vmem:[%s1 + $0x168] sm:$0xff]
      %v957 = vld [vmem:[%s1 + $0x170] sm:$0xff]
      %v958 = vld [vmem:[%s1 + $0x178] sm:$0xff]
      %v959 = vld [vmem:[%s1 + $0x180] sm:$0xff]
      %v960 = vld [vmem:[%s1 + $0x188] sm:$0xff]
      %v961 = vld [vmem:[%s1 + $0x190] sm:$0xff]
      %v962 = vld [vmem:[%s1 + $0x198] sm:$0xff]
      %v963 = vld [vmem:[%s1 + $0x1a0] sm:$0xff]
      %v964 = vld [vmem:[%s1 + $0x1a8] sm:$0xff]
      %v965 = vld [vmem:[%s1 + $0x1b0] sm:$0xff]
      %v966 = vld [vmem:[%s1 + $0x1b8] sm:$0xff]
      %v967 = vld [vmem:[%s1 + $0x1c0] sm:$0xff]
      %v968 = vld [vmem:[%s2] sm:$0xff]
      %v969 = vld [vmem:[%s2 + $0x8] sm:$0xff]
      %v970 = vld [vmem:[%s2 + $0x10] sm:$0xff]
      %v971 = vld [vmem:[%s2 + $0x18] sm:$0xff]
      %v972 = vld [vmem:[%s2 + $0x20] sm:$0xff]
      %v973 = vld [vmem:[%s2 + $0x28] sm:$0xff]
      %v974 = vld [vmem:[%s2 + $0x30] sm:$0xff]
      %v975 = vld [vmem:[%s2 + $0x38] sm:$0xff]
      %v976 = vld [vmem:[%s2 + $0x40] sm:$0xff]
      %v977 = vld [vmem:[%s2 + $0x48] sm:$0xff]
      %v978 = vld [vmem:[%s2 + $0x50] sm:$0xff]
      %v979 = vld [vmem:[%s2 + $0x58] sm:$0xff]
      %v980 = vld [vmem:[%s2 + $0x60] sm:$0xff]
      %v981 = vld [vmem:[%s2 + $0x68] sm:$0xff]
      %v982 = vld [vmem:[%s2 + $0x70] sm:$0xff]
      %v983 = vld [vmem:[%s2 + $0x78] sm:$0xff]
      %v984 = vld [vmem:[%s2 + $0x80] sm:$0xff]
      %v985 = vld [vmem:[%s2 + $0x88] sm:$0xff]
      %v986 = vld [vmem:[%s2 + $0x90] sm:$0xff]
      %v987 = vld [vmem:[%s2 + $0x98] sm:$0xff]
      %v988 = vld [vmem:[%s2 + $0xa0] sm:$0xff]
      %v989 = vld [vmem:[%s2 + $0xa8] sm:$0xff]
      %v990 = vld [vmem:[%s2 + $0xb0] sm:$0xff]
      %v991 = vld [vmem:[%s2 + $0xb8] sm:$0xff]
      %v992 = vld [vmem:[%s2 + $0xc0] sm:$0xff]
      %v993 = vld [vmem:[%s2 + $0xc8] sm:$0xff]
      %v994 = vld [vmem:[%s2 + $0xd0] sm:$0xff]
      %v995 = vld [vmem:[%s2 + $0xd8] sm:$0xff]
      %v996 = vld [vmem:[%s2 + $0xe0] sm:$0xff]
      %v997 = vld [vmem:[%s2 + $0xe8] sm:$0xff]
      %v998 = vld [vmem:[%s2 + $0xf0] sm:$0xff]
      %v999 = vld [vmem:[%s2 + $0xf8] sm:$0xff]
      %v1000 = vld [vmem:[%s2 + $0x100] sm:$0xff]
      %v1001 = vld [vmem:[%s2 + $0x108] sm:$0xff]
      %v1002 = vld [vmem:[%s2 + $0x110] sm:$0xff]
      %v1003 = vld [vmem:[%s2 + $0x118] sm:$0xff]
      %v1004 = vld [vmem:[%s2 + $0x120] sm:$0xff]
      %v1005 = vld [vmem:[%s2 + $0x128] sm:$0xff]
      %v1006 = vld [vmem:[%s2 + $0x130] sm:$0xff]
      %v1007 = vld [vmem:[%s2 + $0x138] sm:$0xff]
      %v1008 = vld [vmem:[%s2 + $0x140] sm:$0xff]
      %v1009 = vld [vmem:[%s2 + $0x148] sm:$0xff]
      %v1010 = vld [vmem:[%s2 + $0x150] sm:$0xff]
      %v1011 = vld [vmem:[%s2 + $0x158] sm:$0xff]
      %v1012 = vld [vmem:[%s2 + $0x160] sm:$0xff]
      %v1013 = vld [vmem:[%s2 + $0x168] sm:$0xff]
      %v1014 = vld [vmem:[%s2 + $0x170] sm:$0xff]
      %v1015 = vld [vmem:[%s2 + $0x178] sm:$0xff]
      %v1016 = vld [vmem:[%s2 + $0x180] sm:$0xff]
      %v1017 = vld [vmem:[%s2 + $0x188] sm:$0xff]
      %v1018 = vld [vmem:[%s2 + $0x190] sm:$0xff]
      %v1019 = vld [vmem:[%s2 + $0x198] sm:$0xff]
      %v1020 = vld [vmem:[%s2 + $0x1a0] sm:$0xff]
      %v1021 = vld [vmem:[%s2 + $0x1a8] sm:$0xff]
      %v1022 = vld [vmem:[%s2 + $0x1b0] sm:$0xff]
      %v1023 = vld [vmem:[%s2 + $0x1b8] sm:$0xff]
      %v1024 = vld [vmem:[%s2 + $0x1c0] sm:$0xff]
      %v1025 = vld [vmem:[%s2 + $0x1c8] sm:$0xff]
      %v1026 = vld [vmem:[%s2 + $0x1d0] sm:$0xff]
      %v1027 = vld [vmem:[%s2 + $0x1d8] sm:$0xff]
      %v1028 = vld [vmem:[%s2 + $0x1e0] sm:$0xff]
      %v1029 = vld [vmem:[%s2 + $0x1e8] sm:$0xff]
      %v1030 = vld [vmem:[%s2 + $0x1f0] sm:$0xff]
      %v1031 = vld [vmem:[%s2 + $0x1f8] sm:$0xff]
      %v1032 = vld [vmem:[%s2 + $0x200] sm:$0xff]
      %v1033 = vld [vmem:[%s2 + $0x208] sm:$0xff]
      %v1034 = vld [vmem:[%s2 + $0x210] sm:$0xff]
      %v1035 = vld [vmem:[%s2 + $0x218] sm:$0xff]
      %v1036 = vld [vmem:[%s2 + $0x220] sm:$0xff]
      %v1037 = vld [vmem:[%s2 + $0x228] sm:$0xff]
      %v1038 = vld [vmem:[%s2 + $0x230] sm:$0xff]
      %v1039 = vld [vmem:[%s2 + $0x238] sm:$0xff]
      %v1040 = vld [vmem:[%s2 + $0x240] sm:$0xff]
      %v1041 = vld [vmem:[%s2 + $0x248] sm:$0xff]
      %v1042 = vld [vmem:[%s2 + $0x250] sm:$0xff]
      %v1043 = vld [vmem:[%s2 + $0x258] sm:$0xff]
      %v1044 = vld [vmem:[%s3] sm:$0xff]
      %v1045 = vld [vmem:[%s3 + $0x8] sm:$0xff]
      %v1046 = vld [vmem:[%s3 + $0x10] sm:$0xff]
      %v1047 = vld [vmem:[%s3 + $0x18] sm:$0xff]
      %v1048 = vld [vmem:[%s3 + $0x20] sm:$0xff]
      %v1049 = vld [vmem:[%s3 + $0x28] sm:$0xff]
      %v1050 = vld [vmem:[%s3 + $0x30] sm:$0xff]
      %v1051 = vld [vmem:[%s3 + $0x38] sm:$0xff]
      %v1052 = vld [vmem:[%s3 + $0x40] sm:$0xff]
      %v1053 = vld [vmem:[%s3 + $0x48] sm:$0xff]
      %v1054 = vld [vmem:[%s3 + $0x50] sm:$0xff]
      %v1055 = vld [vmem:[%s3 + $0x58] sm:$0xff]
      %v1056 = vld [vmem:[%s3 + $0x60] sm:$0xff]
      %v1057 = vld [vmem:[%s3 + $0x68] sm:$0xff]
      %v1058 = vld [vmem:[%s3 + $0x70] sm:$0xff]
      %v1059 = vld [vmem:[%s3 + $0x78] sm:$0xff]
      %v1060 = vld [vmem:[%s3 + $0x80] sm:$0xff]
      %v1061 = vld [vmem:[%s3 + $0x88] sm:$0xff]
      %v1062 = vld [vmem:[%s3 + $0x90] sm:$0xff]
      %v1063 = vld [vmem:[%s3 + $0x98] sm:$0xff]
      %v1064 = vld [vmem:[%s3 + $0xa0] sm:$0xff]
      %v1065 = vld [vmem:[%s3 + $0xa8] sm:$0xff]
      %v1066 = vld [vmem:[%s3 + $0xb0] sm:$0xff]
      %v1067 = vld [vmem:[%s3 + $0xb8] sm:$0xff]
      %v1068 = vld [vmem:[%s3 + $0xc0] sm:$0xff]
      %v1069 = vld [vmem:[%s3 + $0xc8] sm:$0xff]
      %v1070 = vld [vmem:[%s3 + $0xd0] sm:$0xff]
      %v1071 = vld [vmem:[%s3 + $0xd8] sm:$0xff]
      %v1072 = vld [vmem:[%s3 + $0xe0] sm:$0xff]
      %v1073 = vld [vmem:[%s3 + $0xe8] sm:$0xff]
      %v1074 = vld [vmem:[%s3 + $0xf0] sm:$0xff]
      %v1075 = vld [vmem:[%s3 + $0xf8] sm:$0xff]
      %v1076 = vld [vmem:[%s3 + $0x100] sm:$0xff]
      %v1077 = vld [vmem:[%s3 + $0x108] sm:$0xff]
      %v1078 = vld [vmem:[%s3 + $0x110] sm:$0xff]
      %v1079 = vld [vmem:[%s3 + $0x118] sm:$0xff]
      %v1080 = vld [vmem:[%s3 + $0x120] sm:$0xff]
      %v1081 = vld [vmem:[%s3 + $0x128] sm:$0xff]
      %v1082 = vld [vmem:[%s3 + $0x130] sm:$0xff]
      %v1083 = vld [vmem:[%s3 + $0x138] sm:$0xff]
      %v1084 = vld [vmem:[%s3 + $0x140] sm:$0xff]
      %v1085 = vld [vmem:[%s3 + $0x148] sm:$0xff]
      %v1086 = vld [vmem:[%s3 + $0x150] sm:$0xff]
      %v1087 = vld [vmem:[%s3 + $0x158] sm:$0xff]
      %v1088 = vld [vmem:[%s3 + $0x160] sm:$0xff]
      %v1089 = vld [vmem:[%s3 + $0x168] sm:$0xff]
      %v1090 = vld [vmem:[%s3 + $0x170] sm:$0xff]
      %v1091 = vld [vmem:[%s3 + $0x178] sm:$0xff]
      %v1092 = vld [vmem:[%s3 + $0x180] sm:$0xff]
      %v1093 = vld [vmem:[%s3 + $0x188] sm:$0xff]
      %v1094 = vld [vmem:[%s3 + $0x190] sm:$0xff]
      %v1095 = vld [vmem:[%s3 + $0x198] sm:$0xff]
      %v1096 = vld [vmem:[%s3 + $0x1a0] sm:$0xff]
      %v1097 = vld [vmem:[%s3 + $0x1a8] sm:$0xff]
      %v1098 = vld [vmem:[%s3 + $0x1b0] sm:$0xff]
      %v1099 = vld [vmem:[%s3 + $0x1b8] sm:$0xff]
      %v1100 = vld [vmem:[%s3 + $0x1c0] sm:$0xff]
      %v1101 = vld [vmem:[%s4] sm:$0xff]
      %v1102 = vld [vmem:[%s4 + $0x8] sm:$0xff]
      %v1103 = vld [vmem:[%s4 + $0x10] sm:$0xff]
      %v1104 = vld [vmem:[%s4 + $0x18] sm:$0xff]
      %v1105 = vld [vmem:[%s4 + $0x20] sm:$0xff]
      %v1106 = vld [vmem:[%s4 + $0x28] sm:$0xff]
      %v1107 = vld [vmem:[%s4 + $0x30] sm:$0xff]
      %v1108 = vld [vmem:[%s4 + $0x38] sm:$0xff]
      %v1109 = vld [vmem:[%s4 + $0x40] sm:$0xff]
      %v1110 = vld [vmem:[%s4 + $0x48] sm:$0xff]
      %v1111 = vld [vmem:[%s4 + $0x50] sm:$0xff]
      %v1112 = vld [vmem:[%s4 + $0x58] sm:$0xff]
      %v1113 = vld [vmem:[%s4 + $0x60] sm:$0xff]
      %v1114 = vld [vmem:[%s4 + $0x68] sm:$0xff]
      %v1115 = vld [vmem:[%s4 + $0x70] sm:$0xff]
      %v1116 = vld [vmem:[%s4 + $0x78] sm:$0xff]
      %v1117 = vld [vmem:[%s4 + $0x80] sm:$0xff]
      %v1118 = vld [vmem:[%s4 + $0x88] sm:$0xff]
      %v1119 = vld [vmem:[%s4 + $0x90] sm:$0xff]
      %v1120 = vld [vmem:[%s4 + $0x98] sm:$0xff]
      %v1121 = vld [vmem:[%s4 + $0xa0] sm:$0xff]
      %v1122 = vld [vmem:[%s4 + $0xa8] sm:$0xff]
      %v1123 = vld [vmem:[%s4 + $0xb0] sm:$0xff]
      %v1124 = vld [vmem:[%s4 + $0xb8] sm:$0xff]
      %v1125 = vld [vmem:[%s4 + $0xc0] sm:$0xff]
      %v1126 = vld [vmem:[%s4 + $0xc8] sm:$0xff]
      %v1127 = vld [vmem:[%s4 + $0xd0] sm:$0xff]
      %v1128 = vld [vmem:[%s4 + $0xd8] sm:$0xff]
      %v1129 = vld [vmem:[%s4 + $0xe0] sm:$0xff]
      %v1130 = vld [vmem:[%s4 + $0xe8] sm:$0xff]
      %v1131 = vld [vmem:[%s4 + $0xf0] sm:$0xff]
      %v1132 = vld [vmem:[%s4 + $0xf8] sm:$0xff]
      %v1133 = vld [vmem:[%s4 + $0x100] sm:$0xff]
      %v1134 = vld [vmem:[%s4 + $0x108] sm:$0xff]
      %v1135 = vld [vmem:[%s4 + $0x110] sm:$0xff]
      %v1136 = vld [vmem:[%s4 + $0x118] sm:$0xff]
      %v1137 = vld [vmem:[%s4 + $0x120] sm:$0xff]
      %v1138 = vld [vmem:[%s4 + $0x128] sm:$0xff]
      %v1139 = vld [vmem:[%s4 + $0x130] sm:$0xff]
      %v1140 = vld [vmem:[%s4 + $0x138] sm:$0xff]
      %v1141 = vld [vmem:[%s4 + $0x140] sm:$0xff]
      %v1142 = vld [vmem:[%s4 + $0x148] sm:$0xff]
      %v1143 = vld [vmem:[%s4 + $0x150] sm:$0xff]
      %v1144 = vld [vmem:[%s4 + $0x158] sm:$0xff]
      %v1145 = vld [vmem:[%s4 + $0x160] sm:$0xff]
      %v1146 = vld [vmem:[%s4 + $0x168] sm:$0xff]
      %v1147 = vld [vmem:[%s4 + $0x170] sm:$0xff]
      %v1148 = vld [vmem:[%s4 + $0x178] sm:$0xff]
      %v1149 = vld [vmem:[%s4 + $0x180] sm:$0xff]
      %v1150 = vld [vmem:[%s4 + $0x188] sm:$0xff]
      %v1151 = vld [vmem:[%s4 + $0x190] sm:$0xff]
      %v1152 = vld [vmem:[%s4 + $0x198] sm:$0xff]
      %v1153 = vld [vmem:[%s4 + $0x1a0] sm:$0xff]
      %v1154 = vld [vmem:[%s4 + $0x1a8] sm:$0xff]
      %v1155 = vld [vmem:[%s4 + $0x1b0] sm:$0xff]
      %v1156 = vld [vmem:[%s4 + $0x1b8] sm:$0xff]
      %v1157 = vld [vmem:[%s4 + $0x1c0] sm:$0xff]
      %v1158 = vld [vmem:[%s4 + $0x1c8] sm:$0xff]
      %v1159 = vld [vmem:[%s4 + $0x1d0] sm:$0xff]
      %v1160 = vld [vmem:[%s4 + $0x1d8] sm:$0xff]
      %v1161 = vld [vmem:[%s4 + $0x1e0] sm:$0xff]
      %v1162 = vld [vmem:[%s4 + $0x1e8] sm:$0xff]
      %v1163 = vld [vmem:[%s4 + $0x1f0] sm:$0xff]
      %v1164 = vld [vmem:[%s4 + $0x1f8] sm:$0xff]
      %v1165 = vld [vmem:[%s4 + $0x200] sm:$0xff]
      %v1166 = vld [vmem:[%s4 + $0x208] sm:$0xff]
      %v1167 = vld [vmem:[%s4 + $0x210] sm:$0xff]
      %v1168 = vld [vmem:[%s4 + $0x218] sm:$0xff]
      %v1169 = vld [vmem:[%s4 + $0x220] sm:$0xff]
      %v1170 = vld [vmem:[%s4 + $0x228] sm:$0xff]
      %v1171 = vld [vmem:[%s4 + $0x230] sm:$0xff]
      %v1172 = vld [vmem:[%s4 + $0x238] sm:$0xff]
      %v1173 = vld [vmem:[%s4 + $0x240] sm:$0xff]
      %v1174 = vld [vmem:[%s4 + $0x248] sm:$0xff]
      %v1175 = vld [vmem:[%s4 + $0x250] sm:$0xff]
      %v1176 = vld [vmem:[%s4 + $0x258] sm:$0xff]
      %vm1177 = vcmask 7168
      %v1178 = vsel %vm1177, %v415, %v873
      %v1179 = vsel %vm1177, %v416, %v874
      %v1180 = vsel %vm1177, %v417, %v875
      %v1181 = vsel %vm1177, %v418, %v876
      %v1182 = vsel %vm1177, %v419, %v877
      %v1183 = vsel %vm1177, %v420, %v878
      %v1184 = vsel %vm1177, %v421, %v879
      %v1185 = vsel %vm1177, %v422, %v880
      %v1186 = vsel %vm1177, %v423, %v881
      %v1187 = vsel %vm1177, %v424, %v882
      %v1188 = vsel %vm1177, %v425, %v883
      %v1189 = vsel %vm1177, %v426, %v884
      %v1190 = vsel %vm1177, %v427, %v885
      %v1191 = vsel %vm1177, %v428, %v886
      %v1192 = vsel %vm1177, %v429, %v887
      %v1193 = vsel %vm1177, %v430, %v888
      %v1194 = vsel %vm1177, %v431, %v889
      %v1195 = vsel %vm1177, %v432, %v890
      %v1196 = vsel %vm1177, %v433, %v891
      %v1197 = vsel %vm1177, %v434, %v892
      %v1198 = vsel %vm1177, %v435, %v893
      %v1199 = vsel %vm1177, %v436, %v894
      %v1200 = vsel %vm1177, %v437, %v895
      %v1201 = vsel %vm1177, %v438, %v896
      %v1202 = vsel %vm1177, %v439, %v897
      %v1203 = vsel %vm1177, %v440, %v898
      %v1204 = vsel %vm1177, %v441, %v899
      %v1205 = vsel %vm1177, %v442, %v900
      %v1206 = vsel %vm1177, %v443, %v901
      %v1207 = vsel %vm1177, %v444, %v902
      %v1208 = vsel %vm1177, %v445, %v903
      %v1209 = vsel %vm1177, %v446, %v904
      %v1210 = vsel %vm1177, %v447, %v905
      %v1211 = vsel %vm1177, %v448, %v906
      %v1212 = vsel %vm1177, %v449, %v907
      %v1213 = vsel %vm1177, %v450, %v908
      %v1214 = vsel %vm1177, %v451, %v909
      %v1215 = vsel %vm1177, %v452, %v910
      %v1216 = vsel %vm1177, %v644, %v873
      %v1217 = vsel %vm1177, %v645, %v874
      %v1218 = vsel %vm1177, %v646, %v875
      %v1219 = vsel %vm1177, %v647, %v876
      %v1220 = vsel %vm1177, %v648, %v877
      %v1221 = vsel %vm1177, %v649, %v878
      %v1222 = vsel %vm1177, %v650, %v879
      %v1223 = vsel %vm1177, %v651, %v880
      %v1224 = vsel %vm1177, %v652, %v881
      %v1225 = vsel %vm1177, %v653, %v882
      %v1226 = vsel %vm1177, %v654, %v883
      %v1227 = vsel %vm1177, %v655, %v884
      %v1228 = vsel %vm1177, %v656, %v885
      %v1229 = vsel %vm1177, %v657, %v886
      %v1230 = vsel %vm1177, %v658, %v887
      %v1231 = vsel %vm1177, %v659, %v888
      %v1232 = vsel %vm1177, %v660, %v889
      %v1233 = vsel %vm1177, %v661, %v890
      %v1234 = vsel %vm1177, %v662, %v891
      %v1235 = vsel %vm1177, %v663, %v892
      %v1236 = vsel %vm1177, %v664, %v893
      %v1237 = vsel %vm1177, %v665, %v894
      %v1238 = vsel %vm1177, %v666, %v895
      %v1239 = vsel %vm1177, %v667, %v896
      %v1240 = vsel %vm1177, %v668, %v897
      %v1241 = vsel %vm1177, %v669, %v898
      %v1242 = vsel %vm1177, %v670, %v899
      %v1243 = vsel %vm1177, %v671, %v900
      %v1244 = vsel %vm1177, %v672, %v901
      %v1245 = vsel %vm1177, %v673, %v902
      %v1246 = vsel %vm1177, %v674, %v903
      %v1247 = vsel %vm1177, %v675, %v904
      %v1248 = vsel %vm1177, %v676, %v905
      %v1249 = vsel %vm1177, %v677, %v906
      %v1250 = vsel %vm1177, %v678, %v907
      %v1251 = vsel %vm1177, %v679, %v908
      %v1252 = vsel %vm1177, %v680, %v909
      %v1253 = vsel %vm1177, %v681, %v910
      %vm1254 = vcmask 392192
      %v1256 = vsel %vm1254, %v913, 0
      %v1259 = vsel %vm1254, %v916, 0
      %v1262 = vsel %vm1254, %v919, 0
      %v1265 = vsel %vm1254, %v922, 0
      %v1268 = vsel %vm1254, %v925, 0
      %v1271 = vsel %vm1254, %v928, 0
      %v1274 = vsel %vm1254, %v931, 0
      %v1277 = vsel %vm1254, %v934, 0
      %v1280 = vsel %vm1254, %v937, 0
      %v1283 = vsel %vm1254, %v940, 0
      %v1286 = vsel %vm1254, %v943, 0
      %v1289 = vsel %vm1254, %v946, 0
      %v1292 = vsel %vm1254, %v949, 0
      %v1295 = vsel %vm1254, %v952, 0
      %v1298 = vsel %vm1254, %v955, 0
      %v1301 = vsel %vm1254, %v958, 0
      %v1304 = vsel %vm1254, %v961, 0
      %v1307 = vsel %vm1254, %v964, 0
      %v1310 = vsel %vm1254, %v967, 0
      %1312 = vmatprep.subr.mxu0 0.0
      %1313 = vmatpush1.msra.mxu0 %v1178
      %1314 = vmatprep.subr.mxu0 0.0
      %1315 = vmatpush1.msra.mxu0 %v1179
      %1316 = vmatprep.subr.mxu0 0.0
      %1317 = vmatpush1.msra.mxu0 %v1180
      %1318 = vmatprep.subr.mxu0 0.0
      %1319 = vmatpush1.msra.mxu0 %v1181
      %1320 = vmatprep.subr.mxu0 0.0
      %1321 = vmatpush1.msra.mxu0 %v1182
      %1322 = vmatprep.subr.mxu0 0.0
      %1323 = vmatpush1.msra.mxu0 %v1183
      %1324 = vmatprep.subr.mxu0 0.0
      %1325 = vmatpush1.msra.mxu0 %v1184
      %1326 = vmatprep.subr.mxu0 0.0
      %1327 = vmatpush1.msra.mxu0 %v1185
      %1328 = vmatprep.subr.mxu0 0.0
      %1329 = vmatpush1.msra.mxu0 %v1186
      %1330 = vmatprep.subr.mxu0 0.0
      %1331 = vmatpush1.msra.mxu0 %v1187
      %1332 = vmatprep.subr.mxu0 0.0
      %1333 = vmatpush1.msra.mxu0 %v1188
      %1334 = vmatprep.subr.mxu0 0.0
      %1335 = vmatpush1.msra.mxu0 %v1189
      %1336 = vmatprep.subr.mxu0 0.0
      %1337 = vmatpush1.msra.mxu0 %v1190
      %1338 = vmatprep.subr.mxu0 0.0
      %1339 = vmatpush1.msra.mxu0 %v1191
      %1340 = vmatprep.subr.mxu0 0.0
      %1341 = vmatpush1.msra.mxu0 %v1192
      %1342 = vmatprep.subr.mxu0 0.0
      %1343 = vmatpush1.msra.mxu0 %v1193
      %1344 = vmatprep.subr.mxu0 0.0
      %1345 = vmatpush1.msra.mxu0 %v1194
      %1346 = vmatprep.subr.mxu0 0.0
      %1347 = vmatpush1.msra.mxu0 %v1195
      %1348 = vmatprep.subr.mxu0 0.0
      %1349 = vmatpush1.msra.mxu0 %v1196
      %1350 = vmatprep.subr.mxu0 0.0
      %1351 = vmatpush1.msra.mxu0 %v1197
      %1352 = vmatprep.subr.mxu0 0.0
      %1353 = vmatpush1.msra.mxu0 %v1198
      %1354 = vmatprep.subr.mxu0 0.0
      %1355 = vmatpush1.msra.mxu0 %v1199
      %1356 = vmatprep.subr.mxu0 0.0
      %1357 = vmatpush1.msra.mxu0 %v1200
      %1358 = vmatprep.subr.mxu0 0.0
      %1359 = vmatpush1.msra.mxu0 %v1201
      %1360 = vmatprep.subr.mxu0 0.0
      %1361 = vmatpush1.msra.mxu0 %v1202
      %1362 = vmatprep.subr.mxu0 0.0
      %1363 = vmatpush1.msra.mxu0 %v1203
      %1364 = vmatprep.subr.mxu0 0.0
      %1365 = vmatpush1.msra.mxu0 %v1204
      %1366 = vmatprep.subr.mxu0 0.0
      %1367 = vmatpush1.msra.mxu0 %v1205
      %1368 = vmatprep.subr.mxu0 0.0
      %1369 = vmatpush1.msra.mxu0 %v1206
      %1370 = vmatprep.subr.mxu0 0.0
      %1371 = vmatpush1.msra.mxu0 %v1207
      %1372 = vmatprep.subr.mxu0 0.0
      %1373 = vmatpush1.msra.mxu0 %v1208
      %1374 = vmatprep.subr.mxu0 0.0
      %1375 = vmatpush1.msra.mxu0 %v1209
      %1376 = vmatprep.mubr.f32.mxu0 %v912
      %1377 = vmatmul.mubr.f32.gmra.mrb[0].mxu0 %v911
      %v1378 = vpop.f32.mrb[0].mxu0
      %v1379 = vadd.f32 0.0, %v1378
      %v1380 = vpop.f32.mrb[0].mxu0
      %1381 = vmatprep.mubr.f32.mxu0 %v915
      %1382 = vmatmul.mubr.f32.gmra.mrb[0].mxu0 %v914
      %v1383 = vpop.f32.mrb[0].mxu0
      %v1384 = vadd.f32 0.0, %v1383
      %v1385 = vpop.f32.mrb[0].mxu0
      %1386 = vmatprep.mubr.f32.mxu0 %v918
      %1387 = vmatmul.mubr.f32.gmra.mrb[0].mxu0 %v917
      %v1388 = vpop.f32.mrb[0].mxu0
      %v1389 = vadd.f32 0.0, %v1388
      %v1390 = vpop.f32.mrb[0].mxu0
      %1391 = vmatprep.mubr.f32.mxu0 %v921
      %1392 = vmatmul.mubr.f32.gmra.mrb[0].mxu0 %v920
      %v1393 = vpop.f32.mrb[0].mxu0
      %v1394 = vadd.f32 0.0, %v1393
      %v1395 = vpop.f32.mrb[0].mxu0
      %1396 = vmatprep.mubr.f32.mxu0 %v924
      %1397 = vmatmul.mubr.f32.gmra.mrb[0].mxu0 %v923
      %v1398 = vpop.f32.mrb[0].mxu0
      %v1399 = vadd.f32 0.0, %v1398
      %v1400 = vpop.f32.mrb[0].mxu0
      %1401 = vmatprep.mubr.f32.mxu0 %v927
      %1402 = vmatmul.mubr.f32.gmra.mrb[0].mxu0 %v926
      %v1403 = vpop.f32.mrb[0].mxu0
      %v1404 = vadd.f32 0.0, %v1403
      %v1405 = vpop.f32.mrb[0].mxu0
      %1406 = vmatprep.mubr.f32.mxu0 %v930
      %1407 = vmatmul.mubr.f32.gmra.mrb[0].mxu0 %v929
      %v1408 = vpop.f32.mrb[0].mxu0
      %v1409 = vadd.f32 0.0, %v1408
      %v1410 = vpop.f32.mrb[0].mxu0
      %1411 = vmatprep.mubr.f32.mxu0 %v933
      %1412 = vmatmul.mubr.f32.gmra.mrb[0].mxu0 %v932
      %v1413 = vpop.f32.mrb[0].mxu0
      %v1414 = vadd.f32 0.0, %v1413
      %v1415 = vpop.f32.mrb[0].mxu0
      %1416 = vmatprep.mubr.f32.mxu0 %v936
      %1417 = vmatmul.mubr.f32.gmra.mrb[0].mxu0 %v935
      %v1418 = vpop.f32.mrb[0].mxu0
      %v1419 = vadd.f32 0.0, %v1418
      %v1420 = vpop.f32.mrb[0].mxu0
      %1421 = vmatprep.mubr.f32.mxu0 %v939
      %1422 = vmatmul.mubr.f32.gmra.mrb[0].mxu0 %v938
      %v1423 = vpop.f32.mrb[0].mxu0
      %v1424 = vadd.f32 0.0, %v1423
      %v1425 = vpop.f32.mrb[0].mxu0
      %1426 = vmatprep.mubr.f32.mxu0 %v942
      %1427 = vmatmul.mubr.f32.gmra.mrb[0].mxu0 %v941
      %v1428 = vpop.f32.mrb[0].mxu0
      %v1429 = vadd.f32 0.0, %v1428
      %v1430 = vpop.f32.mrb[0].mxu0
      %1431 = vmatprep.mubr.f32.mxu0 %v945
      %1432 = vmatmul.mubr.f32.gmra.mrb[0].mxu0 %v944
      %v1433 = vpop.f32.mrb[0].mxu0
      %v1434 = vadd.f32 0.0, %v1433
      %v1435 = vpop.f32.mrb[0].mxu0
      %1436 = vmatprep.mubr.f32.mxu0 %v948
      %1437 = vmatmul.mubr.f32.gmra.mrb[0].mxu0 %v947
      %v1438 = vpop.f32.mrb[0].mxu0
      %v1439 = vadd.f32 0.0, %v1438
      %v1440 = vpop.f32.mrb[0].mxu0
      %1441 = vmatprep.mubr.f32.mxu0 %v951
      %1442 = vmatmul.mubr.f32.gmra.mrb[0].mxu0 %v950
      %v1443 = vpop.f32.mrb[0].mxu0
      %v1444 = vadd.f32 0.0, %v1443
      %v1445 = vpop.f32.mrb[0].mxu0
      %1446 = vmatprep.mubr.f32.mxu0 %v954
      %1447 = vmatmul.mubr.f32.gmra.mrb[0].mxu0 %v953
      %v1448 = vpop.f32.mrb[0].mxu0
      %v1449 = vadd.f32 0.0, %v1448
      %v1450 = vpop.f32.mrb[0].mxu0
      %1451 = vmatprep.mubr.f32.mxu0 %v957
      %1452 = vmatmul.mubr.f32.gmra.mrb[0].mxu0 %v956
      %v1453 = vpop.f32.mrb[0].mxu0
      %v1454 = vadd.f32 0.0, %v1453
      %v1455 = vpop.f32.mrb[0].mxu0
      %1456 = vmatprep.mubr.f32.mxu0 %v960
      %1457 = vmatmul.mubr.f32.gmra.mrb[0].mxu0 %v959
      %v1458 = vpop.f32.mrb[0].mxu0
      %v1459 = vadd.f32 0.0, %v1458
      %v1460 = vpop.f32.mrb[0].mxu0
      %1461 = vmatprep.mubr.f32.mxu0 %v963
      %1462 = vmatmul.mubr.f32.gmra.mrb[0].mxu0 %v962
      %v1463 = vpop.f32.mrb[0].mxu0
      %v1464 = vadd.f32 0.0, %v1463
      %v1465 = vpop.f32.mrb[0].mxu0
      %1466 = vmatprep.mubr.f32.mxu0 %v966
      %1467 = vmatmul.mubr.f32.gmra.mrb[0].mxu0 %v965
      %v1468 = vpop.f32.mrb[0].mxu0
      %v1469 = vadd.f32 0.0, %v1468
      %v1470 = vpop.f32.mrb[0].mxu0
      %1471 = vdwg.mxu0
      %1472 = vmatprep.subr.mxu0 0.0
      %1473 = vmatpush1.msra.mxu0 %v1210
      %1474 = vmatprep.subr.mxu0 0.0
      %1475 = vmatpush1.msra.mxu0 %v1211
      %1476 = vmatprep.subr.mxu0 0.0
      %1477 = vmatpush1.msra.mxu0 %v1212
      %1478 = vmatprep.subr.mxu0 0.0
      %1479 = vmatpush1.msra.mxu0 %v1213
      %1480 = vmatprep.subr.mxu0 0.0
      %1481 = vmatpush1.msra.mxu0 %v1214
      %1482 = vmatprep.subr.mxu0 0.0
      %1483 = vmatpush1.msra.mxu0 %v1215
      %1484 = vmatprep.subr.mxu0 0.0
      %1485 = vmatpush1.msra.mxu0 0.0
      %1486 = vmatprep.subr.mxu0 0.0
      %1487 = vmatpush1.msra.mxu0 0.0
      %1488 = vmatprep.subr.mxu0 0.0
      %1489 = vmatpush1.msra.mxu0 0.0
      %1490 = vmatprep.subr.mxu0 0.0
      %1491 = vmatpush1.msra.mxu0 0.0
      %1492 = vmatprep.subr.mxu0 0.0
      %1493 = vmatpush1.msra.mxu0 0.0
      %1494 = vmatprep.subr.mxu0 0.0
      %1495 = vmatpush1.msra.mxu0 0.0
      %1496 = vmatprep.subr.mxu0 0.0
      %1497 = vmatpush1.msra.mxu0 0.0
      %1498 = vmatprep.subr.mxu0 0.0
      %1499 = vmatpush1.msra.mxu0 0.0
      %1500 = vmatprep.subr.mxu0 0.0
      %1501 = vmatpush1.msra.mxu0 0.0
      %1502 = vmatprep.subr.mxu0 0.0
      %1503 = vmatpush1.msra.mxu0 0.0
      %1504 = vmatprep.subr.mxu0 0.0
      %1505 = vmatpush1.msra.mxu0 0.0
      %1506 = vmatprep.subr.mxu0 0.0
      %1507 = vmatpush1.msra.mxu0 0.0
      %1508 = vmatprep.subr.mxu0 0.0
      %1509 = vmatpush1.msra.mxu0 0.0
      %1510 = vmatprep.subr.mxu0 0.0
      %1511 = vmatpush1.msra.mxu0 0.0
      %1512 = vmatprep.subr.mxu0 0.0
      %1513 = vmatpush1.msra.mxu0 0.0
      %1514 = vmatprep.subr.mxu0 0.0
      %1515 = vmatpush1.msra.mxu0 0.0
      %1516 = vmatprep.subr.mxu0 0.0
      %1517 = vmatpush1.msra.mxu0 0.0
      %1518 = vmatprep.subr.mxu0 0.0
      %1519 = vmatpush1.msra.mxu0 0.0
      %1520 = vmatprep.subr.mxu0 0.0
      %1521 = vmatpush1.msra.mxu0 0.0
      %1522 = vmatprep.subr.mxu0 0.0
      %1523 = vmatpush1.msra.mxu0 0.0
      %1524 = vmatprep.subr.mxu0 0.0
      %1525 = vmatpush1.msra.mxu0 0.0
      %1526 = vmatprep.subr.mxu0 0.0
      %1527 = vmatpush1.msra.mxu0 0.0
      %1528 = vmatprep.subr.mxu0 0.0
      %1529 = vmatpush1.msra.mxu0 0.0
      %1530 = vmatprep.subr.mxu0 0.0
      %1531 = vmatpush1.msra.mxu0 0.0
      %1532 = vmatprep.subr.mxu0 0.0
      %1533 = vmatpush1.msra.mxu0 0.0
      %1534 = vmatprep.subr.mxu0 0.0
      %1535 = vmatpush1.msra.mxu0 0.0
      %1536 = vmatprep.mubr.f32.mxu0 0.0
      %1537 = vmatmul.mubr.f32.gmra.mrb[0].mxu0 %v1256
      %v1538 = vpop.f32.mrb[0].mxu0
      %v1539 = vadd.f32 %v1379, %v1538
      %v1540 = vpop.f32.mrb[0].mxu0
      %1541 = vmatprep.mubr.f32.mxu0 0.0
      %1542 = vmatmul.mubr.f32.gmra.mrb[0].mxu0 %v1259
      %v1543 = vpop.f32.mrb[0].mxu0
      %v1544 = vadd.f32 %v1384, %v1543
      %v1545 = vpop.f32.mrb[0].mxu0
      %1546 = vmatprep.mubr.f32.mxu0 0.0
      %1547 = vmatmul.mubr.f32.gmra.mrb[0].mxu0 %v1262
      %v1548 = vpop.f32.mrb[0].mxu0
      %v1549 = vadd.f32 %v1389, %v1548
      %v1550 = vpop.f32.mrb[0].mxu0
      %1551 = vmatprep.mubr.f32.mxu0 0.0
      %1552 = vmatmul.mubr.f32.gmra.mrb[0].mxu0 %v1265
      %v1553 = vpop.f32.mrb[0].mxu0
      %v1554 = vadd.f32 %v1394, %v1553
      %v1555 = vpop.f32.mrb[0].mxu0
      %1556 = vmatprep.mubr.f32.mxu0 0.0
      %1557 = vmatmul.mubr.f32.gmra.mrb[0].mxu0 %v1268
      %v1558 = vpop.f32.mrb[0].mxu0
      %v1559 = vadd.f32 %v1399, %v1558
      %v1560 = vpop.f32.mrb[0].mxu0
      %1561 = vmatprep.mubr.f32.mxu0 0.0
      %1562 = vmatmul.mubr.f32.gmra.mrb[0].mxu0 %v1271
      %v1563 = vpop.f32.mrb[0].mxu0
      %v1564 = vadd.f32 %v1404, %v1563
      %v1565 = vpop.f32.mrb[0].mxu0
      %1566 = vmatprep.mubr.f32.mxu0 0.0
      %1567 = vmatmul.mubr.f32.gmra.mrb[0].mxu0 %v1274
      %v1568 = vpop.f32.mrb[0].mxu0
      %v1569 = vadd.f32 %v1409, %v1568
      %v1570 = vpop.f32.mrb[0].mxu0
      %1571 = vmatprep.mubr.f32.mxu0 0.0
      %1572 = vmatmul.mubr.f32.gmra.mrb[0].mxu0 %v1277
      %v1573 = vpop.f32.mrb[0].mxu0
      %v1574 = vadd.f32 %v1414, %v1573
      %v1575 = vpop.f32.mrb[0].mxu0
      %1576 = vmatprep.mubr.f32.mxu0 0.0
      %1577 = vmatmul.mubr.f32.gmra.mrb[0].mxu0 %v1280
      %v1578 = vpop.f32.mrb[0].mxu0
      %v1579 = vadd.f32 %v1419, %v1578
      %v1580 = vpop.f32.mrb[0].mxu0
      %1581 = vmatprep.mubr.f32.mxu0 0.0
      %1582 = vmatmul.mubr.f32.gmra.mrb[0].mxu0 %v1283
      %v1583 = vpop.f32.mrb[0].mxu0
      %v1584 = vadd.f32 %v1424, %v1583
      %v1585 = vpop.f32.mrb[0].mxu0
      %1586 = vmatprep.mubr.f32.mxu0 0.0
      %1587 = vmatmul.mubr.f32.gmra.mrb[0].mxu0 %v1286
      %v1588 = vpop.f32.mrb[0].mxu0
      %v1589 = vadd.f32 %v1429, %v1588
      %v1590 = vpop.f32.mrb[0].mxu0
      %1591 = vmatprep.mubr.f32.mxu0 0.0
      %1592 = vmatmul.mubr.f32.gmra.mrb[0].mxu0 %v1289
      %v1593 = vpop.f32.mrb[0].mxu0
      %v1594 = vadd.f32 %v1434, %v1593
      %v1595 = vpop.f32.mrb[0].mxu0
      %1596 = vmatprep.mubr.f32.mxu0 0.0
      %1597 = vmatmul.mubr.f32.gmra.mrb[0].mxu0 %v1292
      %v1598 = vpop.f32.mrb[0].mxu0
      %v1599 = vadd.f32 %v1439, %v1598
      %v1600 = vpop.f32.mrb[0].mxu0
      %1601 = vmatprep.mubr.f32.mxu0 0.0
      %1602 = vmatmul.mubr.f32.gmra.mrb[0].mxu0 %v1295
      %v1603 = vpop.f32.mrb[0].mxu0
      %v1604 = vadd.f32 %v1444, %v1603
      %v1605 = vpop.f32.mrb[0].mxu0
      %1606 = vmatprep.mubr.f32.mxu0 0.0
      %1607 = vmatmul.mubr.f32.gmra.mrb[0].mxu0 %v1298
      %v1608 = vpop.f32.mrb[0].mxu0
      %v1609 = vadd.f32 %v1449, %v1608
      %v1610 = vpop.f32.mrb[0].mxu0
      %1611 = vmatprep.mubr.f32.mxu0 0.0
      %1612 = vmatmul.mubr.f32.gmra.mrb[0].mxu0 %v1301
      %v1613 = vpop.f32.mrb[0].mxu0
      %v1614 = vadd.f32 %v1454, %v1613
      %v1615 = vpop.f32.mrb[0].mxu0
      %1616 = vmatprep.mubr.f32.mxu0 0.0
      %1617 = vmatmul.mubr.f32.gmra.mrb[0].mxu0 %v1304
      %v1618 = vpop.f32.mrb[0].mxu0
      %v1619 = vadd.f32 %v1459, %v1618
      %v1620 = vpop.f32.mrb[0].mxu0
      %1621 = vmatprep.mubr.f32.mxu0 0.0
      %1622 = vmatmul.mubr.f32.gmra.mrb[0].mxu0 %v1307
      %v1623 = vpop.f32.mrb[0].mxu0
      %v1624 = vadd.f32 %v1464, %v1623
      %v1625 = vpop.f32.mrb[0].mxu0
      %1626 = vmatprep.mubr.f32.mxu0 0.0
      %1627 = vmatmul.mubr.f32.gmra.mrb[0].mxu0 %v1310
      %v1628 = vpop.f32.mrb[0].mxu0
      %v1629 = vadd.f32 %v1469, %v1628
      %v1630 = vpop.f32.mrb[0].mxu0
      %1631 = vdwg.mxu0
      %v1632 = vmax.f32 %v1539, 0.0
      %v1633 = vmax.f32 %v1544, 0.0
      %v1634 = vmax.f32 %v1549, 0.0
      %v1635 = vmax.f32 %v1554, 0.0
      %v1636 = vmax.f32 %v1559, 0.0
      %v1637 = vmax.f32 %v1564, 0.0
      %v1638 = vmax.f32 %v1569, 0.0
      %v1639 = vmax.f32 %v1574, 0.0
      %v1640 = vmax.f32 %v1579, 0.0
      %v1641 = vmax.f32 %v1584, 0.0
      %v1642 = vmax.f32 %v1589, 0.0
      %v1643 = vmax.f32 %v1594, 0.0
      %v1644 = vmax.f32 %v1599, 0.0
      %v1645 = vmax.f32 %v1604, 0.0
      %v1646 = vmax.f32 %v1609, 0.0
      %v1647 = vmax.f32 %v1614, 0.0
      %v1648 = vmax.f32 %v1619, 0.0
      %v1649 = vmax.f32 %v1624, 0.0
      %v1650 = vmax.f32 %v1629, 0.0
      %vm1651 = vcmask 195584
      %v1653 = vsel %vm1651, %v969, 0
      %v1656 = vsel %vm1651, %v971, 0
      %v1659 = vsel %vm1651, %v973, 0
      %v1662 = vsel %vm1651, %v975, 0
      %v1665 = vsel %vm1651, %v977, 0
      %v1668 = vsel %vm1651, %v979, 0
      %v1671 = vsel %vm1651, %v981, 0
      %v1674 = vsel %vm1651, %v983, 0
      %v1677 = vsel %vm1651, %v985, 0
      %v1680 = vsel %vm1651, %v987, 0
      %v1683 = vsel %vm1651, %v989, 0
      %v1686 = vsel %vm1651, %v991, 0
      %v1689 = vsel %vm1651, %v993, 0
      %v1692 = vsel %vm1651, %v995, 0
      %v1695 = vsel %vm1651, %v997, 0
      %v1698 = vsel %vm1651, %v999, 0
      %v1701 = vsel %vm1651, %v1001, 0
      %v1704 = vsel %vm1651, %v1003, 0
      %v1707 = vsel %vm1651, %v1005, 0
      %v1710 = vsel %vm1651, %v1007, 0
      %v1713 = vsel %vm1651, %v1009, 0
      %v1716 = vsel %vm1651, %v1011, 0
      %v1719 = vsel %vm1651, %v1013, 0
      %v1722 = vsel %vm1651, %v1015, 0
      %v1725 = vsel %vm1651, %v1017, 0
      %v1728 = vsel %vm1651, %v1019, 0
      %v1731 = vsel %vm1651, %v1021, 0
      %v1734 = vsel %vm1651, %v1023, 0
      %v1737 = vsel %vm1651, %v1025, 0
      %v1740 = vsel %vm1651, %v1027, 0
      %v1743 = vsel %vm1651, %v1029, 0
      %v1746 = vsel %vm1651, %v1031, 0
      %v1749 = vsel %vm1651, %v1033, 0
      %v1752 = vsel %vm1651, %v1035, 0
      %v1755 = vsel %vm1651, %v1037, 0
      %v1758 = vsel %vm1651, %v1039, 0
      %v1761 = vsel %vm1651, %v1041, 0
      %v1764 = vsel %vm1651, %v1043, 0
      %1766 = vmatprep.subr.mxu0 0.0
      %1767 = vmatpush1.msra.mxu0 %v1632
      %1768 = vmatprep.subr.mxu0 0.0
      %1769 = vmatpush1.msra.mxu0 %v1633
      %1770 = vmatprep.subr.mxu0 0.0
      %1771 = vmatpush1.msra.mxu0 %v1634
      %1772 = vmatprep.subr.mxu0 0.0
      %1773 = vmatpush1.msra.mxu0 %v1635
      %1774 = vmatprep.subr.mxu0 0.0
      %1775 = vmatpush1.msra.mxu0 %v1636
      %1776 = vmatprep.subr.mxu0 0.0
      %1777 = vmatpush1.msra.mxu0 %v1637
      %1778 = vmatprep.subr.mxu0 0.0
      %1779 = vmatpush1.msra.mxu0 %v1638
      %1780 = vmatprep.subr.mxu0 0.0
      %1781 = vmatpush1.msra.mxu0 %v1639
      %1782 = vmatprep.subr.mxu0 0.0
      %1783 = vmatpush1.msra.mxu0 %v1640
      %1784 = vmatprep.subr.mxu0 0.0
      %1785 = vmatpush1.msra.mxu0 %v1641
      %1786 = vmatprep.subr.mxu0 0.0
      %1787 = vmatpush1.msra.mxu0 %v1642
      %1788 = vmatprep.subr.mxu0 0.0
      %1789 = vmatpush1.msra.mxu0 %v1643
      %1790 = vmatprep.subr.mxu0 0.0
      %1791 = vmatpush1.msra.mxu0 %v1644
      %1792 = vmatprep.subr.mxu0 0.0
      %1793 = vmatpush1.msra.mxu0 %v1645
      %1794 = vmatprep.subr.mxu0 0.0
      %1795 = vmatpush1.msra.mxu0 %v1646
      %1796 = vmatprep.subr.mxu0 0.0
      %1797 = vmatpush1.msra.mxu0 %v1647
      %1798 = vmatprep.subr.mxu0 0.0
      %1799 = vmatpush1.msra.mxu0 %v1648
      %1800 = vmatprep.subr.mxu0 0.0
      %1801 = vmatpush1.msra.mxu0 %v1649
      %1802 = vmatprep.subr.mxu0 0.0
      %1803 = vmatpush1.msra.mxu0 %v1650
      %1804 = vmatprep.subr.mxu0 0.0
      %1805 = vmatpush1.msra.mxu0 0.0
      %1806 = vmatprep.subr.mxu0 0.0
      %1807 = vmatpush1.msra.mxu0 0.0
      %1808 = vmatprep.subr.mxu0 0.0
      %1809 = vmatpush1.msra.mxu0 0.0
      %1810 = vmatprep.subr.mxu0 0.0
      %1811 = vmatpush1.msra.mxu0 0.0
      %1812 = vmatprep.subr.mxu0 0.0
      %1813 = vmatpush1.msra.mxu0 0.0
      %1814 = vmatprep.subr.mxu0 0.0
      %1815 = vmatpush1.msra.mxu0 0.0
      %1816 = vmatprep.subr.mxu0 0.0
      %1817 = vmatpush1.msra.mxu0 0.0
      %1818 = vmatprep.subr.mxu0 0.0
      %1819 = vmatpush1.msra.mxu0 0.0
      %1820 = vmatprep.subr.mxu0 0.0
      %1821 = vmatpush1.msra.mxu0 0.0
      %1822 = vmatprep.subr.mxu0 0.0
      %1823 = vmatpush1.msra.mxu0 0.0
      %1824 = vmatprep.subr.mxu0 0.0
      %1825 = vmatpush1.msra.mxu0 0.0
      %1826 = vmatprep.subr.mxu0 0.0
      %1827 = vmatpush1.msra.mxu0 0.0
      %1828 = vmatprep.subr.mxu0 0.0
      %1829 = vmatpush1.msra.mxu0 0.0
      %1830 = vmatprep.mubr.f32.mxu0 %v1653
      %1831 = vmatmul.mubr.f32.gmra.mrb[0].mxu0 %v968
      %v1832 = vpop.f32.mrb[0].mxu0
      %v1833 = vadd.f32 0.0, %v1832
      %v1834 = vpop.f32.mrb[0].mxu0
      %1835 = vmatprep.mubr.f32.mxu0 %v1656
      %1836 = vmatmul.mubr.f32.gmra.mrb[0].mxu0 %v970
      %v1837 = vpop.f32.mrb[0].mxu0
      %v1838 = vadd.f32 0.0, %v1837
      %v1839 = vpop.f32.mrb[0].mxu0
      %1840 = vmatprep.mubr.f32.mxu0 %v1659
      %1841 = vmatmul.mubr.f32.gmra.mrb[0].mxu0 %v972
      %v1842 = vpop.f32.mrb[0].mxu0
      %v1843 = vadd.f32 0.0, %v1842
      %v1844 = vpop.f32.mrb[0].mxu0
      %1845 = vmatprep.mubr.f32.mxu0 %v1662
      %1846 = vmatmul.mubr.f32.gmra.mrb[0].mxu0 %v974
      %v1847 = vpop.f32.mrb[0].mxu0
      %v1848 = vadd.f32 0.0, %v1847
      %v1849 = vpop.f32.mrb[0].mxu0
      %1850 = vmatprep.mubr.f32.mxu0 %v1665
      %1851 = vmatmul.mubr.f32.gmra.mrb[0].mxu0 %v976
      %v1852 = vpop.f32.mrb[0].mxu0
      %v1853 = vadd.f32 0.0, %v1852
      %v1854 = vpop.f32.mrb[0].mxu0
      %1855 = vmatprep.mubr.f32.mxu0 %v1668
      %1856 = vmatmul.mubr.f32.gmra.mrb[0].mxu0 %v978
      %v1857 = vpop.f32.mrb[0].mxu0
      %v1858 = vadd.f32 0.0, %v1857
      %v1859 = vpop.f32.mrb[0].mxu0
      %1860 = vmatprep.mubr.f32.mxu0 %v1671
      %1861 = vmatmul.mubr.f32.gmra.mrb[0].mxu0 %v980
      %v1862 = vpop.f32.mrb[0].mxu0
      %v1863 = vadd.f32 0.0, %v1862
      %v1864 = vpop.f32.mrb[0].mxu0
      %1865 = vmatprep.mubr.f32.mxu0 %v1674
      %1866 = vmatmul.mubr.f32.gmra.mrb[0].mxu0 %v982
      %v1867 = vpop.f32.mrb[0].mxu0
      %v1868 = vadd.f32 0.0, %v1867
      %v1869 = vpop.f32.mrb[0].mxu0
      %1870 = vmatprep.mubr.f32.mxu0 %v1677
      %1871 = vmatmul.mubr.f32.gmra.mrb[0].mxu0 %v984
      %v1872 = vpop.f32.mrb[0].mxu0
      %v1873 = vadd.f32 0.0, %v1872
      %v1874 = vpop.f32.mrb[0].mxu0
      %1875 = vmatprep.mubr.f32.mxu0 %v1680
      %1876 = vmatmul.mubr.f32.gmra.mrb[0].mxu0 %v986
      %v1877 = vpop.f32.mrb[0].mxu0
      %v1878 = vadd.f32 0.0, %v1877
      %v1879 = vpop.f32.mrb[0].mxu0
      %1880 = vmatprep.mubr.f32.mxu0 %v1683
      %1881 = vmatmul.mubr.f32.gmra.mrb[0].mxu0 %v988
      %v1882 = vpop.f32.mrb[0].mxu0
      %v1883 = vadd.f32 0.0, %v1882
      %v1884 = vpop.f32.mrb[0].mxu0
      %1885 = vmatprep.mubr.f32.mxu0 %v1686
      %1886 = vmatmul.mubr.f32.gmra.mrb[0].mxu0 %v990
      %v1887 = vpop.f32.mrb[0].mxu0
      %v1888 = vadd.f32 0.0, %v1887
      %v1889 = vpop.f32.mrb[0].mxu0
      %1890 = vmatprep.mubr.f32.mxu0 %v1689
      %1891 = vmatmul.mubr.f32.gmra.mrb[0].mxu0 %v992
      %v1892 = vpop.f32.mrb[0].mxu0
      %v1893 = vadd.f32 0.0, %v1892
      %v1894 = vpop.f32.mrb[0].mxu0
      %1895 = vmatprep.mubr.f32.mxu0 %v1692
      %1896 = vmatmul.mubr.f32.gmra.mrb[0].mxu0 %v994
      %v1897 = vpop.f32.mrb[0].mxu0
      %v1898 = vadd.f32 0.0, %v1897
      %v1899 = vpop.f32.mrb[0].mxu0
      %1900 = vmatprep.mubr.f32.mxu0 %v1695
      %1901 = vmatmul.mubr.f32.gmra.mrb[0].mxu0 %v996
      %v1902 = vpop.f32.mrb[0].mxu0
      %v1903 = vadd.f32 0.0, %v1902
      %v1904 = vpop.f32.mrb[0].mxu0
      %1905 = vmatprep.mubr.f32.mxu0 %v1698
      %1906 = vmatmul.mubr.f32.gmra.mrb[0].mxu0 %v998
      %v1907 = vpop.f32.mrb[0].mxu0
      %v1908 = vadd.f32 0.0, %v1907
      %v1909 = vpop.f32.mrb[0].mxu0
      %1910 = vmatprep.mubr.f32.mxu0 %v1701
      %1911 = vmatmul.mubr.f32.gmra.mrb[0].mxu0 %v1000
      %v1912 = vpop.f32.mrb[0].mxu0
      %v1913 = vadd.f32 0.0, %v1912
      %v1914 = vpop.f32.mrb[0].mxu0
      %1915 = vmatprep.mubr.f32.mxu0 %v1704
      %1916 = vmatmul.mubr.f32.gmra.mrb[0].mxu0 %v1002
      %v1917 = vpop.f32.mrb[0].mxu0
      %v1918 = vadd.f32 0.0, %v1917
      %v1919 = vpop.f32.mrb[0].mxu0
      %1920 = vmatprep.mubr.f32.mxu0 %v1707
      %1921 = vmatmul.mubr.f32.gmra.mrb[0].mxu0 %v1004
      %v1922 = vpop.f32.mrb[0].mxu0
      %v1923 = vadd.f32 0.0, %v1922
      %v1924 = vpop.f32.mrb[0].mxu0
      %1925 = vmatprep.mubr.f32.mxu0 %v1710
      %1926 = vmatmul.mubr.f32.gmra.mrb[0].mxu0 %v1006
      %v1927 = vpop.f32.mrb[0].mxu0
      %v1928 = vadd.f32 0.0, %v1927
      %v1929 = vpop.f32.mrb[0].mxu0
      %1930 = vmatprep.mubr.f32.mxu0 %v1713
      %1931 = vmatmul.mubr.f32.gmra.mrb[0].mxu0 %v1008
      %v1932 = vpop.f32.mrb[0].mxu0
      %v1933 = vadd.f32 0.0, %v1932
      %v1934 = vpop.f32.mrb[0].mxu0
      %1935 = vmatprep.mubr.f32.mxu0 %v1716
      %1936 = vmatmul.mubr.f32.gmra.mrb[0].mxu0 %v1010
      %v1937 = vpop.f32.mrb[0].mxu0
      %v1938 = vadd.f32 0.0, %v1937
      %v1939 = vpop.f32.mrb[0].mxu0
      %1940 = vmatprep.mubr.f32.mxu0 %v1719
      %1941 = vmatmul.mubr.f32.gmra.mrb[0].mxu0 %v1012
      %v1942 = vpop.f32.mrb[0].mxu0
      %v1943 = vadd.f32 0.0, %v1942
      %v1944 = vpop.f32.mrb[0].mxu0
      %1945 = vmatprep.mubr.f32.mxu0 %v1722
      %1946 = vmatmul.mubr.f32.gmra.mrb[0].mxu0 %v1014
      %v1947 = vpop.f32.mrb[0].mxu0
      %v1948 = vadd.f32 0.0, %v1947
      %v1949 = vpop.f32.mrb[0].mxu0
      %1950 = vmatprep.mubr.f32.mxu0 %v1725
      %1951 = vmatmul.mubr.f32.gmra.mrb[0].mxu0 %v1016
      %v1952 = vpop.f32.mrb[0].mxu0
      %v1953 = vadd.f32 0.0, %v1952
      %v1954 = vpop.f32.mrb[0].mxu0
      %1955 = vmatprep.mubr.f32.mxu0 %v1728
      %1956 = vmatmul.mubr.f32.gmra.mrb[0].mxu0 %v1018
      %v1957 = vpop.f32.mrb[0].mxu0
      %v1958 = vadd.f32 0.0, %v1957
      %v1959 = vpop.f32.mrb[0].mxu0
      %1960 = vmatprep.mubr.f32.mxu0 %v1731
      %1961 = vmatmul.mubr.f32.gmra.mrb[0].mxu0 %v1020
      %v1962 = vpop.f32.mrb[0].mxu0
      %v1963 = vadd.f32 0.0, %v1962
      %v1964 = vpop.f32.mrb[0].mxu0
      %1965 = vmatprep.mubr.f32.mxu0 %v1734
      %1966 = vmatmul.mubr.f32.gmra.mrb[0].mxu0 %v1022
      %v1967 = vpop.f32.mrb[0].mxu0
      %v1968 = vadd.f32 0.0, %v1967
      %v1969 = vpop.f32.mrb[0].mxu0
      %1970 = vmatprep.mubr.f32.mxu0 %v1737
      %1971 = vmatmul.mubr.f32.gmra.mrb[0].mxu0 %v1024
      %v1972 = vpop.f32.mrb[0].mxu0
      %v1973 = vadd.f32 0.0, %v1972
      %v1974 = vpop.f32.mrb[0].mxu0
      %1975 = vmatprep.mubr.f32.mxu0 %v1740
      %1976 = vmatmul.mubr.f32.gmra.mrb[0].mxu0 %v1026
      %v1977 = vpop.f32.mrb[0].mxu0
      %v1978 = vadd.f32 0.0, %v1977
      %v1979 = vpop.f32.mrb[0].mxu0
      %1980 = vmatprep.mubr.f32.mxu0 %v1743
      %1981 = vmatmul.mubr.f32.gmra.mrb[0].mxu0 %v1028
      %v1982 = vpop.f32.mrb[0].mxu0
      %v1983 = vadd.f32 0.0, %v1982
      %v1984 = vpop.f32.mrb[0].mxu0
      %1985 = vmatprep.mubr.f32.mxu0 %v1746
      %1986 = vmatmul.mubr.f32.gmra.mrb[0].mxu0 %v1030
      %v1987 = vpop.f32.mrb[0].mxu0
      %v1988 = vadd.f32 0.0, %v1987
      %v1989 = vpop.f32.mrb[0].mxu0
      %1990 = vmatprep.mubr.f32.mxu0 %v1749
      %1991 = vmatmul.mubr.f32.gmra.mrb[0].mxu0 %v1032
      %v1992 = vpop.f32.mrb[0].mxu0
      %v1993 = vadd.f32 0.0, %v1992
      %v1994 = vpop.f32.mrb[0].mxu0
      %1995 = vmatprep.mubr.f32.mxu0 %v1752
      %1996 = vmatmul.mubr.f32.gmra.mrb[0].mxu0 %v1034
      %v1997 = vpop.f32.mrb[0].mxu0
      %v1998 = vadd.f32 0.0, %v1997
      %v1999 = vpop.f32.mrb[0].mxu0
      %2000 = vmatprep.mubr.f32.mxu0 %v1755
      %2001 = vmatmul.mubr.f32.gmra.mrb[0].mxu0 %v1036
      %v2002 = vpop.f32.mrb[0].mxu0
      %v2003 = vadd.f32 0.0, %v2002
      %v2004 = vpop.f32.mrb[0].mxu0
      %2005 = vmatprep.mubr.f32.mxu0 %v1758
      %2006 = vmatmul.mubr.f32.gmra.mrb[0].mxu0 %v1038
      %v2007 = vpop.f32.mrb[0].mxu0
      %v2008 = vadd.f32 0.0, %v2007
      %v2009 = vpop.f32.mrb[0].mxu0
      %2010 = vmatprep.mubr.f32.mxu0 %v1761
      %2011 = vmatmul.mubr.f32.gmra.mrb[0].mxu0 %v1040
      %v2012 = vpop.f32.mrb[0].mxu0
      %v2013 = vadd.f32 0.0, %v2012
      %v2014 = vpop.f32.mrb[0].mxu0
      %2015 = vmatprep.mubr.f32.mxu0 %v1764
      %2016 = vmatmul.mubr.f32.gmra.mrb[0].mxu0 %v1042
      %v2017 = vpop.f32.mrb[0].mxu0
      %v2018 = vadd.f32 0.0, %v2017
      %v2019 = vpop.f32.mrb[0].mxu0
      %2020 = vdwg.mxu0
      %v2021 = vxor.u32 %v1833, 2147483648
      %v2022 = vxor.u32 %v1838, 2147483648
      %v2023 = vxor.u32 %v1843, 2147483648
      %v2024 = vxor.u32 %v1848, 2147483648
      %v2025 = vxor.u32 %v1853, 2147483648
      %v2026 = vxor.u32 %v1858, 2147483648
      %v2027 = vxor.u32 %v1863, 2147483648
      %v2028 = vxor.u32 %v1868, 2147483648
      %v2029 = vxor.u32 %v1873, 2147483648
      %v2030 = vxor.u32 %v1878, 2147483648
      %v2031 = vxor.u32 %v1883, 2147483648
      %v2032 = vxor.u32 %v1888, 2147483648
      %v2033 = vxor.u32 %v1893, 2147483648
      %v2034 = vxor.u32 %v1898, 2147483648
      %v2035 = vxor.u32 %v1903, 2147483648
      %v2036 = vxor.u32 %v1908, 2147483648
      %v2037 = vxor.u32 %v1913, 2147483648
      %v2038 = vxor.u32 %v1918, 2147483648
      %v2039 = vxor.u32 %v1923, 2147483648
      %v2040 = vxor.u32 %v1928, 2147483648
      %v2041 = vxor.u32 %v1933, 2147483648
      %v2042 = vxor.u32 %v1938, 2147483648
      %v2043 = vxor.u32 %v1943, 2147483648
      %v2044 = vxor.u32 %v1948, 2147483648
      %v2045 = vxor.u32 %v1953, 2147483648
      %v2046 = vxor.u32 %v1958, 2147483648
      %v2047 = vxor.u32 %v1963, 2147483648
      %v2048 = vxor.u32 %v1968, 2147483648
      %v2049 = vxor.u32 %v1973, 2147483648
      %v2050 = vxor.u32 %v1978, 2147483648
      %v2051 = vxor.u32 %v1983, 2147483648
      %v2052 = vxor.u32 %v1988, 2147483648
      %v2053 = vxor.u32 %v1993, 2147483648
      %v2054 = vxor.u32 %v1998, 2147483648
      %v2055 = vxor.u32 %v2003, 2147483648
      %v2056 = vxor.u32 %v2008, 2147483648
      %v2057 = vxor.u32 %v2013, 2147483648
      %v2058 = vxor.u32 %v2018, 2147483648
      %v2059 = vmul.f32 %v2021, 1.442695
      %v2060 = vpow.pop %v2059
      %v2061 = vmul.f32 %v2022, 1.442695
      %v2062 = vpow.pop %v2061
      %v2063 = vmul.f32 %v2023, 1.442695
      %v2064 = vpow.pop %v2063
      %v2065 = vmul.f32 %v2024, 1.442695
      %v2066 = vpow.pop %v2065
      %v2067 = vmul.f32 %v2025, 1.442695
      %v2068 = vpow.pop %v2067
      %v2069 = vmul.f32 %v2026, 1.442695
      %v2070 = vpow.pop %v2069
      %v2071 = vmul.f32 %v2027, 1.442695
      %v2072 = vpow.pop %v2071
      %v2073 = vmul.f32 %v2028, 1.442695
      %v2074 = vpow.pop %v2073
      %v2075 = vmul.f32 %v2029, 1.442695
      %v2076 = vpow.pop %v2075
      %v2077 = vmul.f32 %v2030, 1.442695
      %v2078 = vpow.pop %v2077
      %v2079 = vmul.f32 %v2031, 1.442695
      %v2080 = vpow.pop %v2079
      %v2081 = vmul.f32 %v2032, 1.442695
      %v2082 = vpow.pop %v2081
      %v2083 = vmul.f32 %v2033, 1.442695
      %v2084 = vpow.pop %v2083
      %v2085 = vmul.f32 %v2034, 1.442695
      %v2086 = vpow.pop %v2085
      %v2087 = vmul.f32 %v2035, 1.442695
      %v2088 = vpow.pop %v2087
      %v2089 = vmul.f32 %v2036, 1.442695
      %v2090 = vpow.pop %v2089
      %v2091 = vmul.f32 %v2037, 1.442695
      %v2092 = vpow.pop %v2091
      %v2093 = vmul.f32 %v2038, 1.442695
      %v2094 = vpow.pop %v2093
      %v2095 = vmul.f32 %v2039, 1.442695
      %v2096 = vpow.pop %v2095
      %v2097 = vmul.f32 %v2040, 1.442695
      %v2098 = vpow.pop %v2097
      %v2099 = vmul.f32 %v2041, 1.442695
      %v2100 = vpow.pop %v2099
      %v2101 = vmul.f32 %v2042, 1.442695
      %v2102 = vpow.pop %v2101
      %v2103 = vmul.f32 %v2043, 1.442695
      %v2104 = vpow.pop %v2103
      %v2105 = vmul.f32 %v2044, 1.442695
      %v2106 = vpow.pop %v2105
      %v2107 = vmul.f32 %v2045, 1.442695
      %v2108 = vpow.pop %v2107
      %v2109 = vmul.f32 %v2046, 1.442695
      %v2110 = vpow.pop %v2109
      %v2111 = vmul.f32 %v2047, 1.442695
      %v2112 = vpow.pop %v2111
      %v2113 = vmul.f32 %v2048, 1.442695
      %v2114 = vpow.pop %v2113
      %v2115 = vmul.f32 %v2049, 1.442695
      %v2116 = vpow.pop %v2115
      %v2117 = vmul.f32 %v2050, 1.442695
      %v2118 = vpow.pop %v2117
      %v2119 = vmul.f32 %v2051, 1.442695
      %v2120 = vpow.pop %v2119
      %v2121 = vmul.f32 %v2052, 1.442695
      %v2122 = vpow.pop %v2121
      %v2123 = vmul.f32 %v2053, 1.442695
      %v2124 = vpow.pop %v2123
      %v2125 = vmul.f32 %v2054, 1.442695
      %v2126 = vpow.pop %v2125
      %v2127 = vmul.f32 %v2055, 1.442695
      %v2128 = vpow.pop %v2127
      %v2129 = vmul.f32 %v2056, 1.442695
      %v2130 = vpow.pop %v2129
      %v2131 = vmul.f32 %v2057, 1.442695
      %v2132 = vpow.pop %v2131
      %v2133 = vmul.f32 %v2058, 1.442695
      %v2134 = vpow.pop %v2133
      %v2135 = vadd.f32 %v2060, 1.0
      %v2136 = vadd.f32 %v2062, 1.0
      %v2137 = vadd.f32 %v2064, 1.0
      %v2138 = vadd.f32 %v2066, 1.0
      %v2139 = vadd.f32 %v2068, 1.0
      %v2140 = vadd.f32 %v2070, 1.0
      %v2141 = vadd.f32 %v2072, 1.0
      %v2142 = vadd.f32 %v2074, 1.0
      %v2143 = vadd.f32 %v2076, 1.0
      %v2144 = vadd.f32 %v2078, 1.0
      %v2145 = vadd.f32 %v2080, 1.0
      %v2146 = vadd.f32 %v2082, 1.0
      %v2147 = vadd.f32 %v2084, 1.0
      %v2148 = vadd.f32 %v2086, 1.0
      %v2149 = vadd.f32 %v2088, 1.0
      %v2150 = vadd.f32 %v2090, 1.0
      %v2151 = vadd.f32 %v2092, 1.0
      %v2152 = vadd.f32 %v2094, 1.0
      %v2153 = vadd.f32 %v2096, 1.0
      %v2154 = vadd.f32 %v2098, 1.0
      %v2155 = vadd.f32 %v2100, 1.0
      %v2156 = vadd.f32 %v2102, 1.0
      %v2157 = vadd.f32 %v2104, 1.0
      %v2158 = vadd.f32 %v2106, 1.0
      %v2159 = vadd.f32 %v2108, 1.0
      %v2160 = vadd.f32 %v2110, 1.0
      %v2161 = vadd.f32 %v2112, 1.0
      %v2162 = vadd.f32 %v2114, 1.0
      %v2163 = vadd.f32 %v2116, 1.0
      %v2164 = vadd.f32 %v2118, 1.0
      %v2165 = vadd.f32 %v2120, 1.0
      %v2166 = vadd.f32 %v2122, 1.0
      %v2167 = vadd.f32 %v2124, 1.0
      %v2168 = vadd.f32 %v2126, 1.0
      %v2169 = vadd.f32 %v2128, 1.0
      %v2170 = vadd.f32 %v2130, 1.0
      %v2171 = vadd.f32 %v2132, 1.0
      %v2172 = vadd.f32 %v2134, 1.0
      %v2173 = vrcp.pop %v2135
      %v2174 = vmul.f32 1.0, %v2173
      %v2175 = vrcp.pop %v2136
      %v2176 = vmul.f32 1.0, %v2175
      %v2177 = vrcp.pop %v2137
      %v2178 = vmul.f32 1.0, %v2177
      %v2179 = vrcp.pop %v2138
      %v2180 = vmul.f32 1.0, %v2179
      %v2181 = vrcp.pop %v2139
      %v2182 = vmul.f32 1.0, %v2181
      %v2183 = vrcp.pop %v2140
      %v2184 = vmul.f32 1.0, %v2183
      %v2185 = vrcp.pop %v2141
      %v2186 = vmul.f32 1.0, %v2185
      %v2187 = vrcp.pop %v2142
      %v2188 = vmul.f32 1.0, %v2187
      %v2189 = vrcp.pop %v2143
      %v2190 = vmul.f32 1.0, %v2189
      %v2191 = vrcp.pop %v2144
      %v2192 = vmul.f32 1.0, %v2191
      %v2193 = vrcp.pop %v2145
      %v2194 = vmul.f32 1.0, %v2193
      %v2195 = vrcp.pop %v2146
      %v2196 = vmul.f32 1.0, %v2195
      %v2197 = vrcp.pop %v2147
      %v2198 = vmul.f32 1.0, %v2197
      %v2199 = vrcp.pop %v2148
      %v2200 = vmul.f32 1.0, %v2199
      %v2201 = vrcp.pop %v2149
      %v2202 = vmul.f32 1.0, %v2201
      %v2203 = vrcp.pop %v2150
      %v2204 = vmul.f32 1.0, %v2203
      %v2205 = vrcp.pop %v2151
      %v2206 = vmul.f32 1.0, %v2205
      %v2207 = vrcp.pop %v2152
      %v2208 = vmul.f32 1.0, %v2207
      %v2209 = vrcp.pop %v2153
      %v2210 = vmul.f32 1.0, %v2209
      %v2211 = vrcp.pop %v2154
      %v2212 = vmul.f32 1.0, %v2211
      %v2213 = vrcp.pop %v2155
      %v2214 = vmul.f32 1.0, %v2213
      %v2215 = vrcp.pop %v2156
      %v2216 = vmul.f32 1.0, %v2215
      %v2217 = vrcp.pop %v2157
      %v2218 = vmul.f32 1.0, %v2217
      %v2219 = vrcp.pop %v2158
      %v2220 = vmul.f32 1.0, %v2219
      %v2221 = vrcp.pop %v2159
      %v2222 = vmul.f32 1.0, %v2221
      %v2223 = vrcp.pop %v2160
      %v2224 = vmul.f32 1.0, %v2223
      %v2225 = vrcp.pop %v2161
      %v2226 = vmul.f32 1.0, %v2225
      %v2227 = vrcp.pop %v2162
      %v2228 = vmul.f32 1.0, %v2227
      %v2229 = vrcp.pop %v2163
      %v2230 = vmul.f32 1.0, %v2229
      %v2231 = vrcp.pop %v2164
      %v2232 = vmul.f32 1.0, %v2231
      %v2233 = vrcp.pop %v2165
      %v2234 = vmul.f32 1.0, %v2233
      %v2235 = vrcp.pop %v2166
      %v2236 = vmul.f32 1.0, %v2235
      %v2237 = vrcp.pop %v2167
      %v2238 = vmul.f32 1.0, %v2237
      %v2239 = vrcp.pop %v2168
      %v2240 = vmul.f32 1.0, %v2239
      %v2241 = vrcp.pop %v2169
      %v2242 = vmul.f32 1.0, %v2241
      %v2243 = vrcp.pop %v2170
      %v2244 = vmul.f32 1.0, %v2243
      %v2245 = vrcp.pop %v2171
      %v2246 = vmul.f32 1.0, %v2245
      %v2247 = vrcp.pop %v2172
      %v2248 = vmul.f32 1.0, %v2247
      %v2250 = vsel %vm1254, %v1046, 0
      %v2253 = vsel %vm1254, %v1049, 0
      %v2256 = vsel %vm1254, %v1052, 0
      %v2259 = vsel %vm1254, %v1055, 0
      %v2262 = vsel %vm1254, %v1058, 0
      %v2265 = vsel %vm1254, %v1061, 0
      %v2268 = vsel %vm1254, %v1064, 0
      %v2271 = vsel %vm1254, %v1067, 0
      %v2274 = vsel %vm1254, %v1070, 0
      %v2277 = vsel %vm1254, %v1073, 0
      %v2280 = vsel %vm1254, %v1076, 0
      %v2283 = vsel %vm1254, %v1079, 0
      %v2286 = vsel %vm1254, %v1082, 0
      %v2289 = vsel %vm1254, %v1085, 0
      %v2292 = vsel %vm1254, %v1088, 0
      %v2295 = vsel %vm1254, %v1091, 0
      %v2298 = vsel %vm1254, %v1094, 0
      %v2301 = vsel %vm1254, %v1097, 0
      %v2304 = vsel %vm1254, %v1100, 0
      %2306 = vmatprep.subr.mxu0 0.0
      %2307 = vmatpush1.msra.mxu0 %v1216
      %2308 = vmatprep.subr.mxu0 0.0
      %2309 = vmatpush1.msra.mxu0 %v1217
      %2310 = vmatprep.subr.mxu0 0.0
      %2311 = vmatpush1.msra.mxu0 %v1218
      %2312 = vmatprep.subr.mxu0 0.0
      %2313 = vmatpush1.msra.mxu0 %v1219
      %2314 = vmatprep.subr.mxu0 0.0
      %2315 = vmatpush1.msra.mxu0 %v1220
      %2316 = vmatprep.subr.mxu0 0.0
      %2317 = vmatpush1.msra.mxu0 %v1221
      %2318 = vmatprep.subr.mxu0 0.0
      %2319 = vmatpush1.msra.mxu0 %v1222
      %2320 = vmatprep.subr.mxu0 0.0
      %2321 = vmatpush1.msra.mxu0 %v1223
      %2322 = vmatprep.subr.mxu0 0.0
      %2323 = vmatpush1.msra.mxu0 %v1224
      %2324 = vmatprep.subr.mxu0 0.0
      %2325 = vmatpush1.msra.mxu0 %v1225
      %2326 = vmatprep.subr.mxu0 0.0
      %2327 = vmatpush1.msra.mxu0 %v1226
      %2328 = vmatprep.subr.mxu0 0.0
      %2329 = vmatpush1.msra.mxu0 %v1227
      %2330 = vmatprep.subr.mxu0 0.0
      %2331 = vmatpush1.msra.mxu0 %v1228
      %2332 = vmatprep.subr.mxu0 0.0
      %2333 = vmatpush1.msra.mxu0 %v1229
      %2334 = vmatprep.subr.mxu0 0.0
      %2335 = vmatpush1.msra.mxu0 %v1230
      %2336 = vmatprep.subr.mxu0 0.0
      %2337 = vmatpush1.msra.mxu0 %v1231
      %2338 = vmatprep.subr.mxu0 0.0
      %2339 = vmatpush1.msra.mxu0 %v1232
      %2340 = vmatprep.subr.mxu0 0.0
      %2341 = vmatpush1.msra.mxu0 %v1233
      %2342 = vmatprep.subr.mxu0 0.0
      %2343 = vmatpush1.msra.mxu0 %v1234
      %2344 = vmatprep.subr.mxu0 0.0
      %2345 = vmatpush1.msra.mxu0 %v1235
      %2346 = vmatprep.subr.mxu0 0.0
      %2347 = vmatpush1.msra.mxu0 %v1236
      %2348 = vmatprep.subr.mxu0 0.0
      %2349 = vmatpush1.msra.mxu0 %v1237
      %2350 = vmatprep.subr.mxu0 0.0
      %2351 = vmatpush1.msra.mxu0 %v1238
      %2352 = vmatprep.subr.mxu0 0.0
      %2353 = vmatpush1.msra.mxu0 %v1239
      %2354 = vmatprep.subr.mxu0 0.0
      %2355 = vmatpush1.msra.mxu0 %v1240
      %2356 = vmatprep.subr.mxu0 0.0
      %2357 = vmatpush1.msra.mxu0 %v1241
      %2358 = vmatprep.subr.mxu0 0.0
      %2359 = vmatpush1.msra.mxu0 %v1242
      %2360 = vmatprep.subr.mxu0 0.0
      %2361 = vmatpush1.msra.mxu0 %v1243
      %2362 = vmatprep.subr.mxu0 0.0
      %2363 = vmatpush1.msra.mxu0 %v1244
      %2364 = vmatprep.subr.mxu0 0.0
      %2365 = vmatpush1.msra.mxu0 %v1245
      %2366 = vmatprep.subr.mxu0 0.0
      %2367 = vmatpush1.msra.mxu0 %v1246
      %2368 = vmatprep.subr.mxu0 0.0
      %2369 = vmatpush1.msra.mxu0 %v1247
      %2370 = vmatprep.mubr.f32.mxu0 %v1045
      %2371 = vmatmul.mubr.f32.gmra.mrb[0].mxu0 %v1044
      %v2372 = vpop.f32.mrb[0].mxu0
      %v2373 = vadd.f32 0.0, %v2372
      %v2374 = vpop.f32.mrb[0].mxu0
      %2375 = vmatprep.mubr.f32.mxu0 %v1048
      %2376 = vmatmul.mubr.f32.gmra.mrb[0].mxu0 %v1047
      %v2377 = vpop.f32.mrb[0].mxu0
      %v2378 = vadd.f32 0.0, %v2377
      %v2379 = vpop.f32.mrb[0].mxu0
      %2380 = vmatprep.mubr.f32.mxu0 %v1051
      %2381 = vmatmul.mubr.f32.gmra.mrb[0].mxu0 %v1050
      %v2382 = vpop.f32.mrb[0].mxu0
      %v2383 = vadd.f32 0.0, %v2382
      %v2384 = vpop.f32.mrb[0].mxu0
      %2385 = vmatprep.mubr.f32.mxu0 %v1054
      %2386 = vmatmul.mubr.f32.gmra.mrb[0].mxu0 %v1053
      %v2387 = vpop.f32.mrb[0].mxu0
      %v2388 = vadd.f32 0.0, %v2387
      %v2389 = vpop.f32.mrb[0].mxu0
      %2390 = vmatprep.mubr.f32.mxu0 %v1057
      %2391 = vmatmul.mubr.f32.gmra.mrb[0].mxu0 %v1056
      %v2392 = vpop.f32.mrb[0].mxu0
      %v2393 = vadd.f32 0.0, %v2392
      %v2394 = vpop.f32.mrb[0].mxu0
      %2395 = vmatprep.mubr.f32.mxu0 %v1060
      %2396 = vmatmul.mubr.f32.gmra.mrb[0].mxu0 %v1059
      %v2397 = vpop.f32.mrb[0].mxu0
      %v2398 = vadd.f32 0.0, %v2397
      %v2399 = vpop.f32.mrb[0].mxu0
      %2400 = vmatprep.mubr.f32.mxu0 %v1063
      %2401 = vmatmul.mubr.f32.gmra.mrb[0].mxu0 %v1062
      %v2402 = vpop.f32.mrb[0].mxu0
      %v2403 = vadd.f32 0.0, %v2402
      %v2404 = vpop.f32.mrb[0].mxu0
      %2405 = vmatprep.mubr.f32.mxu0 %v1066
      %2406 = vmatmul.mubr.f32.gmra.mrb[0].mxu0 %v1065
      %v2407 = vpop.f32.mrb[0].mxu0
      %v2408 = vadd.f32 0.0, %v2407
      %v2409 = vpop.f32.mrb[0].mxu0
      %2410 = vmatprep.mubr.f32.mxu0 %v1069
      %2411 = vmatmul.mubr.f32.gmra.mrb[0].mxu0 %v1068
      %v2412 = vpop.f32.mrb[0].mxu0
      %v2413 = vadd.f32 0.0, %v2412
      %v2414 = vpop.f32.mrb[0].mxu0
      %2415 = vmatprep.mubr.f32.mxu0 %v1072
      %2416 = vmatmul.mubr.f32.gmra.mrb[0].mxu0 %v1071
      %v2417 = vpop.f32.mrb[0].mxu0
      %v2418 = vadd.f32 0.0, %v2417
      %v2419 = vpop.f32.mrb[0].mxu0
      %2420 = vmatprep.mubr.f32.mxu0 %v1075
      %2421 = vmatmul.mubr.f32.gmra.mrb[0].mxu0 %v1074
      %v2422 = vpop.f32.mrb[0].mxu0
      %v2423 = vadd.f32 0.0, %v2422
      %v2424 = vpop.f32.mrb[0].mxu0
      %2425 = vmatprep.mubr.f32.mxu0 %v1078
      %2426 = vmatmul.mubr.f32.gmra.mrb[0].mxu0 %v1077
      %v2427 = vpop.f32.mrb[0].mxu0
      %v2428 = vadd.f32 0.0, %v2427
      %v2429 = vpop.f32.mrb[0].mxu0
      %2430 = vmatprep.mubr.f32.mxu0 %v1081
      %2431 = vmatmul.mubr.f32.gmra.mrb[0].mxu0 %v1080
      %v2432 = vpop.f32.mrb[0].mxu0
      %v2433 = vadd.f32 0.0, %v2432
      %v2434 = vpop.f32.mrb[0].mxu0
      %2435 = vmatprep.mubr.f32.mxu0 %v1084
      %2436 = vmatmul.mubr.f32.gmra.mrb[0].mxu0 %v1083
      %v2437 = vpop.f32.mrb[0].mxu0
      %v2438 = vadd.f32 0.0, %v2437
      %v2439 = vpop.f32.mrb[0].mxu0
      %2440 = vmatprep.mubr.f32.mxu0 %v1087
      %2441 = vmatmul.mubr.f32.gmra.mrb[0].mxu0 %v1086
      %v2442 = vpop.f32.mrb[0].mxu0
      %v2443 = vadd.f32 0.0, %v2442
      %v2444 = vpop.f32.mrb[0].mxu0
      %2445 = vmatprep.mubr.f32.mxu0 %v1090
      %2446 = vmatmul.mubr.f32.gmra.mrb[0].mxu0 %v1089
      %v2447 = vpop.f32.mrb[0].mxu0
      %v2448 = vadd.f32 0.0, %v2447
      %v2449 = vpop.f32.mrb[0].mxu0
      %2450 = vmatprep.mubr.f32.mxu0 %v1093
      %2451 = vmatmul.mubr.f32.gmra.mrb[0].mxu0 %v1092
      %v2452 = vpop.f32.mrb[0].mxu0
      %v2453 = vadd.f32 0.0, %v2452
      %v2454 = vpop.f32.mrb[0].mxu0
      %2455 = vmatprep.mubr.f32.mxu0 %v1096
      %2456 = vmatmul.mubr.f32.gmra.mrb[0].mxu0 %v1095
      %v2457 = vpop.f32.mrb[0].mxu0
      %v2458 = vadd.f32 0.0, %v2457
      %v2459 = vpop.f32.mrb[0].mxu0
      %2460 = vmatprep.mubr.f32.mxu0 %v1099
      %2461 = vmatmul.mubr.f32.gmra.mrb[0].mxu0 %v1098
      %v2462 = vpop.f32.mrb[0].mxu0
      %v2463 = vadd.f32 0.0, %v2462
      %v2464 = vpop.f32.mrb[0].mxu0
      %2465 = vdwg.mxu0
      %2466 = vmatprep.subr.mxu0 0.0
      %2467 = vmatpush1.msra.mxu0 %v1248
      %2468 = vmatprep.subr.mxu0 0.0
      %2469 = vmatpush1.msra.mxu0 %v1249
      %2470 = vmatprep.subr.mxu0 0.0
      %2471 = vmatpush1.msra.mxu0 %v1250
      %2472 = vmatprep.subr.mxu0 0.0
      %2473 = vmatpush1.msra.mxu0 %v1251
      %2474 = vmatprep.subr.mxu0 0.0
      %2475 = vmatpush1.msra.mxu0 %v1252
      %2476 = vmatprep.subr.mxu0 0.0
      %2477 = vmatpush1.msra.mxu0 %v1253
      %2478 = vmatprep.subr.mxu0 0.0
      %2479 = vmatpush1.msra.mxu0 0.0
      %2480 = vmatprep.subr.mxu0 0.0
      %2481 = vmatpush1.msra.mxu0 0.0
      %2482 = vmatprep.subr.mxu0 0.0
      %2483 = vmatpush1.msra.mxu0 0.0
      %2484 = vmatprep.subr.mxu0 0.0
      %2485 = vmatpush1.msra.mxu0 0.0
      %2486 = vmatprep.subr.mxu0 0.0
      %2487 = vmatpush1.msra.mxu0 0.0
      %2488 = vmatprep.subr.mxu0 0.0
      %2489 = vmatpush1.msra.mxu0 0.0
      %2490 = vmatprep.subr.mxu0 0.0
      %2491 = vmatpush1.msra.mxu0 0.0
      %2492 = vmatprep.subr.mxu0 0.0
      %2493 = vmatpush1.msra.mxu0 0.0
      %2494 = vmatprep.subr.mxu0 0.0
      %2495 = vmatpush1.msra.mxu0 0.0
      %2496 = vmatprep.subr.mxu0 0.0
      %2497 = vmatpush1.msra.mxu0 0.0
      %2498 = vmatprep.subr.mxu0 0.0
      %2499 = vmatpush1.msra.mxu0 0.0
      %2500 = vmatprep.subr.mxu0 0.0
      %2501 = vmatpush1.msra.mxu0 0.0
      %2502 = vmatprep.subr.mxu0 0.0
      %2503 = vmatpush1.msra.mxu0 0.0
      %2504 = vmatprep.subr.mxu0 0.0
      %2505 = vmatpush1.msra.mxu0 0.0
      %2506 = vmatprep.subr.mxu0 0.0
      %2507 = vmatpush1.msra.mxu0 0.0
      %2508 = vmatprep.subr.mxu0 0.0
      %2509 = vmatpush1.msra.mxu0 0.0
      %2510 = vmatprep.subr.mxu0 0.0
      %2511 = vmatpush1.msra.mxu0 0.0
      %2512 = vmatprep.subr.mxu0 0.0
      %2513 = vmatpush1.msra.mxu0 0.0
      %2514 = vmatprep.subr.mxu0 0.0
      %2515 = vmatpush1.msra.mxu0 0.0
      %2516 = vmatprep.subr.mxu0 0.0
      %2517 = vmatpush1.msra.mxu0 0.0
      %2518 = vmatprep.subr.mxu0 0.0
      %2519 = vmatpush1.msra.mxu0 0.0
      %2520 = vmatprep.subr.mxu0 0.0
      %2521 = vmatpush1.msra.mxu0 0.0
      %2522 = vmatprep.subr.mxu0 0.0
      %2523 = vmatpush1.msra.mxu0 0.0
      %2524 = vmatprep.subr.mxu0 0.0
      %2525 = vmatpush1.msra.mxu0 0.0
      %2526 = vmatprep.subr.mxu0 0.0
      %2527 = vmatpush1.msra.mxu0 0.0
      %2528 = vmatprep.subr.mxu0 0.0
      %2529 = vmatpush1.msra.mxu0 0.0
      %2530 = vmatprep.mubr.f32.mxu0 0.0
      %2531 = vmatmul.mubr.f32.gmra.mrb[0].mxu0 %v2250
      %v2532 = vpop.f32.mrb[0].mxu0
      %v2533 = vadd.f32 %v2373, %v2532
      %v2534 = vpop.f32.mrb[0].mxu0
      %2535 = vmatprep.mubr.f32.mxu0 0.0
      %2536 = vmatmul.mubr.f32.gmra.mrb[0].mxu0 %v2253
      %v2537 = vpop.f32.mrb[0].mxu0
      %v2538 = vadd.f32 %v2378, %v2537
      %v2539 = vpop.f32.mrb[0].mxu0
      %2540 = vmatprep.mubr.f32.mxu0 0.0
      %2541 = vmatmul.mubr.f32.gmra.mrb[0].mxu0 %v2256
      %v2542 = vpop.f32.mrb[0].mxu0
      %v2543 = vadd.f32 %v2383, %v2542
      %v2544 = vpop.f32.mrb[0].mxu0
      %2545 = vmatprep.mubr.f32.mxu0 0.0
      %2546 = vmatmul.mubr.f32.gmra.mrb[0].mxu0 %v2259
      %v2547 = vpop.f32.mrb[0].mxu0
      %v2548 = vadd.f32 %v2388, %v2547
      %v2549 = vpop.f32.mrb[0].mxu0
      %2550 = vmatprep.mubr.f32.mxu0 0.0
      %2551 = vmatmul.mubr.f32.gmra.mrb[0].mxu0 %v2262
      %v2552 = vpop.f32.mrb[0].mxu0
      %v2553 = vadd.f32 %v2393, %v2552
      %v2554 = vpop.f32.mrb[0].mxu0
      %2555 = vmatprep.mubr.f32.mxu0 0.0
      %2556 = vmatmul.mubr.f32.gmra.mrb[0].mxu0 %v2265
      %v2557 = vpop.f32.mrb[0].mxu0
      %v2558 = vadd.f32 %v2398, %v2557
      %v2559 = vpop.f32.mrb[0].mxu0
      %2560 = vmatprep.mubr.f32.mxu0 0.0
      %2561 = vmatmul.mubr.f32.gmra.mrb[0].mxu0 %v2268
      %v2562 = vpop.f32.mrb[0].mxu0
      %v2563 = vadd.f32 %v2403, %v2562
      %v2564 = vpop.f32.mrb[0].mxu0
      %2565 = vmatprep.mubr.f32.mxu0 0.0
      %2566 = vmatmul.mubr.f32.gmra.mrb[0].mxu0 %v2271
      %v2567 = vpop.f32.mrb[0].mxu0
      %v2568 = vadd.f32 %v2408, %v2567
      %v2569 = vpop.f32.mrb[0].mxu0
      %2570 = vmatprep.mubr.f32.mxu0 0.0
      %2571 = vmatmul.mubr.f32.gmra.mrb[0].mxu0 %v2274
      %v2572 = vpop.f32.mrb[0].mxu0
      %v2573 = vadd.f32 %v2413, %v2572
      %v2574 = vpop.f32.mrb[0].mxu0
      %2575 = vmatprep.mubr.f32.mxu0 0.0
      %2576 = vmatmul.mubr.f32.gmra.mrb[0].mxu0 %v2277
      %v2577 = vpop.f32.mrb[0].mxu0
      %v2578 = vadd.f32 %v2418, %v2577
      %v2579 = vpop.f32.mrb[0].mxu0
      %2580 = vmatprep.mubr.f32.mxu0 0.0
      %2581 = vmatmul.mubr.f32.gmra.mrb[0].mxu0 %v2280
      %v2582 = vpop.f32.mrb[0].mxu0
      %v2583 = vadd.f32 %v2423, %v2582
      %v2584 = vpop.f32.mrb[0].mxu0
      %2585 = vmatprep.mubr.f32.mxu0 0.0
      %2586 = vmatmul.mubr.f32.gmra.mrb[0].mxu0 %v2283
      %v2587 = vpop.f32.mrb[0].mxu0
      %v2588 = vadd.f32 %v2428, %v2587
      %v2589 = vpop.f32.mrb[0].mxu0
      %2590 = vmatprep.mubr.f32.mxu0 0.0
      %2591 = vmatmul.mubr.f32.gmra.mrb[0].mxu0 %v2286
      %v2592 = vpop.f32.mrb[0].mxu0
      %v2593 = vadd.f32 %v2433, %v2592
      %v2594 = vpop.f32.mrb[0].mxu0
      %2595 = vmatprep.mubr.f32.mxu0 0.0
      %2596 = vmatmul.mubr.f32.gmra.mrb[0].mxu0 %v2289
      %v2597 = vpop.f32.mrb[0].mxu0
      %v2598 = vadd.f32 %v2438, %v2597
      %v2599 = vpop.f32.mrb[0].mxu0
      %2600 = vmatprep.mubr.f32.mxu0 0.0
      %2601 = vmatmul.mubr.f32.gmra.mrb[0].mxu0 %v2292
      %v2602 = vpop.f32.mrb[0].mxu0
      %v2603 = vadd.f32 %v2443, %v2602
      %v2604 = vpop.f32.mrb[0].mxu0
      %2605 = vmatprep.mubr.f32.mxu0 0.0
      %2606 = vmatmul.mubr.f32.gmra.mrb[0].mxu0 %v2295
      %v2607 = vpop.f32.mrb[0].mxu0
      %v2608 = vadd.f32 %v2448, %v2607
      %v2609 = vpop.f32.mrb[0].mxu0
      %2610 = vmatprep.mubr.f32.mxu0 0.0
      %2611 = vmatmul.mubr.f32.gmra.mrb[0].mxu0 %v2298
      %v2612 = vpop.f32.mrb[0].mxu0
      %v2613 = vadd.f32 %v2453, %v2612
      %v2614 = vpop.f32.mrb[0].mxu0
      %2615 = vmatprep.mubr.f32.mxu0 0.0
      %2616 = vmatmul.mubr.f32.gmra.mrb[0].mxu0 %v2301
      %v2617 = vpop.f32.mrb[0].mxu0
      %v2618 = vadd.f32 %v2458, %v2617
      %v2619 = vpop.f32.mrb[0].mxu0
      %2620 = vmatprep.mubr.f32.mxu0 0.0
      %2621 = vmatmul.mubr.f32.gmra.mrb[0].mxu0 %v2304
      %v2622 = vpop.f32.mrb[0].mxu0
      %v2623 = vadd.f32 %v2463, %v2622
      %v2624 = vpop.f32.mrb[0].mxu0
      %2625 = vdwg.mxu0
      %v2626 = vmax.f32 %v2533, 0.0
      %v2627 = vmax.f32 %v2538, 0.0
      %v2628 = vmax.f32 %v2543, 0.0
      %v2629 = vmax.f32 %v2548, 0.0
      %v2630 = vmax.f32 %v2553, 0.0
      %v2631 = vmax.f32 %v2558, 0.0
      %v2632 = vmax.f32 %v2563, 0.0
      %v2633 = vmax.f32 %v2568, 0.0
      %v2634 = vmax.f32 %v2573, 0.0
      %v2635 = vmax.f32 %v2578, 0.0
      %v2636 = vmax.f32 %v2583, 0.0
      %v2637 = vmax.f32 %v2588, 0.0
      %v2638 = vmax.f32 %v2593, 0.0
      %v2639 = vmax.f32 %v2598, 0.0
      %v2640 = vmax.f32 %v2603, 0.0
      %v2641 = vmax.f32 %v2608, 0.0
      %v2642 = vmax.f32 %v2613, 0.0
      %v2643 = vmax.f32 %v2618, 0.0
      %v2644 = vmax.f32 %v2623, 0.0
      %v2646 = vsel %vm1651, %v1102, 0
      %v2649 = vsel %vm1651, %v1104, 0
      %v2652 = vsel %vm1651, %v1106, 0
      %v2655 = vsel %vm1651, %v1108, 0
      %v2658 = vsel %vm1651, %v1110, 0
      %v2661 = vsel %vm1651, %v1112, 0
      %v2664 = vsel %vm1651, %v1114, 0
      %v2667 = vsel %vm1651, %v1116, 0
      %v2670 = vsel %vm1651, %v1118, 0
      %v2673 = vsel %vm1651, %v1120, 0
      %v2676 = vsel %vm1651, %v1122, 0
      %v2679 = vsel %vm1651, %v1124, 0
      %v2682 = vsel %vm1651, %v1126, 0
      %v2685 = vsel %vm1651, %v1128, 0
      %v2688 = vsel %vm1651, %v1130, 0
      %v2691 = vsel %vm1651, %v1132, 0
      %v2694 = vsel %vm1651, %v1134, 0
      %v2697 = vsel %vm1651, %v1136, 0
      %v2700 = vsel %vm1651, %v1138, 0
      %v2703 = vsel %vm1651, %v1140, 0
      %v2706 = vsel %vm1651, %v1142, 0
      %v2709 = vsel %vm1651, %v1144, 0
      %v2712 = vsel %vm1651, %v1146, 0
      %v2715 = vsel %vm1651, %v1148, 0
      %v2718 = vsel %vm1651, %v1150, 0
      %v2721 = vsel %vm1651, %v1152, 0
      %v2724 = vsel %vm1651, %v1154, 0
      %v2727 = vsel %vm1651, %v1156, 0
      %v2730 = vsel %vm1651, %v1158, 0
      %v2733 = vsel %vm1651, %v1160, 0
      %v2736 = vsel %vm1651, %v1162, 0
      %v2739 = vsel %vm1651, %v1164, 0
      %v2742 = vsel %vm1651, %v1166, 0
      %v2745 = vsel %vm1651, %v1168, 0
      %v2748 = vsel %vm1651, %v1170, 0
      %v2751 = vsel %vm1651, %v1172, 0
      %v2754 = vsel %vm1651, %v1174, 0
      %v2757 = vsel %vm1651, %v1176, 0
      %2759 = vmatprep.subr.mxu0 0.0
      %2760 = vmatpush1.msra.mxu0 %v2626
      %2761 = vmatprep.subr.mxu0 0.0
      %2762 = vmatpush1.msra.mxu0 %v2627
      %2763 = vmatprep.subr.mxu0 0.0
      %2764 = vmatpush1.msra.mxu0 %v2628
      %2765 = vmatprep.subr.mxu0 0.0
      %2766 = vmatpush1.msra.mxu0 %v2629
      %2767 = vmatprep.subr.mxu0 0.0
      %2768 = vmatpush1.msra.mxu0 %v2630
      %2769 = vmatprep.subr.mxu0 0.0
      %2770 = vmatpush1.msra.mxu0 %v2631
      %2771 = vmatprep.subr.mxu0 0.0
      %2772 = vmatpush1.msra.mxu0 %v2632
      %2773 = vmatprep.subr.mxu0 0.0
      %2774 = vmatpush1.msra.mxu0 %v2633
      %2775 = vmatprep.subr.mxu0 0.0
      %2776 = vmatpush1.msra.mxu0 %v2634
      %2777 = vmatprep.subr.mxu0 0.0
      %2778 = vmatpush1.msra.mxu0 %v2635
      %2779 = vmatprep.subr.mxu0 0.0
      %2780 = vmatpush1.msra.mxu0 %v2636
      %2781 = vmatprep.subr.mxu0 0.0
      %2782 = vmatpush1.msra.mxu0 %v2637
      %2783 = vmatprep.subr.mxu0 0.0
      %2784 = vmatpush1.msra.mxu0 %v2638
      %2785 = vmatprep.subr.mxu0 0.0
      %2786 = vmatpush1.msra.mxu0 %v2639
      %2787 = vmatprep.subr.mxu0 0.0
      %2788 = vmatpush1.msra.mxu0 %v2640
      %2789 = vmatprep.subr.mxu0 0.0
      %2790 = vmatpush1.msra.mxu0 %v2641
      %2791 = vmatprep.subr.mxu0 0.0
      %2792 = vmatpush1.msra.mxu0 %v2642
      %2793 = vmatprep.subr.mxu0 0.0
      %2794 = vmatpush1.msra.mxu0 %v2643
      %2795 = vmatprep.subr.mxu0 0.0
      %2796 = vmatpush1.msra.mxu0 %v2644
      %2797 = vmatprep.subr.mxu0 0.0
      %2798 = vmatpush1.msra.mxu0 0.0
      %2799 = vmatprep.subr.mxu0 0.0
      %2800 = vmatpush1.msra.mxu0 0.0
      %2801 = vmatprep.subr.mxu0 0.0
      %2802 = vmatpush1.msra.mxu0 0.0
      %2803 = vmatprep.subr.mxu0 0.0
      %2804 = vmatpush1.msra.mxu0 0.0
      %2805 = vmatprep.subr.mxu0 0.0
      %2806 = vmatpush1.msra.mxu0 0.0
      %2807 = vmatprep.subr.mxu0 0.0
      %2808 = vmatpush1.msra.mxu0 0.0
      %2809 = vmatprep.subr.mxu0 0.0
      %2810 = vmatpush1.msra.mxu0 0.0
      %2811 = vmatprep.subr.mxu0 0.0
      %2812 = vmatpush1.msra.mxu0 0.0
      %2813 = vmatprep.subr.mxu0 0.0
      %2814 = vmatpush1.msra.mxu0 0.0
      %2815 = vmatprep.subr.mxu0 0.0
      %2816 = vmatpush1.msra.mxu0 0.0
      %2817 = vmatprep.subr.mxu0 0.0
      %2818 = vmatpush1.msra.mxu0 0.0
      %2819 = vmatprep.subr.mxu0 0.0
      %2820 = vmatpush1.msra.mxu0 0.0
      %2821 = vmatprep.subr.mxu0 0.0
      %2822 = vmatpush1.msra.mxu0 0.0
      %2823 = vmatprep.mubr.f32.mxu0 %v2646
      %2824 = vmatmul.mubr.f32.gmra.mrb[0].mxu0 %v1101
      %v2825 = vpop.f32.mrb[0].mxu0
      %v2826 = vadd.f32 0.0, %v2825
      %v2827 = vpop.f32.mrb[0].mxu0
      %2828 = vmatprep.mubr.f32.mxu0 %v2649
      %2829 = vmatmul.mubr.f32.gmra.mrb[0].mxu0 %v1103
      %v2830 = vpop.f32.mrb[0].mxu0
      %v2831 = vadd.f32 0.0, %v2830
      %v2832 = vpop.f32.mrb[0].mxu0
      %2833 = vmatprep.mubr.f32.mxu0 %v2652
      %2834 = vmatmul.mubr.f32.gmra.mrb[0].mxu0 %v1105
      %v2835 = vpop.f32.mrb[0].mxu0
      %v2836 = vadd.f32 0.0, %v2835
      %v2837 = vpop.f32.mrb[0].mxu0
      %2838 = vmatprep.mubr.f32.mxu0 %v2655
      %2839 = vmatmul.mubr.f32.gmra.mrb[0].mxu0 %v1107
      %v2840 = vpop.f32.mrb[0].mxu0
      %v2841 = vadd.f32 0.0, %v2840
      %v2842 = vpop.f32.mrb[0].mxu0
      %2843 = vmatprep.mubr.f32.mxu0 %v2658
      %2844 = vmatmul.mubr.f32.gmra.mrb[0].mxu0 %v1109
      %v2845 = vpop.f32.mrb[0].mxu0
      %v2846 = vadd.f32 0.0, %v2845
      %v2847 = vpop.f32.mrb[0].mxu0
      %2848 = vmatprep.mubr.f32.mxu0 %v2661
      %2849 = vmatmul.mubr.f32.gmra.mrb[0].mxu0 %v1111
      %v2850 = vpop.f32.mrb[0].mxu0
      %v2851 = vadd.f32 0.0, %v2850
      %v2852 = vpop.f32.mrb[0].mxu0
      %2853 = vmatprep.mubr.f32.mxu0 %v2664
      %2854 = vmatmul.mubr.f32.gmra.mrb[0].mxu0 %v1113
      %v2855 = vpop.f32.mrb[0].mxu0
      %v2856 = vadd.f32 0.0, %v2855
      %v2857 = vpop.f32.mrb[0].mxu0
      %2858 = vmatprep.mubr.f32.mxu0 %v2667
      %2859 = vmatmul.mubr.f32.gmra.mrb[0].mxu0 %v1115
      %v2860 = vpop.f32.mrb[0].mxu0
      %v2861 = vadd.f32 0.0, %v2860
      %v2862 = vpop.f32.mrb[0].mxu0
      %2863 = vmatprep.mubr.f32.mxu0 %v2670
      %2864 = vmatmul.mubr.f32.gmra.mrb[0].mxu0 %v1117
      %v2865 = vpop.f32.mrb[0].mxu0
      %v2866 = vadd.f32 0.0, %v2865
      %v2867 = vpop.f32.mrb[0].mxu0
      %2868 = vmatprep.mubr.f32.mxu0 %v2673
      %2869 = vmatmul.mubr.f32.gmra.mrb[0].mxu0 %v1119
      %v2870 = vpop.f32.mrb[0].mxu0
      %v2871 = vadd.f32 0.0, %v2870
      %v2872 = vpop.f32.mrb[0].mxu0
      %2873 = vmatprep.mubr.f32.mxu0 %v2676
      %2874 = vmatmul.mubr.f32.gmra.mrb[0].mxu0 %v1121
      %v2875 = vpop.f32.mrb[0].mxu0
      %v2876 = vadd.f32 0.0, %v2875
      %v2877 = vpop.f32.mrb[0].mxu0
      %2878 = vmatprep.mubr.f32.mxu0 %v2679
      %2879 = vmatmul.mubr.f32.gmra.mrb[0].mxu0 %v1123
      %v2880 = vpop.f32.mrb[0].mxu0
      %v2881 = vadd.f32 0.0, %v2880
      %v2882 = vpop.f32.mrb[0].mxu0
      %2883 = vmatprep.mubr.f32.mxu0 %v2682
      %2884 = vmatmul.mubr.f32.gmra.mrb[0].mxu0 %v1125
      %v2885 = vpop.f32.mrb[0].mxu0
      %v2886 = vadd.f32 0.0, %v2885
      %v2887 = vpop.f32.mrb[0].mxu0
      %2888 = vmatprep.mubr.f32.mxu0 %v2685
      %2889 = vmatmul.mubr.f32.gmra.mrb[0].mxu0 %v1127
      %v2890 = vpop.f32.mrb[0].mxu0
      %v2891 = vadd.f32 0.0, %v2890
      %v2892 = vpop.f32.mrb[0].mxu0
      %2893 = vmatprep.mubr.f32.mxu0 %v2688
      %2894 = vmatmul.mubr.f32.gmra.mrb[0].mxu0 %v1129
      %v2895 = vpop.f32.mrb[0].mxu0
      %v2896 = vadd.f32 0.0, %v2895
      %v2897 = vpop.f32.mrb[0].mxu0
      %2898 = vmatprep.mubr.f32.mxu0 %v2691
      %2899 = vmatmul.mubr.f32.gmra.mrb[0].mxu0 %v1131
      %v2900 = vpop.f32.mrb[0].mxu0
      %v2901 = vadd.f32 0.0, %v2900
      %v2902 = vpop.f32.mrb[0].mxu0
      %2903 = vmatprep.mubr.f32.mxu0 %v2694
      %2904 = vmatmul.mubr.f32.gmra.mrb[0].mxu0 %v1133
      %v2905 = vpop.f32.mrb[0].mxu0
      %v2906 = vadd.f32 0.0, %v2905
      %v2907 = vpop.f32.mrb[0].mxu0
      %2908 = vmatprep.mubr.f32.mxu0 %v2697
      %2909 = vmatmul.mubr.f32.gmra.mrb[0].mxu0 %v1135
      %v2910 = vpop.f32.mrb[0].mxu0
      %v2911 = vadd.f32 0.0, %v2910
      %v2912 = vpop.f32.mrb[0].mxu0
      %2913 = vmatprep.mubr.f32.mxu0 %v2700
      %2914 = vmatmul.mubr.f32.gmra.mrb[0].mxu0 %v1137
      %v2915 = vpop.f32.mrb[0].mxu0
      %v2916 = vadd.f32 0.0, %v2915
      %v2917 = vpop.f32.mrb[0].mxu0
      %2918 = vmatprep.mubr.f32.mxu0 %v2703
      %2919 = vmatmul.mubr.f32.gmra.mrb[0].mxu0 %v1139
      %v2920 = vpop.f32.mrb[0].mxu0
      %v2921 = vadd.f32 0.0, %v2920
      %v2922 = vpop.f32.mrb[0].mxu0
      %2923 = vmatprep.mubr.f32.mxu0 %v2706
      %2924 = vmatmul.mubr.f32.gmra.mrb[0].mxu0 %v1141
      %v2925 = vpop.f32.mrb[0].mxu0
      %v2926 = vadd.f32 0.0, %v2925
      %v2927 = vpop.f32.mrb[0].mxu0
      %2928 = vmatprep.mubr.f32.mxu0 %v2709
      %2929 = vmatmul.mubr.f32.gmra.mrb[0].mxu0 %v1143
      %v2930 = vpop.f32.mrb[0].mxu0
      %v2931 = vadd.f32 0.0, %v2930
      %v2932 = vpop.f32.mrb[0].mxu0
      %2933 = vmatprep.mubr.f32.mxu0 %v2712
      %2934 = vmatmul.mubr.f32.gmra.mrb[0].mxu0 %v1145
      %v2935 = vpop.f32.mrb[0].mxu0
      %v2936 = vadd.f32 0.0, %v2935
      %v2937 = vpop.f32.mrb[0].mxu0
      %2938 = vmatprep.mubr.f32.mxu0 %v2715
      %2939 = vmatmul.mubr.f32.gmra.mrb[0].mxu0 %v1147
      %v2940 = vpop.f32.mrb[0].mxu0
      %v2941 = vadd.f32 0.0, %v2940
      %v2942 = vpop.f32.mrb[0].mxu0
      %2943 = vmatprep.mubr.f32.mxu0 %v2718
      %2944 = vmatmul.mubr.f32.gmra.mrb[0].mxu0 %v1149
      %v2945 = vpop.f32.mrb[0].mxu0
      %v2946 = vadd.f32 0.0, %v2945
      %v2947 = vpop.f32.mrb[0].mxu0
      %2948 = vmatprep.mubr.f32.mxu0 %v2721
      %2949 = vmatmul.mubr.f32.gmra.mrb[0].mxu0 %v1151
      %v2950 = vpop.f32.mrb[0].mxu0
      %v2951 = vadd.f32 0.0, %v2950
      %v2952 = vpop.f32.mrb[0].mxu0
      %2953 = vmatprep.mubr.f32.mxu0 %v2724
      %2954 = vmatmul.mubr.f32.gmra.mrb[0].mxu0 %v1153
      %v2955 = vpop.f32.mrb[0].mxu0
      %v2956 = vadd.f32 0.0, %v2955
      %v2957 = vpop.f32.mrb[0].mxu0
      %2958 = vmatprep.mubr.f32.mxu0 %v2727
      %2959 = vmatmul.mubr.f32.gmra.mrb[0].mxu0 %v1155
      %v2960 = vpop.f32.mrb[0].mxu0
      %v2961 = vadd.f32 0.0, %v2960
      %v2962 = vpop.f32.mrb[0].mxu0
      %2963 = vmatprep.mubr.f32.mxu0 %v2730
      %2964 = vmatmul.mubr.f32.gmra.mrb[0].mxu0 %v1157
      %v2965 = vpop.f32.mrb[0].mxu0
      %v2966 = vadd.f32 0.0, %v2965
      %v2967 = vpop.f32.mrb[0].mxu0
      %2968 = vmatprep.mubr.f32.mxu0 %v2733
      %2969 = vmatmul.mubr.f32.gmra.mrb[0].mxu0 %v1159
      %v2970 = vpop.f32.mrb[0].mxu0
      %v2971 = vadd.f32 0.0, %v2970
      %v2972 = vpop.f32.mrb[0].mxu0
      %2973 = vmatprep.mubr.f32.mxu0 %v2736
      %2974 = vmatmul.mubr.f32.gmra.mrb[0].mxu0 %v1161
      %v2975 = vpop.f32.mrb[0].mxu0
      %v2976 = vadd.f32 0.0, %v2975
      %v2977 = vpop.f32.mrb[0].mxu0
      %2978 = vmatprep.mubr.f32.mxu0 %v2739
      %2979 = vmatmul.mubr.f32.gmra.mrb[0].mxu0 %v1163
      %v2980 = vpop.f32.mrb[0].mxu0
      %v2981 = vadd.f32 0.0, %v2980
      %v2982 = vpop.f32.mrb[0].mxu0
      %2983 = vmatprep.mubr.f32.mxu0 %v2742
      %2984 = vmatmul.mubr.f32.gmra.mrb[0].mxu0 %v1165
      %v2985 = vpop.f32.mrb[0].mxu0
      %v2986 = vadd.f32 0.0, %v2985
      %v2987 = vpop.f32.mrb[0].mxu0
      %2988 = vmatprep.mubr.f32.mxu0 %v2745
      %2989 = vmatmul.mubr.f32.gmra.mrb[0].mxu0 %v1167
      %v2990 = vpop.f32.mrb[0].mxu0
      %v2991 = vadd.f32 0.0, %v2990
      %v2992 = vpop.f32.mrb[0].mxu0
      %2993 = vmatprep.mubr.f32.mxu0 %v2748
      %2994 = vmatmul.mubr.f32.gmra.mrb[0].mxu0 %v1169
      %v2995 = vpop.f32.mrb[0].mxu0
      %v2996 = vadd.f32 0.0, %v2995
      %v2997 = vpop.f32.mrb[0].mxu0
      %2998 = vmatprep.mubr.f32.mxu0 %v2751
      %2999 = vmatmul.mubr.f32.gmra.mrb[0].mxu0 %v1171
      %v3000 = vpop.f32.mrb[0].mxu0
      %v3001 = vadd.f32 0.0, %v3000
      %v3002 = vpop.f32.mrb[0].mxu0
      %3003 = vmatprep.mubr.f32.mxu0 %v2754
      %3004 = vmatmul.mubr.f32.gmra.mrb[0].mxu0 %v1173
      %v3005 = vpop.f32.mrb[0].mxu0
      %v3006 = vadd.f32 0.0, %v3005
      %v3007 = vpop.f32.mrb[0].mxu0
      %3008 = vmatprep.mubr.f32.mxu0 %v2757
      %3009 = vmatmul.mubr.f32.gmra.mrb[0].mxu0 %v1175
      %v3010 = vpop.f32.mrb[0].mxu0
      %v3011 = vadd.f32 0.0, %v3010
      %v3012 = vpop.f32.mrb[0].mxu0
      %3013 = vdwg.mxu0
      %v3014 = vxor.u32 %v2826, 2147483648
      %v3015 = vxor.u32 %v2831, 2147483648
      %v3016 = vxor.u32 %v2836, 2147483648
      %v3017 = vxor.u32 %v2841, 2147483648
      %v3018 = vxor.u32 %v2846, 2147483648
      %v3019 = vxor.u32 %v2851, 2147483648
      %v3020 = vxor.u32 %v2856, 2147483648
      %v3021 = vxor.u32 %v2861, 2147483648
      %v3022 = vxor.u32 %v2866, 2147483648
      %v3023 = vxor.u32 %v2871, 2147483648
      %v3024 = vxor.u32 %v2876, 2147483648
      %v3025 = vxor.u32 %v2881, 2147483648
      %v3026 = vxor.u32 %v2886, 2147483648
      %v3027 = vxor.u32 %v2891, 2147483648
      %v3028 = vxor.u32 %v2896, 2147483648
      %v3029 = vxor.u32 %v2901, 2147483648
      %v3030 = vxor.u32 %v2906, 2147483648
      %v3031 = vxor.u32 %v2911, 2147483648
      %v3032 = vxor.u32 %v2916, 2147483648
      %v3033 = vxor.u32 %v2921, 2147483648
      %v3034 = vxor.u32 %v2926, 2147483648
      %v3035 = vxor.u32 %v2931, 2147483648
      %v3036 = vxor.u32 %v2936, 2147483648
      %v3037 = vxor.u32 %v2941, 2147483648
      %v3038 = vxor.u32 %v2946, 2147483648
      %v3039 = vxor.u32 %v2951, 2147483648
      %v3040 = vxor.u32 %v2956, 2147483648
      %v3041 = vxor.u32 %v2961, 2147483648
      %v3042 = vxor.u32 %v2966, 2147483648
      %v3043 = vxor.u32 %v2971, 2147483648
      %v3044 = vxor.u32 %v2976, 2147483648
      %v3045 = vxor.u32 %v2981, 2147483648
      %v3046 = vxor.u32 %v2986, 2147483648
      %v3047 = vxor.u32 %v2991, 2147483648
      %v3048 = vxor.u32 %v2996, 2147483648
      %v3049 = vxor.u32 %v3001, 2147483648
      %v3050 = vxor.u32 %v3006, 2147483648
      %v3051 = vxor.u32 %v3011, 2147483648
      %v3052 = vmul.f32 %v3014, 1.442695
      %v3053 = vpow.pop %v3052
      %v3054 = vmul.f32 %v3015, 1.442695
      %v3055 = vpow.pop %v3054
      %v3056 = vmul.f32 %v3016, 1.442695
      %v3057 = vpow.pop %v3056
      %v3058 = vmul.f32 %v3017, 1.442695
      %v3059 = vpow.pop %v3058
      %v3060 = vmul.f32 %v3018, 1.442695
      %v3061 = vpow.pop %v3060
      %v3062 = vmul.f32 %v3019, 1.442695
      %v3063 = vpow.pop %v3062
      %v3064 = vmul.f32 %v3020, 1.442695
      %v3065 = vpow.pop %v3064
      %v3066 = vmul.f32 %v3021, 1.442695
      %v3067 = vpow.pop %v3066
      %v3068 = vmul.f32 %v3022, 1.442695
      %v3069 = vpow.pop %v3068
      %v3070 = vmul.f32 %v3023, 1.442695
      %v3071 = vpow.pop %v3070
      %v3072 = vmul.f32 %v3024, 1.442695
      %v3073 = vpow.pop %v3072
      %v3074 = vmul.f32 %v3025, 1.442695
      %v3075 = vpow.pop %v3074
      %v3076 = vmul.f32 %v3026, 1.442695
      %v3077 = vpow.pop %v3076
      %v3078 = vmul.f32 %v3027, 1.442695
      %v3079 = vpow.pop %v3078
      %v3080 = vmul.f32 %v3028, 1.442695
      %v3081 = vpow.pop %v3080
      %v3082 = vmul.f32 %v3029, 1.442695
      %v3083 = vpow.pop %v3082
      %v3084 = vmul.f32 %v3030, 1.442695
      %v3085 = vpow.pop %v3084
      %v3086 = vmul.f32 %v3031, 1.442695
      %v3087 = vpow.pop %v3086
      %v3088 = vmul.f32 %v3032, 1.442695
      %v3089 = vpow.pop %v3088
      %v3090 = vmul.f32 %v3033, 1.442695
      %v3091 = vpow.pop %v3090
      %v3092 = vmul.f32 %v3034, 1.442695
      %v3093 = vpow.pop %v3092
      %v3094 = vmul.f32 %v3035, 1.442695
      %v3095 = vpow.pop %v3094
      %v3096 = vmul.f32 %v3036, 1.442695
      %v3097 = vpow.pop %v3096
      %v3098 = vmul.f32 %v3037, 1.442695
      %v3099 = vpow.pop %v3098
      %v3100 = vmul.f32 %v3038, 1.442695
      %v3101 = vpow.pop %v3100
      %v3102 = vmul.f32 %v3039, 1.442695
      %v3103 = vpow.pop %v3102
      %v3104 = vmul.f32 %v3040, 1.442695
      %v3105 = vpow.pop %v3104
      %v3106 = vmul.f32 %v3041, 1.442695
      %v3107 = vpow.pop %v3106
      %v3108 = vmul.f32 %v3042, 1.442695
      %v3109 = vpow.pop %v3108
      %v3110 = vmul.f32 %v3043, 1.442695
      %v3111 = vpow.pop %v3110
      %v3112 = vmul.f32 %v3044, 1.442695
      %v3113 = vpow.pop %v3112
      %v3114 = vmul.f32 %v3045, 1.442695
      %v3115 = vpow.pop %v3114
      %v3116 = vmul.f32 %v3046, 1.442695
      %v3117 = vpow.pop %v3116
      %v3118 = vmul.f32 %v3047, 1.442695
      %v3119 = vpow.pop %v3118
      %v3120 = vmul.f32 %v3048, 1.442695
      %v3121 = vpow.pop %v3120
      %v3122 = vmul.f32 %v3049, 1.442695
      %v3123 = vpow.pop %v3122
      %v3124 = vmul.f32 %v3050, 1.442695
      %v3125 = vpow.pop %v3124
      %v3126 = vmul.f32 %v3051, 1.442695
      %v3127 = vpow.pop %v3126
      %v3128 = vadd.f32 %v3053, 1.0
      %v3129 = vadd.f32 %v3055, 1.0
      %v3130 = vadd.f32 %v3057, 1.0
      %v3131 = vadd.f32 %v3059, 1.0
      %v3132 = vadd.f32 %v3061, 1.0
      %v3133 = vadd.f32 %v3063, 1.0
      %v3134 = vadd.f32 %v3065, 1.0
      %v3135 = vadd.f32 %v3067, 1.0
      %v3136 = vadd.f32 %v3069, 1.0
      %v3137 = vadd.f32 %v3071, 1.0
      %v3138 = vadd.f32 %v3073, 1.0
      %v3139 = vadd.f32 %v3075, 1.0
      %v3140 = vadd.f32 %v3077, 1.0
      %v3141 = vadd.f32 %v3079, 1.0
      %v3142 = vadd.f32 %v3081, 1.0
      %v3143 = vadd.f32 %v3083, 1.0
      %v3144 = vadd.f32 %v3085, 1.0
      %v3145 = vadd.f32 %v3087, 1.0
      %v3146 = vadd.f32 %v3089, 1.0
      %v3147 = vadd.f32 %v3091, 1.0
      %v3148 = vadd.f32 %v3093, 1.0
      %v3149 = vadd.f32 %v3095, 1.0
      %v3150 = vadd.f32 %v3097, 1.0
      %v3151 = vadd.f32 %v3099, 1.0
      %v3152 = vadd.f32 %v3101, 1.0
      %v3153 = vadd.f32 %v3103, 1.0
      %v3154 = vadd.f32 %v3105, 1.0
      %v3155 = vadd.f32 %v3107, 1.0
      %v3156 = vadd.f32 %v3109, 1.0
      %v3157 = vadd.f32 %v3111, 1.0
      %v3158 = vadd.f32 %v3113, 1.0
      %v3159 = vadd.f32 %v3115, 1.0
      %v3160 = vadd.f32 %v3117, 1.0
      %v3161 = vadd.f32 %v3119, 1.0
      %v3162 = vadd.f32 %v3121, 1.0
      %v3163 = vadd.f32 %v3123, 1.0
      %v3164 = vadd.f32 %v3125, 1.0
      %v3165 = vadd.f32 %v3127, 1.0
      %v3166 = vrcp.pop %v3128
      %v3167 = vmul.f32 1.0, %v3166
      %v3168 = vrcp.pop %v3129
      %v3169 = vmul.f32 1.0, %v3168
      %v3170 = vrcp.pop %v3130
      %v3171 = vmul.f32 1.0, %v3170
      %v3172 = vrcp.pop %v3131
      %v3173 = vmul.f32 1.0, %v3172
      %v3174 = vrcp.pop %v3132
      %v3175 = vmul.f32 1.0, %v3174
      %v3176 = vrcp.pop %v3133
      %v3177 = vmul.f32 1.0, %v3176
      %v3178 = vrcp.pop %v3134
      %v3179 = vmul.f32 1.0, %v3178
      %v3180 = vrcp.pop %v3135
      %v3181 = vmul.f32 1.0, %v3180
      %v3182 = vrcp.pop %v3136
      %v3183 = vmul.f32 1.0, %v3182
      %v3184 = vrcp.pop %v3137
      %v3185 = vmul.f32 1.0, %v3184
      %v3186 = vrcp.pop %v3138
      %v3187 = vmul.f32 1.0, %v3186
      %v3188 = vrcp.pop %v3139
      %v3189 = vmul.f32 1.0, %v3188
      %v3190 = vrcp.pop %v3140
      %v3191 = vmul.f32 1.0, %v3190
      %v3192 = vrcp.pop %v3141
      %v3193 = vmul.f32 1.0, %v3192
      %v3194 = vrcp.pop %v3142
      %v3195 = vmul.f32 1.0, %v3194
      %v3196 = vrcp.pop %v3143
      %v3197 = vmul.f32 1.0, %v3196
      %v3198 = vrcp.pop %v3144
      %v3199 = vmul.f32 1.0, %v3198
      %v3200 = vrcp.pop %v3145
      %v3201 = vmul.f32 1.0, %v3200
      %v3202 = vrcp.pop %v3146
      %v3203 = vmul.f32 1.0, %v3202
      %v3204 = vrcp.pop %v3147
      %v3205 = vmul.f32 1.0, %v3204
      %v3206 = vrcp.pop %v3148
      %v3207 = vmul.f32 1.0, %v3206
      %v3208 = vrcp.pop %v3149
      %v3209 = vmul.f32 1.0, %v3208
      %v3210 = vrcp.pop %v3150
      %v3211 = vmul.f32 1.0, %v3210
      %v3212 = vrcp.pop %v3151
      %v3213 = vmul.f32 1.0, %v3212
      %v3214 = vrcp.pop %v3152
      %v3215 = vmul.f32 1.0, %v3214
      %v3216 = vrcp.pop %v3153
      %v3217 = vmul.f32 1.0, %v3216
      %v3218 = vrcp.pop %v3154
      %v3219 = vmul.f32 1.0, %v3218
      %v3220 = vrcp.pop %v3155
      %v3221 = vmul.f32 1.0, %v3220
      %v3222 = vrcp.pop %v3156
      %v3223 = vmul.f32 1.0, %v3222
      %v3224 = vrcp.pop %v3157
      %v3225 = vmul.f32 1.0, %v3224
      %v3226 = vrcp.pop %v3158
      %v3227 = vmul.f32 1.0, %v3226
      %v3228 = vrcp.pop %v3159
      %v3229 = vmul.f32 1.0, %v3228
      %v3230 = vrcp.pop %v3160
      %v3231 = vmul.f32 1.0, %v3230
      %v3232 = vrcp.pop %v3161
      %v3233 = vmul.f32 1.0, %v3232
      %v3234 = vrcp.pop %v3162
      %v3235 = vmul.f32 1.0, %v3234
      %v3236 = vrcp.pop %v3163
      %v3237 = vmul.f32 1.0, %v3236
      %v3238 = vrcp.pop %v3164
      %v3239 = vmul.f32 1.0, %v3238
      %v3240 = vrcp.pop %v3165
      %v3241 = vmul.f32 1.0, %v3240
      %v3242 = vadd.f32 %v2174, %v3167
      %v3243 = vadd.f32 %v2176, %v3169
      %v3244 = vadd.f32 %v2178, %v3171
      %v3245 = vadd.f32 %v2180, %v3173
      %v3246 = vadd.f32 %v2182, %v3175
      %v3247 = vadd.f32 %v2184, %v3177
      %v3248 = vadd.f32 %v2186, %v3179
      %v3249 = vadd.f32 %v2188, %v3181
      %v3250 = vadd.f32 %v2190, %v3183
      %v3251 = vadd.f32 %v2192, %v3185
      %v3252 = vadd.f32 %v2194, %v3187
      %v3253 = vadd.f32 %v2196, %v3189
      %v3254 = vadd.f32 %v2198, %v3191
      %v3255 = vadd.f32 %v2200, %v3193
      %v3256 = vadd.f32 %v2202, %v3195
      %v3257 = vadd.f32 %v2204, %v3197
      %v3258 = vadd.f32 %v2206, %v3199
      %v3259 = vadd.f32 %v2208, %v3201
      %v3260 = vadd.f32 %v2210, %v3203
      %v3261 = vadd.f32 %v2212, %v3205
      %v3262 = vadd.f32 %v2214, %v3207
      %v3263 = vadd.f32 %v2216, %v3209
      %v3264 = vadd.f32 %v2218, %v3211
      %v3265 = vadd.f32 %v2220, %v3213
      %v3266 = vadd.f32 %v2222, %v3215
      %v3267 = vadd.f32 %v2224, %v3217
      %v3268 = vadd.f32 %v2226, %v3219
      %v3269 = vadd.f32 %v2228, %v3221
      %v3270 = vadd.f32 %v2230, %v3223
      %v3271 = vadd.f32 %v2232, %v3225
      %v3272 = vadd.f32 %v2234, %v3227
      %v3273 = vadd.f32 %v2236, %v3229
      %v3274 = vadd.f32 %v2238, %v3231
      %v3275 = vadd.f32 %v2240, %v3233
      %v3276 = vadd.f32 %v2242, %v3235
      %v3277 = vadd.f32 %v2244, %v3237
      %v3278 = vadd.f32 %v2246, %v3239
      %v3279 = vadd.f32 %v2248, %v3241
      %3281 = vset.pattern.permute.xlu0 0
      %3282 = vperm.xlu0 %3281, %v2174
      %v3283 = vpop.permute.xlu0 %3282
      %3286 = vset.pattern.permute.xlu0 0
      %3287 = vperm.xlu0 %3286, %v2176
      %v3288 = vpop.permute.xlu0 %3287
      %3291 = vset.pattern.permute.xlu0 0
      %3292 = vperm.xlu0 %3291, %v2178
      %v3293 = vpop.permute.xlu0 %3292
      %3296 = vset.pattern.permute.xlu0 0
      %3297 = vperm.xlu0 %3296, %v2180
      %v3298 = vpop.permute.xlu0 %3297
      %3301 = vset.pattern.permute.xlu0 0
      %3302 = vperm.xlu0 %3301, %v2182
      %v3303 = vpop.permute.xlu0 %3302
      %3306 = vset.pattern.permute.xlu0 0
      %3307 = vperm.xlu0 %3306, %v2184
      %v3308 = vpop.permute.xlu0 %3307
      %3311 = vset.pattern.permute.xlu0 0
      %3312 = vperm.xlu0 %3311, %v2186
      %v3313 = vpop.permute.xlu0 %3312
      %3316 = vset.pattern.permute.xlu0 0
      %3317 = vperm.xlu0 %3316, %v2188
      %v3318 = vpop.permute.xlu0 %3317
      %3321 = vset.pattern.permute.xlu0 0
      %3322 = vperm.xlu0 %3321, %v2190
      %v3323 = vpop.permute.xlu0 %3322
      %3326 = vset.pattern.permute.xlu0 0
      %3327 = vperm.xlu0 %3326, %v2192
      %v3328 = vpop.permute.xlu0 %3327
      %3331 = vset.pattern.permute.xlu0 0
      %3332 = vperm.xlu0 %3331, %v2194
      %v3333 = vpop.permute.xlu0 %3332
      %3336 = vset.pattern.permute.xlu0 0
      %3337 = vperm.xlu0 %3336, %v2196
      %v3338 = vpop.permute.xlu0 %3337
      %3341 = vset.pattern.permute.xlu0 0
      %3342 = vperm.xlu0 %3341, %v2198
      %v3343 = vpop.permute.xlu0 %3342
      %3346 = vset.pattern.permute.xlu0 0
      %3347 = vperm.xlu0 %3346, %v2200
      %v3348 = vpop.permute.xlu0 %3347
      %3351 = vset.pattern.permute.xlu0 0
      %3352 = vperm.xlu0 %3351, %v2202
      %v3353 = vpop.permute.xlu0 %3352
      %3356 = vset.pattern.permute.xlu0 0
      %3357 = vperm.xlu0 %3356, %v2204
      %v3358 = vpop.permute.xlu0 %3357
      %3361 = vset.pattern.permute.xlu0 0
      %3362 = vperm.xlu0 %3361, %v2206
      %v3363 = vpop.permute.xlu0 %3362
      %3366 = vset.pattern.permute.xlu0 0
      %3367 = vperm.xlu0 %3366, %v2208
      %v3368 = vpop.permute.xlu0 %3367
      %3371 = vset.pattern.permute.xlu0 0
      %3372 = vperm.xlu0 %3371, %v2210
      %v3373 = vpop.permute.xlu0 %3372
      %3376 = vset.pattern.permute.xlu0 0
      %3377 = vperm.xlu0 %3376, %v2212
      %v3378 = vpop.permute.xlu0 %3377
      %3381 = vset.pattern.permute.xlu0 0
      %3382 = vperm.xlu0 %3381, %v2214
      %v3383 = vpop.permute.xlu0 %3382
      %3386 = vset.pattern.permute.xlu0 0
      %3387 = vperm.xlu0 %3386, %v2216
      %v3388 = vpop.permute.xlu0 %3387
      %3391 = vset.pattern.permute.xlu0 0
      %3392 = vperm.xlu0 %3391, %v2218
      %v3393 = vpop.permute.xlu0 %3392
      %3396 = vset.pattern.permute.xlu0 0
      %3397 = vperm.xlu0 %3396, %v2220
      %v3398 = vpop.permute.xlu0 %3397
      %3401 = vset.pattern.permute.xlu0 0
      %3402 = vperm.xlu0 %3401, %v2222
      %v3403 = vpop.permute.xlu0 %3402
      %3406 = vset.pattern.permute.xlu0 0
      %3407 = vperm.xlu0 %3406, %v2224
      %v3408 = vpop.permute.xlu0 %3407
      %3411 = vset.pattern.permute.xlu0 0
      %3412 = vperm.xlu0 %3411, %v2226
      %v3413 = vpop.permute.xlu0 %3412
      %3416 = vset.pattern.permute.xlu0 0
      %3417 = vperm.xlu0 %3416, %v2228
      %v3418 = vpop.permute.xlu0 %3417
      %3421 = vset.pattern.permute.xlu0 0
      %3422 = vperm.xlu0 %3421, %v2230
      %v3423 = vpop.permute.xlu0 %3422
      %3426 = vset.pattern.permute.xlu0 0
      %3427 = vperm.xlu0 %3426, %v2232
      %v3428 = vpop.permute.xlu0 %3427
      %3431 = vset.pattern.permute.xlu0 0
      %3432 = vperm.xlu0 %3431, %v2234
      %v3433 = vpop.permute.xlu0 %3432
      %3436 = vset.pattern.permute.xlu0 0
      %3437 = vperm.xlu0 %3436, %v2236
      %v3438 = vpop.permute.xlu0 %3437
      %3441 = vset.pattern.permute.xlu0 0
      %3442 = vperm.xlu0 %3441, %v2238
      %v3443 = vpop.permute.xlu0 %3442
      %3446 = vset.pattern.permute.xlu0 0
      %3447 = vperm.xlu0 %3446, %v2240
      %v3448 = vpop.permute.xlu0 %3447
      %3451 = vset.pattern.permute.xlu0 0
      %3452 = vperm.xlu0 %3451, %v2242
      %v3453 = vpop.permute.xlu0 %3452
      %3456 = vset.pattern.permute.xlu0 0
      %3457 = vperm.xlu0 %3456, %v2244
      %v3458 = vpop.permute.xlu0 %3457
      %3461 = vset.pattern.permute.xlu0 0
      %3462 = vperm.xlu0 %3461, %v2246
      %v3463 = vpop.permute.xlu0 %3462
      %3466 = vset.pattern.permute.xlu0 0
      %3467 = vperm.xlu0 %3466, %v2248
      %v3468 = vpop.permute.xlu0 %3467
      %v3470 = vmul.f32 %v225, %v3283
      %v3471 = vmul.f32 %v226, %v3283
      %v3472 = vmul.f32 %v227, %v3288
      %v3473 = vmul.f32 %v228, %v3288
      %v3474 = vmul.f32 %v229, %v3293
      %v3475 = vmul.f32 %v230, %v3293
      %v3476 = vmul.f32 %v231, %v3298
      %v3477 = vmul.f32 %v232, %v3298
      %v3478 = vmul.f32 %v233, %v3303
      %v3479 = vmul.f32 %v234, %v3303
      %v3480 = vmul.f32 %v235, %v3308
      %v3481 = vmul.f32 %v236, %v3308
      %v3482 = vmul.f32 %v237, %v3313
      %v3483 = vmul.f32 %v238, %v3313
      %v3484 = vmul.f32 %v239, %v3318
      %v3485 = vmul.f32 %v240, %v3318
      %v3486 = vmul.f32 %v241, %v3323
      %v3487 = vmul.f32 %v242, %v3323
      %v3488 = vmul.f32 %v243, %v3328
      %v3489 = vmul.f32 %v244, %v3328
      %v3490 = vmul.f32 %v245, %v3333
      %v3491 = vmul.f32 %v246, %v3333
      %v3492 = vmul.f32 %v247, %v3338
      %v3493 = vmul.f32 %v248, %v3338
      %v3494 = vmul.f32 %v249, %v3343
      %v3495 = vmul.f32 %v250, %v3343
      %v3496 = vmul.f32 %v251, %v3348
      %v3497 = vmul.f32 %v252, %v3348
      %v3498 = vmul.f32 %v253, %v3353
      %v3499 = vmul.f32 %v254, %v3353
      %v3500 = vmul.f32 %v255, %v3358
      %v3501 = vmul.f32 %v256, %v3358
      %v3502 = vmul.f32 %v257, %v3363
      %v3503 = vmul.f32 %v258, %v3363
      %v3504 = vmul.f32 %v259, %v3368
      %v3505 = vmul.f32 %v260, %v3368
      %v3506 = vmul.f32 %v261, %v3373
      %v3507 = vmul.f32 %v262, %v3373
      %v3508 = vmul.f32 %v263, %v3378
      %v3509 = vmul.f32 %v264, %v3378
      %v3510 = vmul.f32 %v265, %v3383
      %v3511 = vmul.f32 %v266, %v3383
      %v3512 = vmul.f32 %v267, %v3388
      %v3513 = vmul.f32 %v268, %v3388
      %v3514 = vmul.f32 %v269, %v3393
      %v3515 = vmul.f32 %v270, %v3393
      %v3516 = vmul.f32 %v271, %v3398
      %v3517 = vmul.f32 %v272, %v3398
      %v3518 = vmul.f32 %v273, %v3403
      %v3519 = vmul.f32 %v274, %v3403
      %v3520 = vmul.f32 %v275, %v3408
      %v3521 = vmul.f32 %v276, %v3408
      %v3522 = vmul.f32 %v277, %v3413
      %v3523 = vmul.f32 %v278, %v3413
      %v3524 = vmul.f32 %v279, %v3418
      %v3525 = vmul.f32 %v280, %v3418
      %v3526 = vmul.f32 %v281, %v3423
      %v3527 = vmul.f32 %v282, %v3423
      %v3528 = vmul.f32 %v283, %v3428
      %v3529 = vmul.f32 %v284, %v3428
      %v3530 = vmul.f32 %v285, %v3433
      %v3531 = vmul.f32 %v286, %v3433
      %v3532 = vmul.f32 %v287, %v3438
      %v3533 = vmul.f32 %v288, %v3438
      %v3534 = vmul.f32 %v289, %v3443
      %v3535 = vmul.f32 %v290, %v3443
      %v3536 = vmul.f32 %v291, %v3448
      %v3537 = vmul.f32 %v292, %v3448
      %v3538 = vmul.f32 %v293, %v3453
      %v3539 = vmul.f32 %v294, %v3453
      %v3540 = vmul.f32 %v295, %v3458
      %v3541 = vmul.f32 %v296, %v3458
      %v3542 = vmul.f32 %v297, %v3463
      %v3543 = vmul.f32 %v298, %v3463
      %v3544 = vmul.f32 %v299, %v3468
      %v3545 = vmul.f32 %v300, %v3468
      %3547 = vset.pattern.permute.xlu0 0
      %3548 = vperm.xlu0 %3547, %v3167
      %v3549 = vpop.permute.xlu0 %3548
      %3552 = vset.pattern.permute.xlu0 0
      %3553 = vperm.xlu0 %3552, %v3169
      %v3554 = vpop.permute.xlu0 %3553
      %3557 = vset.pattern.permute.xlu0 0
      %3558 = vperm.xlu0 %3557, %v3171
      %v3559 = vpop.permute.xlu0 %3558
      %3562 = vset.pattern.permute.xlu0 0
      %3563 = vperm.xlu0 %3562, %v3173
      %v3564 = vpop.permute.xlu0 %3563
      %3567 = vset.pattern.permute.xlu0 0
      %3568 = vperm.xlu0 %3567, %v3175
      %v3569 = vpop.permute.xlu0 %3568
      %3572 = vset.pattern.permute.xlu0 0
      %3573 = vperm.xlu0 %3572, %v3177
      %v3574 = vpop.permute.xlu0 %3573
      %3577 = vset.pattern.permute.xlu0 0
      %3578 = vperm.xlu0 %3577, %v3179
      %v3579 = vpop.permute.xlu0 %3578
      %3582 = vset.pattern.permute.xlu0 0
      %3583 = vperm.xlu0 %3582, %v3181
      %v3584 = vpop.permute.xlu0 %3583
      %3587 = vset.pattern.permute.xlu0 0
      %3588 = vperm.xlu0 %3587, %v3183
      %v3589 = vpop.permute.xlu0 %3588
      %3592 = vset.pattern.permute.xlu0 0
      %3593 = vperm.xlu0 %3592, %v3185
      %v3594 = vpop.permute.xlu0 %3593
      %3597 = vset.pattern.permute.xlu0 0
      %3598 = vperm.xlu0 %3597, %v3187
      %v3599 = vpop.permute.xlu0 %3598
      %3602 = vset.pattern.permute.xlu0 0
      %3603 = vperm.xlu0 %3602, %v3189
      %v3604 = vpop.permute.xlu0 %3603
      %3607 = vset.pattern.permute.xlu0 0
      %3608 = vperm.xlu0 %3607, %v3191
      %v3609 = vpop.permute.xlu0 %3608
      %3612 = vset.pattern.permute.xlu0 0
      %3613 = vperm.xlu0 %3612, %v3193
      %v3614 = vpop.permute.xlu0 %3613
      %3617 = vset.pattern.permute.xlu0 0
      %3618 = vperm.xlu0 %3617, %v3195
      %v3619 = vpop.permute.xlu0 %3618
      %3622 = vset.pattern.permute.xlu0 0
      %3623 = vperm.xlu0 %3622, %v3197
      %v3624 = vpop.permute.xlu0 %3623
      %3627 = vset.pattern.permute.xlu0 0
      %3628 = vperm.xlu0 %3627, %v3199
      %v3629 = vpop.permute.xlu0 %3628
      %3632 = vset.pattern.permute.xlu0 0
      %3633 = vperm.xlu0 %3632, %v3201
      %v3634 = vpop.permute.xlu0 %3633
      %3637 = vset.pattern.permute.xlu0 0
      %3638 = vperm.xlu0 %3637, %v3203
      %v3639 = vpop.permute.xlu0 %3638
      %3642 = vset.pattern.permute.xlu0 0
      %3643 = vperm.xlu0 %3642, %v3205
      %v3644 = vpop.permute.xlu0 %3643
      %3647 = vset.pattern.permute.xlu0 0
      %3648 = vperm.xlu0 %3647, %v3207
      %v3649 = vpop.permute.xlu0 %3648
      %3652 = vset.pattern.permute.xlu0 0
      %3653 = vperm.xlu0 %3652, %v3209
      %v3654 = vpop.permute.xlu0 %3653
      %3657 = vset.pattern.permute.xlu0 0
      %3658 = vperm.xlu0 %3657, %v3211
      %v3659 = vpop.permute.xlu0 %3658
      %3662 = vset.pattern.permute.xlu0 0
      %3663 = vperm.xlu0 %3662, %v3213
      %v3664 = vpop.permute.xlu0 %3663
      %3667 = vset.pattern.permute.xlu0 0
      %3668 = vperm.xlu0 %3667, %v3215
      %v3669 = vpop.permute.xlu0 %3668
      %3672 = vset.pattern.permute.xlu0 0
      %3673 = vperm.xlu0 %3672, %v3217
      %v3674 = vpop.permute.xlu0 %3673
      %3677 = vset.pattern.permute.xlu0 0
      %3678 = vperm.xlu0 %3677, %v3219
      %v3679 = vpop.permute.xlu0 %3678
      %3682 = vset.pattern.permute.xlu0 0
      %3683 = vperm.xlu0 %3682, %v3221
      %v3684 = vpop.permute.xlu0 %3683
      %3687 = vset.pattern.permute.xlu0 0
      %3688 = vperm.xlu0 %3687, %v3223
      %v3689 = vpop.permute.xlu0 %3688
      %3692 = vset.pattern.permute.xlu0 0
      %3693 = vperm.xlu0 %3692, %v3225
      %v3694 = vpop.permute.xlu0 %3693
      %3697 = vset.pattern.permute.xlu0 0
      %3698 = vperm.xlu0 %3697, %v3227
      %v3699 = vpop.permute.xlu0 %3698
      %3702 = vset.pattern.permute.xlu0 0
      %3703 = vperm.xlu0 %3702, %v3229
      %v3704 = vpop.permute.xlu0 %3703
      %3707 = vset.pattern.permute.xlu0 0
      %3708 = vperm.xlu0 %3707, %v3231
      %v3709 = vpop.permute.xlu0 %3708
      %3712 = vset.pattern.permute.xlu0 0
      %3713 = vperm.xlu0 %3712, %v3233
      %v3714 = vpop.permute.xlu0 %3713
      %3717 = vset.pattern.permute.xlu0 0
      %3718 = vperm.xlu0 %3717, %v3235
      %v3719 = vpop.permute.xlu0 %3718
      %3722 = vset.pattern.permute.xlu0 0
      %3723 = vperm.xlu0 %3722, %v3237
      %v3724 = vpop.permute.xlu0 %3723
      %3727 = vset.pattern.permute.xlu0 0
      %3728 = vperm.xlu0 %3727, %v3239
      %v3729 = vpop.permute.xlu0 %3728
      %3732 = vset.pattern.permute.xlu0 0
      %3733 = vperm.xlu0 %3732, %v3241
      %v3734 = vpop.permute.xlu0 %3733
      %v3736 = vmul.f32 %v454, %v3549
      %v3737 = vmul.f32 %v455, %v3549
      %v3738 = vmul.f32 %v456, %v3554
      %v3739 = vmul.f32 %v457, %v3554
      %v3740 = vmul.f32 %v458, %v3559
      %v3741 = vmul.f32 %v459, %v3559
      %v3742 = vmul.f32 %v460, %v3564
      %v3743 = vmul.f32 %v461, %v3564
      %v3744 = vmul.f32 %v462, %v3569
      %v3745 = vmul.f32 %v463, %v3569
      %v3746 = vmul.f32 %v464, %v3574
      %v3747 = vmul.f32 %v465, %v3574
      %v3748 = vmul.f32 %v466, %v3579
      %v3749 = vmul.f32 %v467, %v3579
      %v3750 = vmul.f32 %v468, %v3584
      %v3751 = vmul.f32 %v469, %v3584
      %v3752 = vmul.f32 %v470, %v3589
      %v3753 = vmul.f32 %v471, %v3589
      %v3754 = vmul.f32 %v472, %v3594
      %v3755 = vmul.f32 %v473, %v3594
      %v3756 = vmul.f32 %v474, %v3599
      %v3757 = vmul.f32 %v475, %v3599
      %v3758 = vmul.f32 %v476, %v3604
      %v3759 = vmul.f32 %v477, %v3604
      %v3760 = vmul.f32 %v478, %v3609
      %v3761 = vmul.f32 %v479, %v3609
      %v3762 = vmul.f32 %v480, %v3614
      %v3763 = vmul.f32 %v481, %v3614
      %v3764 = vmul.f32 %v482, %v3619
      %v3765 = vmul.f32 %v483, %v3619
      %v3766 = vmul.f32 %v484, %v3624
      %v3767 = vmul.f32 %v485, %v3624
      %v3768 = vmul.f32 %v486, %v3629
      %v3769 = vmul.f32 %v487, %v3629
      %v3770 = vmul.f32 %v488, %v3634
      %v3771 = vmul.f32 %v489, %v3634
      %v3772 = vmul.f32 %v490, %v3639
      %v3773 = vmul.f32 %v491, %v3639
      %v3774 = vmul.f32 %v492, %v3644
      %v3775 = vmul.f32 %v493, %v3644
      %v3776 = vmul.f32 %v494, %v3649
      %v3777 = vmul.f32 %v495, %v3649
      %v3778 = vmul.f32 %v496, %v3654
      %v3779 = vmul.f32 %v497, %v3654
      %v3780 = vmul.f32 %v498, %v3659
      %v3781 = vmul.f32 %v499, %v3659
      %v3782 = vmul.f32 %v500, %v3664
      %v3783 = vmul.f32 %v501, %v3664
      %v3784 = vmul.f32 %v502, %v3669
      %v3785 = vmul.f32 %v503, %v3669
      %v3786 = vmul.f32 %v504, %v3674
      %v3787 = vmul.f32 %v505, %v3674
      %v3788 = vmul.f32 %v506, %v3679
      %v3789 = vmul.f32 %v507, %v3679
      %v3790 = vmul.f32 %v508, %v3684
      %v3791 = vmul.f32 %v509, %v3684
      %v3792 = vmul.f32 %v510, %v3689
      %v3793 = vmul.f32 %v511, %v3689
      %v3794 = vmul.f32 %v512, %v3694
      %v3795 = vmul.f32 %v513, %v3694
      %v3796 = vmul.f32 %v514, %v3699
      %v3797 = vmul.f32 %v515, %v3699
      %v3798 = vmul.f32 %v516, %v3704
      %v3799 = vmul.f32 %v517, %v3704
      %v3800 = vmul.f32 %v518, %v3709
      %v3801 = vmul.f32 %v519, %v3709
      %v3802 = vmul.f32 %v520, %v3714
      %v3803 = vmul.f32 %v521, %v3714
      %v3804 = vmul.f32 %v522, %v3719
      %v3805 = vmul.f32 %v523, %v3719
      %v3806 = vmul.f32 %v524, %v3724
      %v3807 = vmul.f32 %v525, %v3724
      %v3808 = vmul.f32 %v526, %v3729
      %v3809 = vmul.f32 %v527, %v3729
      %v3810 = vmul.f32 %v528, %v3734
      %v3811 = vmul.f32 %v529, %v3734
      %v3812 = vadd.f32 %v3470, %v3736
      %v3813 = vadd.f32 %v3471, %v3737
      %v3814 = vadd.f32 %v3472, %v3738
      %v3815 = vadd.f32 %v3473, %v3739
      %v3816 = vadd.f32 %v3474, %v3740
      %v3817 = vadd.f32 %v3475, %v3741
      %v3818 = vadd.f32 %v3476, %v3742
      %v3819 = vadd.f32 %v3477, %v3743
      %v3820 = vadd.f32 %v3478, %v3744
      %v3821 = vadd.f32 %v3479, %v3745
      %v3822 = vadd.f32 %v3480, %v3746
      %v3823 = vadd.f32 %v3481, %v3747
      %v3824 = vadd.f32 %v3482, %v3748
      %v3825 = vadd.f32 %v3483, %v3749
      %v3826 = vadd.f32 %v3484, %v3750
      %v3827 = vadd.f32 %v3485, %v3751
      %v3828 = vadd.f32 %v3486, %v3752
      %v3829 = vadd.f32 %v3487, %v3753
      %v3830 = vadd.f32 %v3488, %v3754
      %v3831 = vadd.f32 %v3489, %v3755
      %v3832 = vadd.f32 %v3490, %v3756
      %v3833 = vadd.f32 %v3491, %v3757
      %v3834 = vadd.f32 %v3492, %v3758
      %v3835 = vadd.f32 %v3493, %v3759
      %v3836 = vadd.f32 %v3494, %v3760
      %v3837 = vadd.f32 %v3495, %v3761
      %v3838 = vadd.f32 %v3496, %v3762
      %v3839 = vadd.f32 %v3497, %v3763
      %v3840 = vadd.f32 %v3498, %v3764
      %v3841 = vadd.f32 %v3499, %v3765
      %v3842 = vadd.f32 %v3500, %v3766
      %v3843 = vadd.f32 %v3501, %v3767
      %v3844 = vadd.f32 %v3502, %v3768
      %v3845 = vadd.f32 %v3503, %v3769
      %v3846 = vadd.f32 %v3504, %v3770
      %v3847 = vadd.f32 %v3505, %v3771
      %v3848 = vadd.f32 %v3506, %v3772
      %v3849 = vadd.f32 %v3507, %v3773
      %v3850 = vadd.f32 %v3508, %v3774
      %v3851 = vadd.f32 %v3509, %v3775
      %v3852 = vadd.f32 %v3510, %v3776
      %v3853 = vadd.f32 %v3511, %v3777
      %v3854 = vadd.f32 %v3512, %v3778
      %v3855 = vadd.f32 %v3513, %v3779
      %v3856 = vadd.f32 %v3514, %v3780
      %v3857 = vadd.f32 %v3515, %v3781
      %v3858 = vadd.f32 %v3516, %v3782
      %v3859 = vadd.f32 %v3517, %v3783
      %v3860 = vadd.f32 %v3518, %v3784
      %v3861 = vadd.f32 %v3519, %v3785
      %v3862 = vadd.f32 %v3520, %v3786
      %v3863 = vadd.f32 %v3521, %v3787
      %v3864 = vadd.f32 %v3522, %v3788
      %v3865 = vadd.f32 %v3523, %v3789
      %v3866 = vadd.f32 %v3524, %v3790
      %v3867 = vadd.f32 %v3525, %v3791
      %v3868 = vadd.f32 %v3526, %v3792
      %v3869 = vadd.f32 %v3527, %v3793
      %v3870 = vadd.f32 %v3528, %v3794
      %v3871 = vadd.f32 %v3529, %v3795
      %v3872 = vadd.f32 %v3530, %v3796
      %v3873 = vadd.f32 %v3531, %v3797
      %v3874 = vadd.f32 %v3532, %v3798
      %v3875 = vadd.f32 %v3533, %v3799
      %v3876 = vadd.f32 %v3534, %v3800
      %v3877 = vadd.f32 %v3535, %v3801
      %v3878 = vadd.f32 %v3536, %v3802
      %v3879 = vadd.f32 %v3537, %v3803
      %v3880 = vadd.f32 %v3538, %v3804
      %v3881 = vadd.f32 %v3539, %v3805
      %v3882 = vadd.f32 %v3540, %v3806
      %v3883 = vadd.f32 %v3541, %v3807
      %v3884 = vadd.f32 %v3542, %v3808
      %v3885 = vadd.f32 %v3543, %v3809
      %v3886 = vadd.f32 %v3544, %v3810
      %v3887 = vadd.f32 %v3545, %v3811
      %3889 = vset.pattern.permute.xlu0 1
      %3890 = vperm.xlu0 %3889, %v3242
      %v3891 = vpop.permute.xlu0 %3890
      %3894 = vset.pattern.permute.xlu0 1
      %3895 = vperm.xlu0 %3894, %v3243
      %v3896 = vpop.permute.xlu0 %3895
      %3899 = vset.pattern.permute.xlu0 1
      %3900 = vperm.xlu0 %3899, %v3244
      %v3901 = vpop.permute.xlu0 %3900
      %3904 = vset.pattern.permute.xlu0 1
      %3905 = vperm.xlu0 %3904, %v3245
      %v3906 = vpop.permute.xlu0 %3905
      %3909 = vset.pattern.permute.xlu0 1
      %3910 = vperm.xlu0 %3909, %v3246
      %v3911 = vpop.permute.xlu0 %3910
      %3914 = vset.pattern.permute.xlu0 1
      %3915 = vperm.xlu0 %3914, %v3247
      %v3916 = vpop.permute.xlu0 %3915
      %3919 = vset.pattern.permute.xlu0 1
      %3920 = vperm.xlu0 %3919, %v3248
      %v3921 = vpop.permute.xlu0 %3920
      %3924 = vset.pattern.permute.xlu0 1
      %3925 = vperm.xlu0 %3924, %v3249
      %v3926 = vpop.permute.xlu0 %3925
      %3929 = vset.pattern.permute.xlu0 1
      %3930 = vperm.xlu0 %3929, %v3250
      %v3931 = vpop.permute.xlu0 %3930
      %3934 = vset.pattern.permute.xlu0 1
      %3935 = vperm.xlu0 %3934, %v3251
      %v3936 = vpop.permute.xlu0 %3935
      %3939 = vset.pattern.permute.xlu0 1
      %3940 = vperm.xlu0 %3939, %v3252
      %v3941 = vpop.permute.xlu0 %3940
      %3944 = vset.pattern.permute.xlu0 1
      %3945 = vperm.xlu0 %3944, %v3253
      %v3946 = vpop.permute.xlu0 %3945
      %3949 = vset.pattern.permute.xlu0 1
      %3950 = vperm.xlu0 %3949, %v3254
      %v3951 = vpop.permute.xlu0 %3950
      %3954 = vset.pattern.permute.xlu0 1
      %3955 = vperm.xlu0 %3954, %v3255
      %v3956 = vpop.permute.xlu0 %3955
      %3959 = vset.pattern.permute.xlu0 1
      %3960 = vperm.xlu0 %3959, %v3256
      %v3961 = vpop.permute.xlu0 %3960
      %3964 = vset.pattern.permute.xlu0 1
      %3965 = vperm.xlu0 %3964, %v3257
      %v3966 = vpop.permute.xlu0 %3965
      %3969 = vset.pattern.permute.xlu0 1
      %3970 = vperm.xlu0 %3969, %v3258
      %v3971 = vpop.permute.xlu0 %3970
      %3974 = vset.pattern.permute.xlu0 1
      %3975 = vperm.xlu0 %3974, %v3259
      %v3976 = vpop.permute.xlu0 %3975
      %3979 = vset.pattern.permute.xlu0 1
      %3980 = vperm.xlu0 %3979, %v3260
      %v3981 = vpop.permute.xlu0 %3980
      %3984 = vset.pattern.permute.xlu0 1
      %3985 = vperm.xlu0 %3984, %v3261
      %v3986 = vpop.permute.xlu0 %3985
      %3989 = vset.pattern.permute.xlu0 1
      %3990 = vperm.xlu0 %3989, %v3262
      %v3991 = vpop.permute.xlu0 %3990
      %3994 = vset.pattern.permute.xlu0 1
      %3995 = vperm.xlu0 %3994, %v3263
      %v3996 = vpop.permute.xlu0 %3995
      %3999 = vset.pattern.permute.xlu0 1
      %4000 = vperm.xlu0 %3999, %v3264
      %v4001 = vpop.permute.xlu0 %4000
      %4004 = vset.pattern.permute.xlu0 1
      %4005 = vperm.xlu0 %4004, %v3265
      %v4006 = vpop.permute.xlu0 %4005
      %4009 = vset.pattern.permute.xlu0 1
      %4010 = vperm.xlu0 %4009, %v3266
      %v4011 = vpop.permute.xlu0 %4010
      %4014 = vset.pattern.permute.xlu0 1
      %4015 = vperm.xlu0 %4014, %v3267
      %v4016 = vpop.permute.xlu0 %4015
      %4019 = vset.pattern.permute.xlu0 1
      %4020 = vperm.xlu0 %4019, %v3268
      %v4021 = vpop.permute.xlu0 %4020
      %4024 = vset.pattern.permute.xlu0 1
      %4025 = vperm.xlu0 %4024, %v3269
      %v4026 = vpop.permute.xlu0 %4025
      %4029 = vset.pattern.permute.xlu0 1
      %4030 = vperm.xlu0 %4029, %v3270
      %v4031 = vpop.permute.xlu0 %4030
      %4034 = vset.pattern.permute.xlu0 1
      %4035 = vperm.xlu0 %4034, %v3271
      %v4036 = vpop.permute.xlu0 %4035
      %4039 = vset.pattern.permute.xlu0 1
      %4040 = vperm.xlu0 %4039, %v3272
      %v4041 = vpop.permute.xlu0 %4040
      %4044 = vset.pattern.permute.xlu0 1
      %4045 = vperm.xlu0 %4044, %v3273
      %v4046 = vpop.permute.xlu0 %4045
      %4049 = vset.pattern.permute.xlu0 1
      %4050 = vperm.xlu0 %4049, %v3274
      %v4051 = vpop.permute.xlu0 %4050
      %4054 = vset.pattern.permute.xlu0 1
      %4055 = vperm.xlu0 %4054, %v3275
      %v4056 = vpop.permute.xlu0 %4055
      %4059 = vset.pattern.permute.xlu0 1
      %4060 = vperm.xlu0 %4059, %v3276
      %v4061 = vpop.permute.xlu0 %4060
      %4064 = vset.pattern.permute.xlu0 1
      %4065 = vperm.xlu0 %4064, %v3277
      %v4066 = vpop.permute.xlu0 %4065
      %4069 = vset.pattern.permute.xlu0 1
      %4070 = vperm.xlu0 %4069, %v3278
      %v4071 = vpop.permute.xlu0 %4070
      %4074 = vset.pattern.permute.xlu0 1
      %4075 = vperm.xlu0 %4074, %v3279
      %v4076 = vpop.permute.xlu0 %4075
      %v4078 = vmul.f32 %v683, %v3891
      %v4079 = vmul.f32 %v684, %v3891
      %v4080 = vmul.f32 %v685, %v3896
      %v4081 = vmul.f32 %v686, %v3896
      %v4082 = vmul.f32 %v687, %v3901
      %v4083 = vmul.f32 %v688, %v3901
      %v4084 = vmul.f32 %v689, %v3906
      %v4085 = vmul.f32 %v690, %v3906
      %v4086 = vmul.f32 %v691, %v3911
      %v4087 = vmul.f32 %v692, %v3911
      %v4088 = vmul.f32 %v693, %v3916
      %v4089 = vmul.f32 %v694, %v3916
      %v4090 = vmul.f32 %v695, %v3921
      %v4091 = vmul.f32 %v696, %v3921
      %v4092 = vmul.f32 %v697, %v3926
      %v4093 = vmul.f32 %v698, %v3926
      %v4094 = vmul.f32 %v699, %v3931
      %v4095 = vmul.f32 %v700, %v3931
      %v4096 = vmul.f32 %v701, %v3936
      %v4097 = vmul.f32 %v702, %v3936
      %v4098 = vmul.f32 %v703, %v3941
      %v4099 = vmul.f32 %v704, %v3941
      %v4100 = vmul.f32 %v705, %v3946
      %v4101 = vmul.f32 %v706, %v3946
      %v4102 = vmul.f32 %v707, %v3951
      %v4103 = vmul.f32 %v708, %v3951
      %v4104 = vmul.f32 %v709, %v3956
      %v4105 = vmul.f32 %v710, %v3956
      %v4106 = vmul.f32 %v711, %v3961
      %v4107 = vmul.f32 %v712, %v3961
      %v4108 = vmul.f32 %v713, %v3966
      %v4109 = vmul.f32 %v714, %v3966
      %v4110 = vmul.f32 %v715, %v3971
      %v4111 = vmul.f32 %v716, %v3971
      %v4112 = vmul.f32 %v717, %v3976
      %v4113 = vmul.f32 %v718, %v3976
      %v4114 = vmul.f32 %v719, %v3981
      %v4115 = vmul.f32 %v720, %v3981
      %v4116 = vmul.f32 %v721, %v3986
      %v4117 = vmul.f32 %v722, %v3986
      %v4118 = vmul.f32 %v723, %v3991
      %v4119 = vmul.f32 %v724, %v3991
      %v4120 = vmul.f32 %v725, %v3996
      %v4121 = vmul.f32 %v726, %v3996
      %v4122 = vmul.f32 %v727, %v4001
      %v4123 = vmul.f32 %v728, %v4001
      %v4124 = vmul.f32 %v729, %v4006
      %v4125 = vmul.f32 %v730, %v4006
      %v4126 = vmul.f32 %v731, %v4011
      %v4127 = vmul.f32 %v732, %v4011
      %v4128 = vmul.f32 %v733, %v4016
      %v4129 = vmul.f32 %v734, %v4016
      %v4130 = vmul.f32 %v735, %v4021
      %v4131 = vmul.f32 %v736, %v4021
      %v4132 = vmul.f32 %v737, %v4026
      %v4133 = vmul.f32 %v738, %v4026
      %v4134 = vmul.f32 %v739, %v4031
      %v4135 = vmul.f32 %v740, %v4031
      %v4136 = vmul.f32 %v741, %v4036
      %v4137 = vmul.f32 %v742, %v4036
      %v4138 = vmul.f32 %v743, %v4041
      %v4139 = vmul.f32 %v744, %v4041
      %v4140 = vmul.f32 %v745, %v4046
      %v4141 = vmul.f32 %v746, %v4046
      %v4142 = vmul.f32 %v747, %v4051
      %v4143 = vmul.f32 %v748, %v4051
      %v4144 = vmul.f32 %v749, %v4056
      %v4145 = vmul.f32 %v750, %v4056
      %v4146 = vmul.f32 %v751, %v4061
      %v4147 = vmul.f32 %v752, %v4061
      %v4148 = vmul.f32 %v753, %v4066
      %v4149 = vmul.f32 %v754, %v4066
      %v4150 = vmul.f32 %v755, %v4071
      %v4151 = vmul.f32 %v756, %v4071
      %v4152 = vmul.f32 %v757, %v4076
      %v4153 = vmul.f32 %v758, %v4076
      %v4154 = vadd.f32 %v3812, %v4078
      %v4155 = vadd.f32 %v3813, %v4079
      %v4156 = vadd.f32 %v3814, %v4080
      %v4157 = vadd.f32 %v3815, %v4081
      %v4158 = vadd.f32 %v3816, %v4082
      %v4159 = vadd.f32 %v3817, %v4083
      %v4160 = vadd.f32 %v3818, %v4084
      %v4161 = vadd.f32 %v3819, %v4085
      %v4162 = vadd.f32 %v3820, %v4086
      %v4163 = vadd.f32 %v3821, %v4087
      %v4164 = vadd.f32 %v3822, %v4088
      %v4165 = vadd.f32 %v3823, %v4089
      %v4166 = vadd.f32 %v3824, %v4090
      %v4167 = vadd.f32 %v3825, %v4091
      %v4168 = vadd.f32 %v3826, %v4092
      %v4169 = vadd.f32 %v3827, %v4093
      %v4170 = vadd.f32 %v3828, %v4094
      %v4171 = vadd.f32 %v3829, %v4095
      %v4172 = vadd.f32 %v3830, %v4096
      %v4173 = vadd.f32 %v3831, %v4097
      %v4174 = vadd.f32 %v3832, %v4098
      %v4175 = vadd.f32 %v3833, %v4099
      %v4176 = vadd.f32 %v3834, %v4100
      %v4177 = vadd.f32 %v3835, %v4101
      %v4178 = vadd.f32 %v3836, %v4102
      %v4179 = vadd.f32 %v3837, %v4103
      %v4180 = vadd.f32 %v3838, %v4104
      %v4181 = vadd.f32 %v3839, %v4105
      %v4182 = vadd.f32 %v3840, %v4106
      %v4183 = vadd.f32 %v3841, %v4107
      %v4184 = vadd.f32 %v3842, %v4108
      %v4185 = vadd.f32 %v3843, %v4109
      %v4186 = vadd.f32 %v3844, %v4110
      %v4187 = vadd.f32 %v3845, %v4111
      %v4188 = vadd.f32 %v3846, %v4112
      %v4189 = vadd.f32 %v3847, %v4113
      %v4190 = vadd.f32 %v3848, %v4114
      %v4191 = vadd.f32 %v3849, %v4115
      %v4192 = vadd.f32 %v3850, %v4116
      %v4193 = vadd.f32 %v3851, %v4117
      %v4194 = vadd.f32 %v3852, %v4118
      %v4195 = vadd.f32 %v3853, %v4119
      %v4196 = vadd.f32 %v3854, %v4120
      %v4197 = vadd.f32 %v3855, %v4121
      %v4198 = vadd.f32 %v3856, %v4122
      %v4199 = vadd.f32 %v3857, %v4123
      %v4200 = vadd.f32 %v3858, %v4124
      %v4201 = vadd.f32 %v3859, %v4125
      %v4202 = vadd.f32 %v3860, %v4126
      %v4203 = vadd.f32 %v3861, %v4127
      %v4204 = vadd.f32 %v3862, %v4128
      %v4205 = vadd.f32 %v3863, %v4129
      %v4206 = vadd.f32 %v3864, %v4130
      %v4207 = vadd.f32 %v3865, %v4131
      %v4208 = vadd.f32 %v3866, %v4132
      %v4209 = vadd.f32 %v3867, %v4133
      %v4210 = vadd.f32 %v3868, %v4134
      %v4211 = vadd.f32 %v3869, %v4135
      %v4212 = vadd.f32 %v3870, %v4136
      %v4213 = vadd.f32 %v3871, %v4137
      %v4214 = vadd.f32 %v3872, %v4138
      %v4215 = vadd.f32 %v3873, %v4139
      %v4216 = vadd.f32 %v3874, %v4140
      %v4217 = vadd.f32 %v3875, %v4141
      %v4218 = vadd.f32 %v3876, %v4142
      %v4219 = vadd.f32 %v3877, %v4143
      %v4220 = vadd.f32 %v3878, %v4144
      %v4221 = vadd.f32 %v3879, %v4145
      %v4222 = vadd.f32 %v3880, %v4146
      %v4223 = vadd.f32 %v3881, %v4147
      %v4224 = vadd.f32 %v3882, %v4148
      %v4225 = vadd.f32 %v3883, %v4149
      %v4226 = vadd.f32 %v3884, %v4150
      %v4227 = vadd.f32 %v3885, %v4151
      %v4228 = vadd.f32 %v3886, %v4152
      %v4229 = vadd.f32 %v3887, %v4153
      %4230 = vst [vmem:[%s224] sm:$0xff] %v4154
      %4231 = vst [vmem:[%s224 + $0x8] sm:$0xff] %v4155
      %4232 = vst [vmem:[%s224 + $0x10] sm:$0xff] %v4156
      %4233 = vst [vmem:[%s224 + $0x18] sm:$0xff] %v4157
      %4234 = vst [vmem:[%s224 + $0x20] sm:$0xff] %v4158
      %4235 = vst [vmem:[%s224 + $0x28] sm:$0xff] %v4159
      %4236 = vst [vmem:[%s224 + $0x30] sm:$0xff] %v4160
      %4237 = vst [vmem:[%s224 + $0x38] sm:$0xff] %v4161
      %4238 = vst [vmem:[%s224 + $0x40] sm:$0xff] %v4162
      %4239 = vst [vmem:[%s224 + $0x48] sm:$0xff] %v4163
      %4240 = vst [vmem:[%s224 + $0x50] sm:$0xff] %v4164
      %4241 = vst [vmem:[%s224 + $0x58] sm:$0xff] %v4165
      %4242 = vst [vmem:[%s224 + $0x60] sm:$0xff] %v4166
      %4243 = vst [vmem:[%s224 + $0x68] sm:$0xff] %v4167
      %4244 = vst [vmem:[%s224 + $0x70] sm:$0xff] %v4168
      %4245 = vst [vmem:[%s224 + $0x78] sm:$0xff] %v4169
      %4246 = vst [vmem:[%s224 + $0x80] sm:$0xff] %v4170
      %4247 = vst [vmem:[%s224 + $0x88] sm:$0xff] %v4171
      %4248 = vst [vmem:[%s224 + $0x90] sm:$0xff] %v4172
      %4249 = vst [vmem:[%s224 + $0x98] sm:$0xff] %v4173
      %4250 = vst [vmem:[%s224 + $0xa0] sm:$0xff] %v4174
      %4251 = vst [vmem:[%s224 + $0xa8] sm:$0xff] %v4175
      %4252 = vst [vmem:[%s224 + $0xb0] sm:$0xff] %v4176
      %4253 = vst [vmem:[%s224 + $0xb8] sm:$0xff] %v4177
      %4254 = vst [vmem:[%s224 + $0xc0] sm:$0xff] %v4178
      %4255 = vst [vmem:[%s224 + $0xc8] sm:$0xff] %v4179
      %4256 = vst [vmem:[%s224 + $0xd0] sm:$0xff] %v4180
      %4257 = vst [vmem:[%s224 + $0xd8] sm:$0xff] %v4181
      %4258 = vst [vmem:[%s224 + $0xe0] sm:$0xff] %v4182
      %4259 = vst [vmem:[%s224 + $0xe8] sm:$0xff] %v4183
      %4260 = vst [vmem:[%s224 + $0xf0] sm:$0xff] %v4184
      %4261 = vst [vmem:[%s224 + $0xf8] sm:$0xff] %v4185
      %4262 = vst [vmem:[%s224 + $0x100] sm:$0xff] %v4186
      %4263 = vst [vmem:[%s224 + $0x108] sm:$0xff] %v4187
      %4264 = vst [vmem:[%s224 + $0x110] sm:$0xff] %v4188
      %4265 = vst [vmem:[%s224 + $0x118] sm:$0xff] %v4189
      %4266 = vst [vmem:[%s224 + $0x120] sm:$0xff] %v4190
      %4267 = vst [vmem:[%s224 + $0x128] sm:$0xff] %v4191
      %4268 = vst [vmem:[%s224 + $0x130] sm:$0xff] %v4192
      %4269 = vst [vmem:[%s224 + $0x138] sm:$0xff] %v4193
      %4270 = vst [vmem:[%s224 + $0x140] sm:$0xff] %v4194
      %4271 = vst [vmem:[%s224 + $0x148] sm:$0xff] %v4195
      %4272 = vst [vmem:[%s224 + $0x150] sm:$0xff] %v4196
      %4273 = vst [vmem:[%s224 + $0x158] sm:$0xff] %v4197
      %4274 = vst [vmem:[%s224 + $0x160] sm:$0xff] %v4198
      %4275 = vst [vmem:[%s224 + $0x168] sm:$0xff] %v4199
      %4276 = vst [vmem:[%s224 + $0x170] sm:$0xff] %v4200
      %4277 = vst [vmem:[%s224 + $0x178] sm:$0xff] %v4201
      %4278 = vst [vmem:[%s224 + $0x180] sm:$0xff] %v4202
      %4279 = vst [vmem:[%s224 + $0x188] sm:$0xff] %v4203
      %4280 = vst [vmem:[%s224 + $0x190] sm:$0xff] %v4204
      %4281 = vst [vmem:[%s224 + $0x198] sm:$0xff] %v4205
      %4282 = vst [vmem:[%s224 + $0x1a0] sm:$0xff] %v4206
      %4283 = vst [vmem:[%s224 + $0x1a8] sm:$0xff] %v4207
      %4284 = vst [vmem:[%s224 + $0x1b0] sm:$0xff] %v4208
      %4285 = vst [vmem:[%s224 + $0x1b8] sm:$0xff] %v4209
      %4286 = vst [vmem:[%s224 + $0x1c0] sm:$0xff] %v4210
      %4287 = vst [vmem:[%s224 + $0x1c8] sm:$0xff] %v4211
      %4288 = vst [vmem:[%s224 + $0x1d0] sm:$0xff] %v4212
      %4289 = vst [vmem:[%s224 + $0x1d8] sm:$0xff] %v4213
      %4290 = vst [vmem:[%s224 + $0x1e0] sm:$0xff] %v4214
      %4291 = vst [vmem:[%s224 + $0x1e8] sm:$0xff] %v4215
      %4292 = vst [vmem:[%s224 + $0x1f0] sm:$0xff] %v4216
      %4293 = vst [vmem:[%s224 + $0x1f8] sm:$0xff] %v4217
      %4294 = vst [vmem:[%s224 + $0x200] sm:$0xff] %v4218
      %4295 = vst [vmem:[%s224 + $0x208] sm:$0xff] %v4219
      %4296 = vst [vmem:[%s224 + $0x210] sm:$0xff] %v4220
      %4297 = vst [vmem:[%s224 + $0x218] sm:$0xff] %v4221
      %4298 = vst [vmem:[%s224 + $0x220] sm:$0xff] %v4222
      %4299 = vst [vmem:[%s224 + $0x228] sm:$0xff] %v4223
      %4300 = vst [vmem:[%s224 + $0x230] sm:$0xff] %v4224
      %4301 = vst [vmem:[%s224 + $0x238] sm:$0xff] %v4225
      %4302 = vst [vmem:[%s224 + $0x240] sm:$0xff] %v4226
      %4303 = vst [vmem:[%s224 + $0x248] sm:$0xff] %v4227
      %4304 = vst [vmem:[%s224 + $0x250] sm:$0xff] %v4228
      %4305 = vst [vmem:[%s224 + $0x258] sm:$0xff] %v4229
      %p4306 = scmp.lt.s32.totalorder %s16, 1
      %s4307 = scalar_select %p4306, %s16, 1
      %s4308 = smul.addr %s4307, 76
      %s4309 = smul.addr %s4308, 8
      %s4310 = scalar_lea.vmem %s5, %s4309
      // Predicated region
      $region41: #{temporal_model2_forward.1} parent=39 // pred_check
        %p4311 = pneg %p144
      $region42: #{temporal_model2_forward.1} parent=39 // pred_check_branch
        %4313 = sbr.rel (%p4311) target = $region44
      $region43: #{temporal_model2_forward.1} parent=39 // pred_region
        _
      $region44: #{temporal_model2_forward.1} parent=39 // pred_fallthru
        _
    $region40: #{temporal_model2_forward.1} parent=5 // pred_fallthru
      _
    %p4314 = scmp.le.s32.totalorder 2, %s11
    // Predicated region
    $region45: #{temporal_model2_forward.1} parent=5 // pred_check
      %p4315 = pneg %p4314
    $region46: #{temporal_model2_forward.1} parent=5 // pred_check_branch
      %4317 = sbr.rel (%p4315) target = $region48
    $region47: #{temporal_model2_forward.1} parent=5 // pred_region
      %s4318 = ssub.s32 %s11, 2
      // Predicated region
      $region49: #{temporal_model2_forward.1} parent=47 // pred_check
        %p4319 = pneg %p150
      $region50: #{temporal_model2_forward.1} parent=47 // pred_check_branch
        %4321 = sbr.rel (%p4319) target = $region52
      $region51: #{temporal_model2_forward.1} parent=47 // pred_region
        %p4322 = scmp.lt.s32.totalorder %s17, 1
        %s4323 = scalar_select %p4322, %s17, 1
        %s4324 = smul.addr %s4323, 76
        %s4325 = smul.addr %s4324, 8
        %s4326 = scalar_lea.vmem %s5, %s4325
      $region52: #{temporal_model2_forward.1} parent=47 // pred_fallthru
        _
    $region48: #{temporal_model2_forward.1} parent=5 // pred_fallthru
      _
  $region6: #{temporal_model2_forward.1} parent=0 // loop_footer
    %s15 = sadd.s32 1, %s11
  $region7: #{temporal_model2_forward.1} parent=0 // loop_footer_branch
    %10 = sbr.rel target = $region3
  $region8: #{temporal_model2_forward.1} parent=0 // loop_exit
    _

</llo_original>
